<compile_context>
chip_gen: v7x
topology: tpu7x:2x2x1
jax: 0.10.0
libtpu: 0.0.40
codegen_flags: <defaults>
</compile_context>

<pallas_src>
import functools

import jax
import jax.numpy as jnp
from jax import lax
from jax.experimental import pallas as pl
from jax.experimental.pallas import tpu as pltpu

BN_EPS = 1e-5


def _round_up(x, m):
    return (x + m - 1) // m * m


# ---------------------------------------------------------------------------
# Shared in-kernel im2col: 9 shifted (Cout, Cin) @ (Cin, tm) MXU dots, f32 acc.
#   x_ext: (Cin, hp + tm + hp), columns [i*tm - hp, (i+1)*tm + hp) of the
#          padded-flat activation.  Tap (ky, kx) is the static lane offset
#          (ky-1)*(W+2) + (kx-1) relative to the output column.
# ---------------------------------------------------------------------------
def _accumulate_taps(x_ext, w_taps, w_img, hp, tm):
    acc = None
    for t in range(9):
        off = (t // 3 - 1) * (w_img + 2) + (t % 3 - 1)   # |off| <= W+3 <= hp
        xs = x_ext[:, hp + off:hp + off + tm]            # static lane-offset slice
        d = jnp.dot(w_taps[t], xs, preferred_element_type=jnp.float32)
        acc = d if acc is None else acc + d
    return acc


def _partial_bn_stats(y, mask_row):
    # mask_row zeroes padding / frame-border / tail columns out of the statistics.
    ym = y * mask_row
    s = jnp.sum(ym, axis=1, keepdims=True)        # (C, 1)
    ss = jnp.sum(ym * ym, axis=1, keepdims=True)  # (C, 1)
    return jnp.concatenate([s, ss], axis=1)[None, :, :]   # (1, C, 2)


# ---------------------------------------------------------------------------
# Kernel 1: 3x3 conv (in-kernel im2col) + per-tile BN partial statistics.
# Input is the original image in the zero-padded flat layout (padding already exact zeros).
# ---------------------------------------------------------------------------
def _conv3x3_stats_kernel(xl_ref, xc_ref, xr_ref, mc_ref, w_ref, y_ref, st_ref,
                          *, w_img, hp):
    tm = y_ref.shape[1]
    x_ext = jnp.concatenate([xl_ref[...], xc_ref[...], xr_ref[...]], axis=1)
    acc = _accumulate_taps(x_ext, w_ref[...], w_img, hp, tm)   # (Cmid, tm) f32
    y_ref[...] = acc.astype(y_ref.dtype)
    st_ref[...] = _partial_bn_stats(acc, mc_ref[...])


# ---------------------------------------------------------------------------
# Kernel 2: fused [BN1 + ReLU + re-zero padding] prologue, then 3x3 conv
#           (in-kernel im2col) + per-tile BN2 partial statistics.
# ---------------------------------------------------------------------------
def _conv3x3_bnrelu_stats_kernel(yl_ref, yc_ref, yr_ref, ml_ref, mc_ref, mr_ref,
                                 sc_ref, sh_ref, w_ref, y_ref, st_ref, *, w_img, hp):
    tm = y_ref.shape[1]
    y_prev = jnp.concatenate([yl_ref[...], yc_ref[...], yr_ref[...]],
                             axis=1).astype(jnp.float32)
    m_ext = jnp.concatenate([ml_ref[...], mc_ref[...], mr_ref[...]], axis=1)
    # BN1 + ReLU in f32; mask restores exact zeros at padding / frame borders so the
    # tap shifts see correct zero padding for conv2.
    x_ext = (jnp.maximum(y_prev * sc_ref[...] + sh_ref[...], 0.0) * m_ext
             ).astype(jnp.bfloat16)
    acc = _accumulate_taps(x_ext, w_ref[...], w_img, hp, tm)   # (Cout, tm) f32
    y_ref[...] = acc.astype(y_ref.dtype)
    st_ref[...] = _partial_bn_stats(acc, mc_ref[...])


# ---------------------------------------------------------------------------
# Kernel 3: BN2 + ReLU + fused _SelfAdaption (grouped 1x1 convs) + residual.
#   xdc = relu(bn(y));  adp[c] = b2[c] + sum_k w2[c,k]*relu(w1[c,k]*xdc[c] + b1[c,k])
#   out = xdc + lambda1 * adp,  lambda1 = 1  (relu(xdc) == xdc since xdc >= 0)
# ---------------------------------------------------------------------------
def _bn_relu_adp_kernel(y_ref, sc_ref, sh_ref, w1_ref, b1_ref, w2_ref, b2_ref, o_ref):
    x = jnp.maximum(y_ref[...].astype(jnp.float32) * sc_ref[...] + sh_ref[...], 0.0)
    w1 = w1_ref[...]
    b1 = b1_ref[...]
    w2 = w2_ref[...]
    adp = jnp.zeros_like(x)
    for k in range(4):                                        # hidden_channels = 4
        t = jnp.maximum(w1[:, k:k + 1] * x + b1[:, k:k + 1], 0.0)
        adp = adp + w2[:, k:k + 1] * t
    o_ref[...] = (x + adp + b2_ref[...]).astype(o_ref.dtype)  # residual, lambda1 = 1


# ---------------------------------------------------------------------------
# pallas_call wrappers
# ---------------------------------------------------------------------------
def _halo_maps(tm, hp, mp):
    rb = tm // hp      # halo blocks per conv tile
    nhb = mp // hp     # total halo-sized blocks
    left = lambda i: (0, jnp.maximum(i * rb - 1, 0))
    center = lambda i: (0, i)
    right = lambda i: (0, jnp.minimum((i + 1) * rb, nhb - 1))
    return left, center, right


def conv3x3_stats(x_cm, mask, w_taps, w_img, hp, tm):
    cin, mp = x_cm.shape
    cout = w_taps.shape[1]
    nmt = mp // tm
    left, center, right = _halo_maps(tm, hp, mp)
    kern = functools.partial(_conv3x3_stats_kernel, w_img=w_img, hp=hp)
    return pl.pallas_call(
        kern,
        out_shape=(jax.ShapeDtypeStruct((cout, mp), jnp.bfloat16),
                   jax.ShapeDtypeStruct((nmt, cout, 2), jnp.float32)),
        grid=(nmt,),
        in_specs=[
            pl.BlockSpec((cin, hp), left),                 # left halo
            pl.BlockSpec((cin, tm), center),               # center tile
            pl.BlockSpec((cin, hp), right),                # right halo
            pl.BlockSpec((1, tm), center),                 # interior mask (stats)
            pl.BlockSpec((9, cout, cin), lambda i: (0, 0, 0)),   # per-tap weights
        ],
        out_specs=(
            pl.BlockSpec((cout, tm), center),              # lane-dense pre-BN output
            pl.BlockSpec((1, cout, 2), lambda i: (i, 0, 0)),
        ),
        compiler_params=pltpu.CompilerParams(dimension_semantics=("parallel",)),
    )(x_cm, x_cm, x_cm, mask, w_taps)


def conv3x3_bnrelu_stats(y_prev, mask, scale, shift, w_taps, w_img, hp, tm):
    cin, mp = y_prev.shape
    cout = w_taps.shape[1]
    nmt = mp // tm
    left, center, right = _halo_maps(tm, hp, mp)
    kern = functools.partial(_conv3x3_bnrelu_stats_kernel, w_img=w_img, hp=hp)
    return pl.pallas_call(
        kern,
        out_shape=(jax.ShapeDtypeStruct((cout, mp), jnp.bfloat16),
                   jax.ShapeDtypeStruct((nmt, cout, 2), jnp.float32)),
        grid=(nmt,),
        in_specs=[
            pl.BlockSpec((cin, hp), left),
            pl.BlockSpec((cin, tm), center),
            pl.BlockSpec((cin, hp), right),
            pl.BlockSpec((1, hp), left),                   # mask halos (prologue re-zero)
            pl.BlockSpec((1, tm), center),
            pl.BlockSpec((1, hp), right),
            pl.BlockSpec((cin, 1), lambda i: (0, 0)),      # BN1 scale
            pl.BlockSpec((cin, 1), lambda i: (0, 0)),      # BN1 shift
            pl.BlockSpec((9, cout, cin), lambda i: (0, 0, 0)),
        ],
        out_specs=(
            pl.BlockSpec((cout, tm), center),
            pl.BlockSpec((1, cout, 2), lambda i: (i, 0, 0)),
        ),
        compiler_params=pltpu.CompilerParams(dimension_semantics=("parallel",)),
    )(y_prev, y_prev, y_prev, mask, mask, mask, scale, shift, w_taps)


def bn_relu_adp_apply(y_cm, scale, shift, aw1, ab1, aw2, ab2, tme):
    c, mp = y_cm.shape
    nmt = mp // tme
    return pl.pallas_call(
        _bn_relu_adp_kernel,
        out_shape=jax.ShapeDtypeStruct((c, mp), jnp.float32),
        grid=(nmt,),
        in_specs=[
            pl.BlockSpec((c, tme), lambda i: (0, i)),
            pl.BlockSpec((c, 1), lambda i: (0, 0)),
            pl.BlockSpec((c, 1), lambda i: (0, 0)),
            pl.BlockSpec((c, 4), lambda i: (0, 0)),
            pl.BlockSpec((c, 4), lambda i: (0, 0)),
            pl.BlockSpec((c, 4), lambda i: (0, 0)),
            pl.BlockSpec((c, 1), lambda i: (0, 0)),
        ],
        out_specs=pl.BlockSpec((c, tme), lambda i: (0, i)),
        compiler_params=pltpu.CompilerParams(dimension_semantics=("parallel",)),
    )(y_cm, scale, shift, aw1, ab1, aw2, ab2)


# ---------------------------------------------------------------------------
# Plain-JAX glue: BN stat reduction and boundary layout plumbing.
# ---------------------------------------------------------------------------
def bn_scale_shift(stats, gamma, beta, m_valid):
    # stats: (nmt, C, 2) per-tile partial [sum, sumsq]; training-mode biased variance.
    s = jnp.sum(stats[:, :, 0], axis=0)
    ss = jnp.sum(stats[:, :, 1], axis=0)
    mu = s / m_valid
    var = jnp.maximum(ss / m_valid - mu * mu, 0.0)
    inv = lax.rsqrt(var + BN_EPS)
    scale = gamma * inv
    shift = beta - mu * scale
    return scale[:, None].astype(jnp.float32), shift[:, None].astype(jnp.float32)


def double_conv_forward(x_nchw, params, tm=1024, tm_elem=4096):
    N, Cin, H, W = x_nchw.shape
    Cmid = params["w_conv1"].shape[0]
    Cout = params["w_conv2"].shape[0]
    F = (H + 2) * (W + 2)          # padded frame size per image
    Mflat = N * F                  # padded-flat activation length
    M = N * H * W                  # number of real output pixels (BN divisor)

    Hp = _round_up(W + 3, 128)                 # halo width: covers tap offsets |off|<=W+3
    tm = _round_up(min(tm, Mflat), Hp)         # conv tile, multiple of halo width
    Mp = _round_up(Mflat, tm)

    # --- layout plumbing (XLA): NCHW -> zero-padded, channel-major flat (C, Mp) bf16 ---
    x_cnhw = jnp.transpose(x_nchw, (1, 0, 2, 3))
    x_pad = jnp.pad(x_cnhw, ((0, 0), (0, 0), (1, 1), (1, 1)))
    xf = jnp.pad(x_pad.reshape(Cin, Mflat),
                 ((0, 0), (0, Mp - Mflat))).astype(jnp.bfloat16)

    # Interior mask over the padded-flat layout (1.0 at real output pixels, 0.0 at padding,
    # frame borders and the Mp tail).
    hh = jnp.arange(H + 2)[:, None]
    ww = jnp.arange(W + 2)[None, :]
    m2d = ((hh >= 1) & (hh <= H) & (ww >= 1) & (ww <= W)).astype(jnp.float32)
    mask = jnp.tile(m2d.reshape(F), (N,))
    mask = jnp.pad(mask, (0, Mp - Mflat)).reshape(1, Mp)

    # 3x3 weights as 9 per-tap (Cout_, Cin_) matrices, tap index t = ky*3 + kx.
    w1t = jnp.transpose(params["w_conv1"], (2, 3, 0, 1)).reshape(9, Cmid, Cin
                                                                 ).astype(jnp.bfloat16)
    w2t = jnp.transpose(params["w_conv2"], (2, 3, 0, 1)).reshape(9, Cout, Cmid
                                                                 ).astype(jnp.bfloat16)

    # conv1 (bias dropped: exactly cancelled by training-mode BN) + BN1 partial stats.
    y1, st1 = conv3x3_stats(xf, mask, w1t, W, Hp, tm)
    sc1, sh1 = bn_scale_shift(st1, params["bn1_gamma"], params["bn1_beta"], M)

    # conv2 with fused BN1+ReLU prologue + BN2 partial stats.
    y2, st2 = conv3x3_bnrelu_stats(y1, mask, sc1, sh1, w2t, W, Hp, tm)
    sc2, sh2 = bn_scale_shift(st2, params["bn2_gamma"], params["bn2_beta"], M)

    # BN2 + ReLU + fused _SelfAdaption + residual epilogue on wider element-wise tiles.
    nmt = Mp // tm
    k = max(1, min(nmt, max(1, tm_elem // tm)))
    while nmt % k:
        k -= 1
    tme = tm * k
    aw1 = params["adp_w1"].reshape(Cout, 4)   # grouped conv: out channel c*4+k <- [c, k]
    ab1 = params["adp_b1"].reshape(Cout, 4)
    aw2 = params["adp_w2"].reshape(Cout, 4)
    ab2 = params["adp_b2"][:, None]
    out = bn_relu_adp_apply(y2, sc2, sh2, aw1, ab1, aw2, ab2, tme)   # (Cout, Mp) f32

    out = out[:, :Mflat].reshape(Cout, N, H + 2, W + 2)[:, :, 1:H + 1, 1:W + 1]
    return jnp.transpose(out, (1, 0, 2, 3))    # back to NCHW


# ---------------------------------------------------------------------------
# Pure-JAX f32 reference (lax convs) for the correctness check.
# ---------------------------------------------------------------------------
def reference_forward(x, p):
    def conv(x, w, b, groups=1):
        y = lax.conv_general_dilated(
            x, w, (1, 1),
            ((w.shape[2] // 2, w.shape[2] // 2), (w.shape[3] // 2, w.shape[3] // 2)),
            dimension_numbers=("NCHW", "OIHW", "NCHW"),
            feature_group_count=groups)
        return y + b[None, :, None, None]

    def bn_train(y, g, beta):
        mu = jnp.mean(y, axis=(0, 2, 3), keepdims=True)
        var = jnp.mean((y - mu) ** 2, axis=(0, 2, 3), keepdims=True)
        return (g[None, :, None, None] * (y - mu) * lax.rsqrt(var + BN_EPS)
                + beta[None, :, None, None])

    h = jnp.maximum(bn_train(conv(x, p["w_conv1"], p["b_conv1"]),
                             p["bn1_gamma"], p["bn1_beta"]), 0.0)
    xdc = jnp.maximum(bn_train(conv(h, p["w_conv2"], p["b_conv2"]),
                               p["bn2_gamma"], p["bn2_beta"]), 0.0)
    C = xdc.shape[1]
    r = jnp.maximum(xdc, 0.0)
    c1 = jnp.maximum(conv(r, p["adp_w1"], p["adp_b1"], groups=C), 0.0)
    c3 = conv(c1, p["adp_w2"], p["adp_b2"], groups=C)
    return xdc + c3


if __name__ == "__main__":
    key = jax.random.PRNGKey(0)

    def make_params(k, cin, mid, cout):
        ks = jax.random.split(k, 12)
        return {
            "w_conv1":  0.1 * jax.random.normal(ks[0], (mid, cin, 3, 3), jnp.float32),
            "b_conv1":  0.1 * jax.random.normal(ks[1], (mid,), jnp.float32),
            "bn1_gamma": 1.0 + 0.1 * jax.random.normal(ks[2], (mid,), jnp.float32),
            "bn1_beta": 0.1 * jax.random.normal(ks[3], (mid,), jnp.float32),
            "w_conv2":  0.1 * jax.random.normal(ks[4], (cout, mid, 3, 3), jnp.float32),
            "b_conv2":  0.1 * jax.random.normal(ks[5], (cout,), jnp.float32),
            "bn2_gamma": 1.0 + 0.1 * jax.random.normal(ks[6], (cout,), jnp.float32),
            "bn2_beta": 0.1 * jax.random.normal(ks[7], (cout,), jnp.float32),
            "adp_w1":   0.3 * jax.random.normal(ks[8], (4 * cout, 1, 1, 1), jnp.float32),
            "adp_b1":   0.1 * jax.random.normal(ks[9], (4 * cout,), jnp.float32),
            "adp_w2":   0.3 * jax.random.normal(ks[10], (cout, 4, 1, 1), jnp.float32),
            "adp_b2":   0.1 * jax.random.normal(ks[11], (cout,), jnp.float32),
        }

    fwd = jax.jit(double_conv_forward, static_argnames=("tm", "tm_elem"))

    configs = [
        # DoubleConv(4, 8): Mflat = 2*18*18 = 648 -> single 768-wide tile (clamped halos).
        dict(N=2, Cin=4, H=16, W=16, mid=8, out=8, tm=1024),
        # DoubleConv(3, 8, mid=16): odd Cin, mid != out, tiny spatial.
        dict(N=1, Cin=3, H=12, W=12, mid=16, out=8, tm=1024),
        # Multi-tile grid: Mflat = 30*30 = 900, tm=256 -> 4 tiles, real halos + tail pad.
        dict(N=1, Cin=4, H=28, W=28, mid=8, out=8, tm=256),
    ]

    for cfg in configs:
        key, kp, kx = jax.random.split(key, 3)
        params = make_params(kp, cfg["Cin"], cfg["mid"], cfg["out"])
        x = jax.random.normal(kx, (cfg["N"], cfg["Cin"], cfg["H"], cfg["W"]), jnp.float32)

        y = jax.block_until_ready(fwd(x, params, tm=cfg["tm"]))
        y_ref = jax.block_until_ready(reference_forward(x, params))

        assert y.shape == (cfg["N"], cfg["out"], cfg["H"], cfg["W"])
        max_err = float(jnp.max(jnp.abs(y - y_ref)))
        # bf16 matmul operands / intermediates vs f32 reference -> loose-ish tolerance.
        assert jnp.allclose(y, y_ref, rtol=5e-2, atol=5e-2), max_err

    print("KERNEL_OK")
</pallas_src>

<mosaic_0001>
module attributes {stable_mosaic.version = 11 : i64} {
  func.func @_conv3x3_stats_kernel(%arg0: i32, %arg1: memref<4x128xbf16, #tpu.memory_space<vmem>>, %arg2: memref<4x768xbf16, #tpu.memory_space<vmem>>, %arg3: memref<4x128xbf16, #tpu.memory_space<vmem>>, %arg4: memref<1x768xf32, #tpu.memory_space<vmem>>, %arg5: memref<9x8x4xbf16, #tpu.memory_space<vmem>>, %arg6: memref<8x768xbf16, #tpu.memory_space<vmem>>, %arg7: memref<1x8x2xf32, #tpu.memory_space<vmem>>) attributes {dimension_semantics = [#tpu.dimension_semantics<parallel>], iteration_bounds = array<i64: 1>, scalar_prefetch = 0 : i64, scratch_operands = 0 : i64, tpu.core_type = #tpu.core_type<tc>, window_params = [{transform_indices = @transform_0, window_bounds = array<i64: 4, 128>}, {transform_indices = @transform_1, window_bounds = array<i64: 4, 768>}, {transform_indices = @transform_2, window_bounds = array<i64: 4, 128>}, {transform_indices = @transform_3, window_bounds = array<i64: 1, 768>}, {pipeline_mode = #tpu.pipeline_mode<synchronous>, transform_indices = @transform_4, window_bounds = array<i64: 9, 8, 4>}, {transform_indices = @transform_5, window_bounds = array<i64: 8, 768>}, {transform_indices = @transform_6, window_bounds = array<i64: 1, 8, 2>}]} {
    %c0 = arith.constant 0 : index
    %c0_0 = arith.constant 0 : index
    %0 = vector.load %arg1[%c0, %c0_0] : memref<4x128xbf16, #tpu.memory_space<vmem>>, vector<4x128xbf16>
    %c0_1 = arith.constant 0 : index
    %c0_2 = arith.constant 0 : index
    %1 = vector.load %arg2[%c0_1, %c0_2] : memref<4x768xbf16, #tpu.memory_space<vmem>>, vector<4x768xbf16>
    %c0_3 = arith.constant 0 : index
    %c0_4 = arith.constant 0 : index
    %2 = vector.load %arg3[%c0_3, %c0_4] : memref<4x128xbf16, #tpu.memory_space<vmem>>, vector<4x128xbf16>
    %3 = tpu.concatenate %0, %1, %2 in 1 : vector<4x128xbf16>, vector<4x768xbf16>, vector<4x128xbf16> -> vector<4x1024xbf16>
    %c0_5 = arith.constant 0 : index
    %c0_6 = arith.constant 0 : index
    %c0_7 = arith.constant 0 : index
    %4 = vector.load %arg5[%c0_5, %c0_6, %c0_7] : memref<9x8x4xbf16, #tpu.memory_space<vmem>>, vector<9x8x4xbf16>
    %5 = vector.extract_strided_slice %3 {offsets = [0, 109], sizes = [4, 768], strides = [1, 1]} : vector<4x1024xbf16> to vector<4x768xbf16>
    %6 = vector.extract_strided_slice %4 {offsets = [0, 0, 0], sizes = [1, 8, 4], strides = [1, 1, 1]} : vector<9x8x4xbf16> to vector<1x8x4xbf16>
    %7 = vector.shape_cast %6 : vector<1x8x4xbf16> to vector<8x4xbf16>
    %cst = arith.constant dense<0.000000e+00> : vector<8x768xf32>
    %8 = tpu.matmul %7, %5, %cst {dimension_numbers = #tpu.dot_dimension_numbers<[1], [0], [0], [1], [0, 0, 1, 1], [], []>} : vector<8x4xbf16>, vector<4x768xbf16>, vector<8x768xf32> -> vector<8x768xf32>
    %9 = vector.extract_strided_slice %3 {offsets = [0, 110], sizes = [4, 768], strides = [1, 1]} : vector<4x1024xbf16> to vector<4x768xbf16>
    %10 = vector.extract_strided_slice %4 {offsets = [1, 0, 0], sizes = [1, 8, 4], strides = [1, 1, 1]} : vector<9x8x4xbf16> to vector<1x8x4xbf16>
    %11 = vector.shape_cast %10 : vector<1x8x4xbf16> to vector<8x4xbf16>
    %cst_8 = arith.constant dense<0.000000e+00> : vector<8x768xf32>
    %12 = tpu.matmul %11, %9, %cst_8 {dimension_numbers = #tpu.dot_dimension_numbers<[1], [0], [0], [1], [0, 0, 1, 1], [], []>} : vector<8x4xbf16>, vector<4x768xbf16>, vector<8x768xf32> -> vector<8x768xf32>
    %13 = arith.addf %8, %12 : vector<8x768xf32>
    %14 = vector.extract_strided_slice %3 {offsets = [0, 111], sizes = [4, 768], strides = [1, 1]} : vector<4x1024xbf16> to vector<4x768xbf16>
    %15 = vector.extract_strided_slice %4 {offsets = [2, 0, 0], sizes = [1, 8, 4], strides = [1, 1, 1]} : vector<9x8x4xbf16> to vector<1x8x4xbf16>
    %16 = vector.shape_cast %15 : vector<1x8x4xbf16> to vector<8x4xbf16>
    %cst_9 = arith.constant dense<0.000000e+00> : vector<8x768xf32>
    %17 = tpu.matmul %16, %14, %cst_9 {dimension_numbers = #tpu.dot_dimension_numbers<[1], [0], [0], [1], [0, 0, 1, 1], [], []>} : vector<8x4xbf16>, vector<4x768xbf16>, vector<8x768xf32> -> vector<8x768xf32>
    %18 = arith.addf %13, %17 : vector<8x768xf32>
    %19 = vector.extract_strided_slice %3 {offsets = [0, 127], sizes = [4, 768], strides = [1, 1]} : vector<4x1024xbf16> to vector<4x768xbf16>
    %20 = vector.extract_strided_slice %4 {offsets = [3, 0, 0], sizes = [1, 8, 4], strides = [1, 1, 1]} : vector<9x8x4xbf16> to vector<1x8x4xbf16>
    %21 = vector.shape_cast %20 : vector<1x8x4xbf16> to vector<8x4xbf16>
    %cst_10 = arith.constant dense<0.000000e+00> : vector<8x768xf32>
    %22 = tpu.matmul %21, %19, %cst_10 {dimension_numbers = #tpu.dot_dimension_numbers<[1], [0], [0], [1], [0, 0, 1, 1], [], []>} : vector<8x4xbf16>, vector<4x768xbf16>, vector<8x768xf32> -> vector<8x768xf32>
    %23 = arith.addf %18, %22 : vector<8x768xf32>
    %24 = vector.extract_strided_slice %3 {offsets = [0, 128], sizes = [4, 768], strides = [1, 1]} : vector<4x1024xbf16> to vector<4x768xbf16>
    %25 = vector.extract_strided_slice %4 {offsets = [4, 0, 0], sizes = [1, 8, 4], strides = [1, 1, 1]} : vector<9x8x4xbf16> to vector<1x8x4xbf16>
    %26 = vector.shape_cast %25 : vector<1x8x4xbf16> to vector<8x4xbf16>
    %cst_11 = arith.constant dense<0.000000e+00> : vector<8x768xf32>
    %27 = tpu.matmul %26, %24, %cst_11 {dimension_numbers = #tpu.dot_dimension_numbers<[1], [0], [0], [1], [0, 0, 1, 1], [], []>} : vector<8x4xbf16>, vector<4x768xbf16>, vector<8x768xf32> -> vector<8x768xf32>
    %28 = arith.addf %23, %27 : vector<8x768xf32>
    %29 = vector.extract_strided_slice %3 {offsets = [0, 129], sizes = [4, 768], strides = [1, 1]} : vector<4x1024xbf16> to vector<4x768xbf16>
    %30 = vector.extract_strided_slice %4 {offsets = [5, 0, 0], sizes = [1, 8, 4], strides = [1, 1, 1]} : vector<9x8x4xbf16> to vector<1x8x4xbf16>
    %31 = vector.shape_cast %30 : vector<1x8x4xbf16> to vector<8x4xbf16>
    %cst_12 = arith.constant dense<0.000000e+00> : vector<8x768xf32>
    %32 = tpu.matmul %31, %29, %cst_12 {dimension_numbers = #tpu.dot_dimension_numbers<[1], [0], [0], [1], [0, 0, 1, 1], [], []>} : vector<8x4xbf16>, vector<4x768xbf16>, vector<8x768xf32> -> vector<8x768xf32>
    %33 = arith.addf %28, %32 : vector<8x768xf32>
    %34 = vector.extract_strided_slice %3 {offsets = [0, 145], sizes = [4, 768], strides = [1, 1]} : vector<4x1024xbf16> to vector<4x768xbf16>
    %35 = vector.extract_strided_slice %4 {offsets = [6, 0, 0], sizes = [1, 8, 4], strides = [1, 1, 1]} : vector<9x8x4xbf16> to vector<1x8x4xbf16>
    %36 = vector.shape_cast %35 : vector<1x8x4xbf16> to vector<8x4xbf16>
    %cst_13 = arith.constant dense<0.000000e+00> : vector<8x768xf32>
    %37 = tpu.matmul %36, %34, %cst_13 {dimension_numbers = #tpu.dot_dimension_numbers<[1], [0], [0], [1], [0, 0, 1, 1], [], []>} : vector<8x4xbf16>, vector<4x768xbf16>, vector<8x768xf32> -> vector<8x768xf32>
    %38 = arith.addf %33, %37 : vector<8x768xf32>
    %39 = vector.extract_strided_slice %3 {offsets = [0, 146], sizes = [4, 768], strides = [1, 1]} : vector<4x1024xbf16> to vector<4x768xbf16>
    %40 = vector.extract_strided_slice %4 {offsets = [7, 0, 0], sizes = [1, 8, 4], strides = [1, 1, 1]} : vector<9x8x4xbf16> to vector<1x8x4xbf16>
    %41 = vector.shape_cast %40 : vector<1x8x4xbf16> to vector<8x4xbf16>
    %cst_14 = arith.constant dense<0.000000e+00> : vector<8x768xf32>
    %42 = tpu.matmul %41, %39, %cst_14 {dimension_numbers = #tpu.dot_dimension_numbers<[1], [0], [0], [1], [0, 0, 1, 1], [], []>} : vector<8x4xbf16>, vector<4x768xbf16>, vector<8x768xf32> -> vector<8x768xf32>
    %43 = arith.addf %38, %42 : vector<8x768xf32>
    %44 = vector.extract_strided_slice %3 {offsets = [0, 147], sizes = [4, 768], strides = [1, 1]} : vector<4x1024xbf16> to vector<4x768xbf16>
    %45 = vector.extract_strided_slice %4 {offsets = [8, 0, 0], sizes = [1, 8, 4], strides = [1, 1, 1]} : vector<9x8x4xbf16> to vector<1x8x4xbf16>
    %46 = vector.shape_cast %45 : vector<1x8x4xbf16> to vector<8x4xbf16>
    %cst_15 = arith.constant dense<0.000000e+00> : vector<8x768xf32>
    %47 = tpu.matmul %46, %44, %cst_15 {dimension_numbers = #tpu.dot_dimension_numbers<[1], [0], [0], [1], [0, 0, 1, 1], [], []>} : vector<8x4xbf16>, vector<4x768xbf16>, vector<8x768xf32> -> vector<8x768xf32>
    %48 = arith.addf %43, %47 : vector<8x768xf32>
    %49 = arith.truncf %48 : vector<8x768xf32> to vector<8x768xbf16>
    %c0_16 = arith.constant 0 : index
    %c0_17 = arith.constant 0 : index
    %50 = vector.load %arg6[%c0_16, %c0_17] : memref<8x768xbf16, #tpu.memory_space<vmem>>, vector<8x768xbf16>
    tpu.vector_store %arg6[%c0_16, %c0_17], %49 {strides = array<i32>} : memref<8x768xbf16, #tpu.memory_space<vmem>>, vector<8x768xbf16>,
    %c0_18 = arith.constant 0 : index
    %c0_19 = arith.constant 0 : index
    %51 = vector.load %arg4[%c0_18, %c0_19] : memref<1x768xf32, #tpu.memory_space<vmem>>, vector<1x768xf32>
    %52 = vector.broadcast %51 : vector<1x768xf32> to vector<8x768xf32>
    %53 = arith.mulf %48, %52 : vector<8x768xf32>
    %cst_20 = arith.constant dense<0.000000e+00> : vector<8xf32>
    %54 = vector.multi_reduction <add>, %53, %cst_20 [1] : vector<8x768xf32> to vector<8xf32>
    %55 = vector.shape_cast %54 : vector<8xf32> to vector<8x1xf32>
    %56 = arith.mulf %53, %53 : vector<8x768xf32>
    %cst_21 = arith.constant dense<0.000000e+00> : vector<8xf32>
    %57 = vector.multi_reduction <add>, %56, %cst_21 [1] : vector<8x768xf32> to vector<8xf32>
    %58 = vector.shape_cast %57 : vector<8xf32> to vector<8x1xf32>
    %59 = tpu.concatenate %55, %58 in 1 : vector<8x1xf32>, vector<8x1xf32> -> vector<8x2xf32>
    %60 = vector.shape_cast %59 : vector<8x2xf32> to vector<1x8x2xf32>
    %c0_22 = arith.constant 0 : index
    %c0_23 = arith.constant 0 : index
    %c0_24 = arith.constant 0 : index
    %61 = vector.load %arg7[%c0_22, %c0_23, %c0_24] : memref<1x8x2xf32, #tpu.memory_space<vmem>>, vector<1x8x2xf32>
    tpu.vector_store %arg7[%c0_22, %c0_23, %c0_24], %60 {strides = array<i32>} : memref<1x8x2xf32, #tpu.memory_space<vmem>>, vector<1x8x2xf32>,
    return
  }
  func.func @transform_0(%arg0: i32) -> (i32, i32) {
    %c6_i32 = arith.constant 6 : i32
    %0 = arith.muli %arg0, %c6_i32 : i32
    %c1_i32 = arith.constant 1 : i32
    %1 = arith.subi %0, %c1_i32 : i32
    %c0_i32 = arith.constant 0 : i32
    %2 = arith.maxsi %1, %c0_i32 : i32
    %c0_i32_0 = arith.constant 0 : i32
    %c0_i32_1 = arith.constant 0 : i32
    return %c0_i32_0, %2 : i32, i32
  }
  func.func @transform_1(%arg0: i32) -> (i32, i32) {
    %c0_i32 = arith.constant 0 : i32
    %c0_i32_0 = arith.constant 0 : i32
    return %c0_i32, %arg0 : i32, i32
  }
  func.func @transform_2(%arg0: i32) -> (i32, i32) {
    %c1_i32 = arith.constant 1 : i32
    %0 = arith.addi %arg0, %c1_i32 : i32
    %c6_i32 = arith.constant 6 : i32
    %1 = arith.muli %0, %c6_i32 : i32
    %c5_i32 = arith.constant 5 : i32
    %2 = arith.minsi %1, %c5_i32 : i32
    %c0_i32 = arith.constant 0 : i32
    %c0_i32_0 = arith.constant 0 : i32
    return %c0_i32, %2 : i32, i32
  }
  func.func @transform_3(%arg0: i32) -> (i32, i32) {
    %c0_i32 = arith.constant 0 : i32
    %c0_i32_0 = arith.constant 0 : i32
    return %c0_i32, %arg0 : i32, i32
  }
  func.func @transform_4(%arg0: i32) -> (i32, i32, i32) {
    %c0_i32 = arith.constant 0 : i32
    %c0_i32_0 = arith.constant 0 : i32
    %c0_i32_1 = arith.constant 0 : i32
    %c0_i32_2 = arith.constant 0 : i32
    return %c0_i32, %c0_i32_0, %c0_i32_1 : i32, i32, i32
  }
  func.func @transform_5(%arg0: i32) -> (i32, i32) {
    %c0_i32 = arith.constant 0 : i32
    %c0_i32_0 = arith.constant 0 : i32
    return %c0_i32, %arg0 : i32, i32
  }
  func.func @transform_6(%arg0: i32) -> (i32, i32, i32) {
    %c0_i32 = arith.constant 0 : i32
    %c0_i32_0 = arith.constant 0 : i32
    %c0_i32_1 = arith.constant 0 : i32
    return %arg0, %c0_i32, %c0_i32_0 : i32, i32, i32
  }
}

module attributes {stable_mosaic.version = 11 : i64} {
  func.func @_conv3x3_bnrelu_stats_kernel(%arg0: i32, %arg1: memref<8x128xbf16, #tpu.memory_space<vmem>>, %arg2: memref<8x768xbf16, #tpu.memory_space<vmem>>, %arg3: memref<8x128xbf16, #tpu.memory_space<vmem>>, %arg4: memref<1x128xf32, #tpu.memory_space<vmem>>, %arg5: memref<1x768xf32, #tpu.memory_space<vmem>>, %arg6: memref<1x128xf32, #tpu.memory_space<vmem>>, %arg7: memref<8x1xf32, #tpu.memory_space<vmem>>, %arg8: memref<8x1xf32, #tpu.memory_space<vmem>>, %arg9: memref<9x8x8xbf16, #tpu.memory_space<vmem>>, %arg10: memref<8x768xbf16, #tpu.memory_space<vmem>>, %arg11: memref<1x8x2xf32, #tpu.memory_space<vmem>>) attributes {dimension_semantics = [#tpu.dimension_semantics<parallel>], iteration_bounds = array<i64: 1>, scalar_prefetch = 0 : i64, scratch_operands = 0 : i64, tpu.core_type = #tpu.core_type<tc>, window_params = [{transform_indices = @transform_0, window_bounds = array<i64: 8, 128>}, {transform_indices = @transform_1, window_bounds = array<i64: 8, 768>}, {transform_indices = @transform_2, window_bounds = array<i64: 8, 128>}, {transform_indices = @transform_3, window_bounds = array<i64: 1, 128>}, {transform_indices = @transform_4, window_bounds = array<i64: 1, 768>}, {transform_indices = @transform_5, window_bounds = array<i64: 1, 128>}, {pipeline_mode = #tpu.pipeline_mode<synchronous>, transform_indices = @transform_6, window_bounds = array<i64: 8, 1>}, {pipeline_mode = #tpu.pipeline_mode<synchronous>, transform_indices = @transform_7, window_bounds = array<i64: 8, 1>}, {pipeline_mode = #tpu.pipeline_mode<synchronous>, transform_indices = @transform_8, window_bounds = array<i64: 9, 8, 8>}, {transform_indices = @transform_9, window_bounds = array<i64: 8, 768>}, {transform_indices = @transform_10, window_bounds = array<i64: 1, 8, 2>}]} {
    %c0 = arith.constant 0 : index
    %c0_0 = arith.constant 0 : index
    %0 = vector.load %arg1[%c0, %c0_0] : memref<8x128xbf16, #tpu.memory_space<vmem>>, vector<8x128xbf16>
    %c0_1 = arith.constant 0 : index
    %c0_2 = arith.constant 0 : index
    %1 = vector.load %arg2[%c0_1, %c0_2] : memref<8x768xbf16, #tpu.memory_space<vmem>>, vector<8x768xbf16>
    %c0_3 = arith.constant 0 : index
    %c0_4 = arith.constant 0 : index
    %2 = vector.load %arg3[%c0_3, %c0_4] : memref<8x128xbf16, #tpu.memory_space<vmem>>, vector<8x128xbf16>
    %3 = tpu.concatenate %0, %1, %2 in 1 : vector<8x128xbf16>, vector<8x768xbf16>, vector<8x128xbf16> -> vector<8x1024xbf16>
    %4 = arith.extf %3 : vector<8x1024xbf16> to vector<8x1024xf32>
    %c0_5 = arith.constant 0 : index
    %c0_6 = arith.constant 0 : index
    %5 = vector.load %arg4[%c0_5, %c0_6] : memref<1x128xf32, #tpu.memory_space<vmem>>, vector<1x128xf32>
    %c0_7 = arith.constant 0 : index
    %c0_8 = arith.constant 0 : index
    %6 = vector.load %arg5[%c0_7, %c0_8] : memref<1x768xf32, #tpu.memory_space<vmem>>, vector<1x768xf32>
    %c0_9 = arith.constant 0 : index
    %c0_10 = arith.constant 0 : index
    %7 = vector.load %arg6[%c0_9, %c0_10] : memref<1x128xf32, #tpu.memory_space<vmem>>, vector<1x128xf32>
    %8 = tpu.concatenate %5, %6, %7 in 1 : vector<1x128xf32>, vector<1x768xf32>, vector<1x128xf32> -> vector<1x1024xf32>
    %c0_11 = arith.constant 0 : index
    %c0_12 = arith.constant 0 : index
    %9 = vector.load %arg7[%c0_11, %c0_12] : memref<8x1xf32, #tpu.memory_space<vmem>>, vector<8x1xf32>
    %10 = vector.broadcast %9 : vector<8x1xf32> to vector<8x1024xf32>
    %11 = arith.mulf %4, %10 : vector<8x1024xf32>
    %c0_13 = arith.constant 0 : index
    %c0_14 = arith.constant 0 : index
    %12 = vector.load %arg8[%c0_13, %c0_14] : memref<8x1xf32, #tpu.memory_space<vmem>>, vector<8x1xf32>
    %13 = vector.broadcast %12 : vector<8x1xf32> to vector<8x1024xf32>
    %14 = arith.addf %11, %13 : vector<8x1024xf32>
    %cst = arith.constant 0.000000e+00 : f32
    %15 = vector.broadcast %cst : f32 to vector<8x1024xf32>
    %16 = arith.maximumf %14, %15 : vector<8x1024xf32>
    %17 = vector.broadcast %8 : vector<1x1024xf32> to vector<8x1024xf32>
    %18 = arith.mulf %16, %17 : vector<8x1024xf32>
    %19 = arith.truncf %18 : vector<8x1024xf32> to vector<8x1024xbf16>
    %c0_15 = arith.constant 0 : index
    %c0_16 = arith.constant 0 : index
    %c0_17 = arith.constant 0 : index
    %20 = vector.load %arg9[%c0_15, %c0_16, %c0_17] : memref<9x8x8xbf16, #tpu.memory_space<vmem>>, vector<9x8x8xbf16>
    %21 = vector.extract_strided_slice %19 {offsets = [0, 109], sizes = [8, 768], strides = [1, 1]} : vector<8x1024xbf16> to vector<8x768xbf16>
    %22 = vector.extract_strided_slice %20 {offsets = [0, 0, 0], sizes = [1, 8, 8], strides = [1, 1, 1]} : vector<9x8x8xbf16> to vector<1x8x8xbf16>
    %23 = vector.shape_cast %22 : vector<1x8x8xbf16> to vector<8x8xbf16>
    %cst_18 = arith.constant dense<0.000000e+00> : vector<8x768xf32>
    %24 = tpu.matmul %23, %21, %cst_18 {dimension_numbers = #tpu.dot_dimension_numbers<[1], [0], [0], [1], [0, 0, 1, 1], [], []>} : vector<8x8xbf16>, vector<8x768xbf16>, vector<8x768xf32> -> vector<8x768xf32>
    %25 = vector.extract_strided_slice %19 {offsets = [0, 110], sizes = [8, 768], strides = [1, 1]} : vector<8x1024xbf16> to vector<8x768xbf16>
    %26 = vector.extract_strided_slice %20 {offsets = [1, 0, 0], sizes = [1, 8, 8], strides = [1, 1, 1]} : vector<9x8x8xbf16> to vector<1x8x8xbf16>
    %27 = vector.shape_cast %26 : vector<1x8x8xbf16> to vector<8x8xbf16>
    %cst_19 = arith.constant dense<0.000000e+00> : vector<8x768xf32>
    %28 = tpu.matmul %27, %25, %cst_19 {dimension_numbers = #tpu.dot_dimension_numbers<[1], [0], [0], [1], [0, 0, 1, 1], [], []>} : vector<8x8xbf16>, vector<8x768xbf16>, vector<8x768xf32> -> vector<8x768xf32>
    %29 = arith.addf %24, %28 : vector<8x768xf32>
    %30 = vector.extract_strided_slice %19 {offsets = [0, 111], sizes = [8, 768], strides = [1, 1]} : vector<8x1024xbf16> to vector<8x768xbf16>
    %31 = vector.extract_strided_slice %20 {offsets = [2, 0, 0], sizes = [1, 8, 8], strides = [1, 1, 1]} : vector<9x8x8xbf16> to vector<1x8x8xbf16>
    %32 = vector.shape_cast %31 : vector<1x8x8xbf16> to vector<8x8xbf16>
    %cst_20 = arith.constant dense<0.000000e+00> : vector<8x768xf32>
    %33 = tpu.matmul %32, %30, %cst_20 {dimension_numbers = #tpu.dot_dimension_numbers<[1], [0], [0], [1], [0, 0, 1, 1], [], []>} : vector<8x8xbf16>, vector<8x768xbf16>, vector<8x768xf32> -> vector<8x768xf32>
    %34 = arith.addf %29, %33 : vector<8x768xf32>
    %35 = vector.extract_strided_slice %19 {offsets = [0, 127], sizes = [8, 768], strides = [1, 1]} : vector<8x1024xbf16> to vector<8x768xbf16>
    %36 = vector.extract_strided_slice %20 {offsets = [3, 0, 0], sizes = [1, 8, 8], strides = [1, 1, 1]} : vector<9x8x8xbf16> to vector<1x8x8xbf16>
    %37 = vector.shape_cast %36 : vector<1x8x8xbf16> to vector<8x8xbf16>
    %cst_21 = arith.constant dense<0.000000e+00> : vector<8x768xf32>
    %38 = tpu.matmul %37, %35, %cst_21 {dimension_numbers = #tpu.dot_dimension_numbers<[1], [0], [0], [1], [0, 0, 1, 1], [], []>} : vector<8x8xbf16>, vector<8x768xbf16>, vector<8x768xf32> -> vector<8x768xf32>
    %39 = arith.addf %34, %38 : vector<8x768xf32>
    %40 = vector.extract_strided_slice %19 {offsets = [0, 128], sizes = [8, 768], strides = [1, 1]} : vector<8x1024xbf16> to vector<8x768xbf16>
    %41 = vector.extract_strided_slice %20 {offsets = [4, 0, 0], sizes = [1, 8, 8], strides = [1, 1, 1]} : vector<9x8x8xbf16> to vector<1x8x8xbf16>
    %42 = vector.shape_cast %41 : vector<1x8x8xbf16> to vector<8x8xbf16>
    %cst_22 = arith.constant dense<0.000000e+00> : vector<8x768xf32>
    %43 = tpu.matmul %42, %40, %cst_22 {dimension_numbers = #tpu.dot_dimension_numbers<[1], [0], [0], [1], [0, 0, 1, 1], [], []>} : vector<8x8xbf16>, vector<8x768xbf16>, vector<8x768xf32> -> vector<8x768xf32>
    %44 = arith.addf %39, %43 : vector<8x768xf32>
    %45 = vector.extract_strided_slice %19 {offsets = [0, 129], sizes = [8, 768], strides = [1, 1]} : vector<8x1024xbf16> to vector<8x768xbf16>
    %46 = vector.extract_strided_slice %20 {offsets = [5, 0, 0], sizes = [1, 8, 8], strides = [1, 1, 1]} : vector<9x8x8xbf16> to vector<1x8x8xbf16>
    %47 = vector.shape_cast %46 : vector<1x8x8xbf16> to vector<8x8xbf16>
    %cst_23 = arith.constant dense<0.000000e+00> : vector<8x768xf32>
    %48 = tpu.matmul %47, %45, %cst_23 {dimension_numbers = #tpu.dot_dimension_numbers<[1], [0], [0], [1], [0, 0, 1, 1], [], []>} : vector<8x8xbf16>, vector<8x768xbf16>, vector<8x768xf32> -> vector<8x768xf32>
    %49 = arith.addf %44, %48 : vector<8x768xf32>
    %50 = vector.extract_strided_slice %19 {offsets = [0, 145], sizes = [8, 768], strides = [1, 1]} : vector<8x1024xbf16> to vector<8x768xbf16>
    %51 = vector.extract_strided_slice %20 {offsets = [6, 0, 0], sizes = [1, 8, 8], strides = [1, 1, 1]} : vector<9x8x8xbf16> to vector<1x8x8xbf16>
    %52 = vector.shape_cast %51 : vector<1x8x8xbf16> to vector<8x8xbf16>
    %cst_24 = arith.constant dense<0.000000e+00> : vector<8x768xf32>
    %53 = tpu.matmul %52, %50, %cst_24 {dimension_numbers = #tpu.dot_dimension_numbers<[1], [0], [0], [1], [0, 0, 1, 1], [], []>} : vector<8x8xbf16>, vector<8x768xbf16>, vector<8x768xf32> -> vector<8x768xf32>
    %54 = arith.addf %49, %53 : vector<8x768xf32>
    %55 = vector.extract_strided_slice %19 {offsets = [0, 146], sizes = [8, 768], strides = [1, 1]} : vector<8x1024xbf16> to vector<8x768xbf16>
    %56 = vector.extract_strided_slice %20 {offsets = [7, 0, 0], sizes = [1, 8, 8], strides = [1, 1, 1]} : vector<9x8x8xbf16> to vector<1x8x8xbf16>
    %57 = vector.shape_cast %56 : vector<1x8x8xbf16> to vector<8x8xbf16>
    %cst_25 = arith.constant dense<0.000000e+00> : vector<8x768xf32>
    %58 = tpu.matmul %57, %55, %cst_25 {dimension_numbers = #tpu.dot_dimension_numbers<[1], [0], [0], [1], [0, 0, 1, 1], [], []>} : vector<8x8xbf16>, vector<8x768xbf16>, vector<8x768xf32> -> vector<8x768xf32>
    %59 = arith.addf %54, %58 : vector<8x768xf32>
    %60 = vector.extract_strided_slice %19 {offsets = [0, 147], sizes = [8, 768], strides = [1, 1]} : vector<8x1024xbf16> to vector<8x768xbf16>
    %61 = vector.extract_strided_slice %20 {offsets = [8, 0, 0], sizes = [1, 8, 8], strides = [1, 1, 1]} : vector<9x8x8xbf16> to vector<1x8x8xbf16>
    %62 = vector.shape_cast %61 : vector<1x8x8xbf16> to vector<8x8xbf16>
    %cst_26 = arith.constant dense<0.000000e+00> : vector<8x768xf32>
    %63 = tpu.matmul %62, %60, %cst_26 {dimension_numbers = #tpu.dot_dimension_numbers<[1], [0], [0], [1], [0, 0, 1, 1], [], []>} : vector<8x8xbf16>, vector<8x768xbf16>, vector<8x768xf32> -> vector<8x768xf32>
    %64 = arith.addf %59, %63 : vector<8x768xf32>
    %65 = arith.truncf %64 : vector<8x768xf32> to vector<8x768xbf16>
    %c0_27 = arith.constant 0 : index
    %c0_28 = arith.constant 0 : index
    %66 = vector.load %arg10[%c0_27, %c0_28] : memref<8x768xbf16, #tpu.memory_space<vmem>>, vector<8x768xbf16>
    tpu.vector_store %arg10[%c0_27, %c0_28], %65 {strides = array<i32>} : memref<8x768xbf16, #tpu.memory_space<vmem>>, vector<8x768xbf16>,
    %c0_29 = arith.constant 0 : index
    %c0_30 = arith.constant 0 : index
    %67 = vector.load %arg5[%c0_29, %c0_30] : memref<1x768xf32, #tpu.memory_space<vmem>>, vector<1x768xf32>
    %68 = vector.broadcast %67 : vector<1x768xf32> to vector<8x768xf32>
    %69 = arith.mulf %64, %68 : vector<8x768xf32>
    %cst_31 = arith.constant dense<0.000000e+00> : vector<8xf32>
    %70 = vector.multi_reduction <add>, %69, %cst_31 [1] : vector<8x768xf32> to vector<8xf32>
    %71 = vector.shape_cast %70 : vector<8xf32> to vector<8x1xf32>
    %72 = arith.mulf %69, %69 : vector<8x768xf32>
    %cst_32 = arith.constant dense<0.000000e+00> : vector<8xf32>
    %73 = vector.multi_reduction <add>, %72, %cst_32 [1] : vector<8x768xf32> to vector<8xf32>
    %74 = vector.shape_cast %73 : vector<8xf32> to vector<8x1xf32>
    %75 = tpu.concatenate %71, %74 in 1 : vector<8x1xf32>, vector<8x1xf32> -> vector<8x2xf32>
    %76 = vector.shape_cast %75 : vector<8x2xf32> to vector<1x8x2xf32>
    %c0_33 = arith.constant 0 : index
    %c0_34 = arith.constant 0 : index
    %c0_35 = arith.constant 0 : index
    %77 = vector.load %arg11[%c0_33, %c0_34, %c0_35] : memref<1x8x2xf32, #tpu.memory_space<vmem>>, vector<1x8x2xf32>
    tpu.vector_store %arg11[%c0_33, %c0_34, %c0_35], %76 {strides = array<i32>} : memref<1x8x2xf32, #tpu.memory_space<vmem>>, vector<1x8x2xf32>,
    return
  }
  func.func @transform_0(%arg0: i32) -> (i32, i32) {
    %c6_i32 = arith.constant 6 : i32
    %0 = arith.muli %arg0, %c6_i32 : i32
    %c1_i32 = arith.constant 1 : i32
    %1 = arith.subi %0, %c1_i32 : i32
    %c0_i32 = arith.constant 0 : i32
    %2 = arith.maxsi %1, %c0_i32 : i32
    %c0_i32_0 = arith.constant 0 : i32
    %c0_i32_1 = arith.constant 0 : i32
    return %c0_i32_0, %2 : i32, i32
  }
  func.func @transform_1(%arg0: i32) -> (i32, i32) {
    %c0_i32 = arith.constant 0 : i32
    %c0_i32_0 = arith.constant 0 : i32
    return %c0_i32, %arg0 : i32, i32
  }
  func.func @transform_2(%arg0: i32) -> (i32, i32) {
    %c1_i32 = arith.constant 1 : i32
    %0 = arith.addi %arg0, %c1_i32 : i32
    %c6_i32 = arith.constant 6 : i32
    %1 = arith.muli %0, %c6_i32 : i32
    %c5_i32 = arith.constant 5 : i32
    %2 = arith.minsi %1, %c5_i32 : i32
    %c0_i32 = arith.constant 0 : i32
    %c0_i32_0 = arith.constant 0 : i32
    return %c0_i32, %2 : i32, i32
  }
  func.func @transform_3(%arg0: i32) -> (i32, i32) {
    %c6_i32 = arith.constant 6 : i32
    %0 = arith.muli %arg0, %c6_i32 : i32
    %c1_i32 = arith.constant 1 : i32
    %1 = arith.subi %0, %c1_i32 : i32
    %c0_i32 = arith.constant 0 : i32
    %2 = arith.maxsi %1, %c0_i32 : i32
    %c0_i32_0 = arith.constant 0 : i32
    %c0_i32_1 = arith.constant 0 : i32
    return %c0_i32_0, %2 : i32, i32
  }
  func.func @transform_4(%arg0: i32) -> (i32, i32) {
    %c0_i32 = arith.constant 0 : i32
    %c0_i32_0 = arith.constant 0 : i32
    return %c0_i32, %arg0 : i32, i32
  }
  func.func @transform_5(%arg0: i32) -> (i32, i32) {
    %c1_i32 = arith.constant 1 : i32
    %0 = arith.addi %arg0, %c1_i32 : i32
    %c6_i32 = arith.constant 6 : i32
    %1 = arith.muli %0, %c6_i32 : i32
    %c5_i32 = arith.constant 5 : i32
    %2 = arith.minsi %1, %c5_i32 : i32
    %c0_i32 = arith.constant 0 : i32
    %c0_i32_0 = arith.constant 0 : i32
    return %c0_i32, %2 : i32, i32
  }
  func.func @transform_6(%arg0: i32) -> (i32, i32) {
    %c0_i32 = arith.constant 0 : i32
    %c0_i32_0 = arith.constant 0 : i32
    %c0_i32_1 = arith.constant 0 : i32
    return %c0_i32, %c0_i32_0 : i32, i32
  }
  func.func @transform_7(%arg0: i32) -> (i32, i32) {
    %c0_i32 = arith.constant 0 : i32
    %c0_i32_0 = arith.constant 0 : i32
    %c0_i32_1 = arith.constant 0 : i32
    return %c0_i32, %c0_i32_0 : i32, i32
  }
  func.func @transform_8(%arg0: i32) -> (i32, i32, i32) {
    %c0_i32 = arith.constant 0 : i32
    %c0_i32_0 = arith.constant 0 : i32
    %c0_i32_1 = arith.constant 0 : i32
    %c0_i32_2 = arith.constant 0 : i32
    return %c0_i32, %c0_i32_0, %c0_i32_1 : i32, i32, i32
  }
  func.func @transform_9(%arg0: i32) -> (i32, i32) {
    %c0_i32 = arith.constant 0 : i32
    %c0_i32_0 = arith.constant 0 : i32
    return %c0_i32, %arg0 : i32, i32
  }
  func.func @transform_10(%arg0: i32) -> (i32, i32, i32) {
    %c0_i32 = arith.constant 0 : i32
    %c0_i32_0 = arith.constant 0 : i32
    %c0_i32_1 = arith.constant 0 : i32
    return %arg0, %c0_i32, %c0_i32_0 : i32, i32, i32
  }
}

module attributes {stable_mosaic.version = 11 : i64} {
  func.func @_bn_relu_adp_kernel(%arg0: i32, %arg1: memref<8x768xbf16, #tpu.memory_space<vmem>>, %arg2: memref<8x1xf32, #tpu.memory_space<vmem>>, %arg3: memref<8x1xf32, #tpu.memory_space<vmem>>, %arg4: memref<8x4xf32, #tpu.memory_space<vmem>>, %arg5: memref<8x4xf32, #tpu.memory_space<vmem>>, %arg6: memref<8x4xf32, #tpu.memory_space<vmem>>, %arg7: memref<8x1xf32, #tpu.memory_space<vmem>>, %arg8: memref<8x768xf32, #tpu.memory_space<vmem>>) attributes {dimension_semantics = [#tpu.dimension_semantics<parallel>], iteration_bounds = array<i64: 1>, scalar_prefetch = 0 : i64, scratch_operands = 0 : i64, tpu.core_type = #tpu.core_type<tc>, window_params = [{transform_indices = @transform_0, window_bounds = array<i64: 8, 768>}, {pipeline_mode = #tpu.pipeline_mode<synchronous>, transform_indices = @transform_1, window_bounds = array<i64: 8, 1>}, {pipeline_mode = #tpu.pipeline_mode<synchronous>, transform_indices = @transform_2, window_bounds = array<i64: 8, 1>}, {pipeline_mode = #tpu.pipeline_mode<synchronous>, transform_indices = @transform_3, window_bounds = array<i64: 8, 4>}, {pipeline_mode = #tpu.pipeline_mode<synchronous>, transform_indices = @transform_4, window_bounds = array<i64: 8, 4>}, {pipeline_mode = #tpu.pipeline_mode<synchronous>, transform_indices = @transform_5, window_bounds = array<i64: 8, 4>}, {pipeline_mode = #tpu.pipeline_mode<synchronous>, transform_indices = @transform_6, window_bounds = array<i64: 8, 1>}, {transform_indices = @transform_7, window_bounds = array<i64: 8, 768>}]} {
    %c0 = arith.constant 0 : index
    %c0_0 = arith.constant 0 : index
    %0 = vector.load %arg1[%c0, %c0_0] : memref<8x768xbf16, #tpu.memory_space<vmem>>, vector<8x768xbf16>
    %1 = arith.extf %0 : vector<8x768xbf16> to vector<8x768xf32>
    %c0_1 = arith.constant 0 : index
    %c0_2 = arith.constant 0 : index
    %2 = vector.load %arg2[%c0_1, %c0_2] : memref<8x1xf32, #tpu.memory_space<vmem>>, vector<8x1xf32>
    %3 = vector.broadcast %2 : vector<8x1xf32> to vector<8x768xf32>
    %4 = arith.mulf %1, %3 : vector<8x768xf32>
    %c0_3 = arith.constant 0 : index
    %c0_4 = arith.constant 0 : index
    %5 = vector.load %arg3[%c0_3, %c0_4] : memref<8x1xf32, #tpu.memory_space<vmem>>, vector<8x1xf32>
    %6 = vector.broadcast %5 : vector<8x1xf32> to vector<8x768xf32>
    %7 = arith.addf %4, %6 : vector<8x768xf32>
    %cst = arith.constant 0.000000e+00 : f32
    %8 = vector.broadcast %cst : f32 to vector<8x768xf32>
    %9 = arith.maximumf %7, %8 : vector<8x768xf32>
    %c0_5 = arith.constant 0 : index
    %c0_6 = arith.constant 0 : index
    %10 = vector.load %arg4[%c0_5, %c0_6] : memref<8x4xf32, #tpu.memory_space<vmem>>, vector<8x4xf32>
    %c0_7 = arith.constant 0 : index
    %c0_8 = arith.constant 0 : index
    %11 = vector.load %arg5[%c0_7, %c0_8] : memref<8x4xf32, #tpu.memory_space<vmem>>, vector<8x4xf32>
    %c0_9 = arith.constant 0 : index
    %c0_10 = arith.constant 0 : index
    %12 = vector.load %arg6[%c0_9, %c0_10] : memref<8x4xf32, #tpu.memory_space<vmem>>, vector<8x4xf32>
    %cst_11 = arith.constant 0.000000e+00 : f32
    %13 = vector.broadcast %cst_11 : f32 to vector<8x768xf32>
    %14 = vector.extract_strided_slice %10 {offsets = [0, 0], sizes = [8, 1], strides = [1, 1]} : vector<8x4xf32> to vector<8x1xf32>
    %15 = vector.broadcast %14 : vector<8x1xf32> to vector<8x768xf32>
    %16 = arith.mulf %15, %9 : vector<8x768xf32>
    %17 = vector.extract_strided_slice %11 {offsets = [0, 0], sizes = [8, 1], strides = [1, 1]} : vector<8x4xf32> to vector<8x1xf32>
    %18 = vector.broadcast %17 : vector<8x1xf32> to vector<8x768xf32>
    %19 = arith.addf %16, %18 : vector<8x768xf32>
    %cst_12 = arith.constant 0.000000e+00 : f32
    %20 = vector.broadcast %cst_12 : f32 to vector<8x768xf32>
    %21 = arith.maximumf %19, %20 : vector<8x768xf32>
    %22 = vector.extract_strided_slice %12 {offsets = [0, 0], sizes = [8, 1], strides = [1, 1]} : vector<8x4xf32> to vector<8x1xf32>
    %23 = vector.broadcast %22 : vector<8x1xf32> to vector<8x768xf32>
    %24 = arith.mulf %23, %21 : vector<8x768xf32>
    %25 = arith.addf %13, %24 : vector<8x768xf32>
    %26 = vector.extract_strided_slice %10 {offsets = [0, 1], sizes = [8, 1], strides = [1, 1]} : vector<8x4xf32> to vector<8x1xf32>
    %27 = vector.broadcast %26 : vector<8x1xf32> to vector<8x768xf32>
    %28 = arith.mulf %27, %9 : vector<8x768xf32>
    %29 = vector.extract_strided_slice %11 {offsets = [0, 1], sizes = [8, 1], strides = [1, 1]} : vector<8x4xf32> to vector<8x1xf32>
    %30 = vector.broadcast %29 : vector<8x1xf32> to vector<8x768xf32>
    %31 = arith.addf %28, %30 : vector<8x768xf32>
    %cst_13 = arith.constant 0.000000e+00 : f32
    %32 = vector.broadcast %cst_13 : f32 to vector<8x768xf32>
    %33 = arith.maximumf %31, %32 : vector<8x768xf32>
    %34 = vector.extract_strided_slice %12 {offsets = [0, 1], sizes = [8, 1], strides = [1, 1]} : vector<8x4xf32> to vector<8x1xf32>
    %35 = vector.broadcast %34 : vector<8x1xf32> to vector<8x768xf32>
    %36 = arith.mulf %35, %33 : vector<8x768xf32>
    %37 = arith.addf %25, %36 : vector<8x768xf32>
    %38 = vector.extract_strided_slice %10 {offsets = [0, 2], sizes = [8, 1], strides = [1, 1]} : vector<8x4xf32> to vector<8x1xf32>
    %39 = vector.broadcast %38 : vector<8x1xf32> to vector<8x768xf32>
    %40 = arith.mulf %39, %9 : vector<8x768xf32>
    %41 = vector.extract_strided_slice %11 {offsets = [0, 2], sizes = [8, 1], strides = [1, 1]} : vector<8x4xf32> to vector<8x1xf32>
    %42 = vector.broadcast %41 : vector<8x1xf32> to vector<8x768xf32>
    %43 = arith.addf %40, %42 : vector<8x768xf32>
    %cst_14 = arith.constant 0.000000e+00 : f32
    %44 = vector.broadcast %cst_14 : f32 to vector<8x768xf32>
    %45 = arith.maximumf %43, %44 : vector<8x768xf32>
    %46 = vector.extract_strided_slice %12 {offsets = [0, 2], sizes = [8, 1], strides = [1, 1]} : vector<8x4xf32> to vector<8x1xf32>
    %47 = vector.broadcast %46 : vector<8x1xf32> to vector<8x768xf32>
    %48 = arith.mulf %47, %45 : vector<8x768xf32>
    %49 = arith.addf %37, %48 : vector<8x768xf32>
    %50 = vector.extract_strided_slice %10 {offsets = [0, 3], sizes = [8, 1], strides = [1, 1]} : vector<8x4xf32> to vector<8x1xf32>
    %51 = vector.broadcast %50 : vector<8x1xf32> to vector<8x768xf32>
    %52 = arith.mulf %51, %9 : vector<8x768xf32>
    %53 = vector.extract_strided_slice %11 {offsets = [0, 3], sizes = [8, 1], strides = [1, 1]} : vector<8x4xf32> to vector<8x1xf32>
    %54 = vector.broadcast %53 : vector<8x1xf32> to vector<8x768xf32>
    %55 = arith.addf %52, %54 : vector<8x768xf32>
    %cst_15 = arith.constant 0.000000e+00 : f32
    %56 = vector.broadcast %cst_15 : f32 to vector<8x768xf32>
    %57 = arith.maximumf %55, %56 : vector<8x768xf32>
    %58 = vector.extract_strided_slice %12 {offsets = [0, 3], sizes = [8, 1], strides = [1, 1]} : vector<8x4xf32> to vector<8x1xf32>
    %59 = vector.broadcast %58 : vector<8x1xf32> to vector<8x768xf32>
    %60 = arith.mulf %59, %57 : vector<8x768xf32>
    %61 = arith.addf %49, %60 : vector<8x768xf32>
    %62 = arith.addf %9, %61 : vector<8x768xf32>
    %c0_16 = arith.constant 0 : index
    %c0_17 = arith.constant 0 : index
    %63 = vector.load %arg7[%c0_16, %c0_17] : memref<8x1xf32, #tpu.memory_space<vmem>>, vector<8x1xf32>
    %64 = vector.broadcast %63 : vector<8x1xf32> to vector<8x768xf32>
    %65 = arith.addf %62, %64 : vector<8x768xf32>
    %c0_18 = arith.constant 0 : index
    %c0_19 = arith.constant 0 : index
    %66 = vector.load %arg8[%c0_18, %c0_19] : memref<8x768xf32, #tpu.memory_space<vmem>>, vector<8x768xf32>
    tpu.vector_store %arg8[%c0_18, %c0_19], %65 {strides = array<i32>} : memref<8x768xf32, #tpu.memory_space<vmem>>, vector<8x768xf32>,
    return
  }
  func.func @transform_0(%arg0: i32) -> (i32, i32) {
    %c0_i32 = arith.constant 0 : i32
    %c0_i32_0 = arith.constant 0 : i32
    return %c0_i32, %arg0 : i32, i32
  }
  func.func @transform_1(%arg0: i32) -> (i32, i32) {
    %c0_i32 = arith.constant 0 : i32
    %c0_i32_0 = arith.constant 0 : i32
    %c0_i32_1 = arith.constant 0 : i32
    return %c0_i32, %c0_i32_0 : i32, i32
  }
  func.func @transform_2(%arg0: i32) -> (i32, i32) {
    %c0_i32 = arith.constant 0 : i32
    %c0_i32_0 = arith.constant 0 : i32
    %c0_i32_1 = arith.constant 0 : i32
    return %c0_i32, %c0_i32_0 : i32, i32
  }
  func.func @transform_3(%arg0: i32) -> (i32, i32) {
    %c0_i32 = arith.constant 0 : i32
    %c0_i32_0 = arith.constant 0 : i32
    %c0_i32_1 = arith.constant 0 : i32
    return %c0_i32, %c0_i32_0 : i32, i32
  }
  func.func @transform_4(%arg0: i32) -> (i32, i32) {
    %c0_i32 = arith.constant 0 : i32
    %c0_i32_0 = arith.constant 0 : i32
    %c0_i32_1 = arith.constant 0 : i32
    return %c0_i32, %c0_i32_0 : i32, i32
  }
  func.func @transform_5(%arg0: i32) -> (i32, i32) {
    %c0_i32 = arith.constant 0 : i32
    %c0_i32_0 = arith.constant 0 : i32
    %c0_i32_1 = arith.constant 0 : i32
    return %c0_i32, %c0_i32_0 : i32, i32
  }
  func.func @transform_6(%arg0: i32) -> (i32, i32) {
    %c0_i32 = arith.constant 0 : i32
    %c0_i32_0 = arith.constant 0 : i32
    %c0_i32_1 = arith.constant 0 : i32
    return %c0_i32, %c0_i32_0 : i32, i32
  }
  func.func @transform_7(%arg0: i32) -> (i32, i32) {
    %c0_i32 = arith.constant 0 : i32
    %c0_i32_0 = arith.constant 0 : i32
    return %c0_i32, %arg0 : i32, i32
  }
}

</mosaic_0001>

<llo_original>
// kernel: tile.6
$region0: #{tile.6}
  #allocation0 [shape = 's32[1]{0}', space=sflag, size = 0x4, scoped, tag = 'scoped memory for tile.6']
  %s0 = inlined_call_operand.vmem [shape: f32[324], index: 0, kind: input, shape index: {}]
  %s1 = inlined_call_operand.vmem [shape: f32[2,324], index: 1, kind: output, shape index: {}]
  // Predicated region
  $region2: #{tile.6} parent=0 // pred_check
    _
  $region3: #{tile.6} parent=0 // pred_check_branch
    %3 = sbr.rel (0) target = $region5
  $region4: #{tile.6} parent=0 // pred_region
    _
  $region5: #{tile.6} parent=0 // pred_fallthru
    _
  %v4 = vld [vmem:[%s0] ss:$0 sm:$0xff]
  %5 = vst [vmem:[%s1] sm:$0x3] %v4
  %s6 = scalar_lea.vmem %s0, 1
  %v7 = vld [vmem:[%s6] ss:$0 sm:$0xff]
  %s8 = scalar_lea.vmem %s1, 2
  %9 = vst [vmem:[%s8] sm:$0x3] %v7
  %s10 = scalar_lea.vmem %s0, 2
  %v11 = vld [vmem:[%s10] ss:$0 sm:$0xff]
  %s12 = scalar_lea.vmem %s1, 4
  %13 = vst [vmem:[%s12] sm:$0x3] %v11

// kernel: tile.7
$region0: #{tile.7}
  %s0 = inlined_call_operand.vmem [shape: f32[2,324], index: 0, kind: input, shape index: {}]
  %s1 = inlined_call_operand.vmem [shape: f32[648], index: 1, kind: output, shape index: {}]
  $region1: #{tile.7} parent=0
    #allocation0 [shape = 'u8[12288]{0}', space=vmem, size = 0x3000, scoped, tag = 'scoped mem for input reshape']
    %s3 = sshllo.u32 0, 2
    %s4 = smul.addr 2, 2
    %s5 = scalar_lea.vmem %s0, %s4
    %v6 = vld [vmem:[%s5] sm:%s3]
    %s7 = scalar_lea.vmem [#allocation0], 16
    %8 = vst [vmem:[%s7] sm:%s3] %v6
    %s9 = scalar_lea.vmem %s0, 2
    %v10 = vld [vmem:[%s9] sm:%s3]
    %s11 = scalar_lea.vmem [#allocation0], 8
    %12 = vst [vmem:[%s11] sm:%s3] %v10
    %v13 = vld [vmem:[%s0] sm:%s3]
    %14 = vst [vmem:[#allocation0] sm:%s3] %v13
    %s15 = scalar_lea.vmem [#allocation0], 16
    %v16 = vld [vmem:[%s15] sm:$0x1]
    %vm17 = vcmask 556032
    %s18 = scalar_lea.vmem %s1, 2
    %19 = vst.msk [vmem:[%s18] sm:$0x1] %vm17, %v16
    %s20 = smov 3
    %v21 = vld [vmem:[#allocation0] ss:$8 sm:%s20]
    %22 = vst [vmem:[%s1] sm:$0x3] %v21
    %s23 = scalar_lea.vmem [#allocation0], 17
    %v24 = vld [vmem:[%s23] sm:$0x1]
    %s25 = scalar_lea.vmem [#allocation0], 1
    %v26 = vld [vmem:[%s25] ss:$8 sm:$0x7]
    %vm27 = vcmask 490496
    %v28 = vsel %vm27, %v26, %v24
    %29 = vrot.lane.b32.xlu0 %v28, 68
    %v30 = vpop.permute.xlu0 %29
    %vm31 = vcmask 64512
    %s32 = scalar_lea.vmem %s1, 5
    %33 = vst.msk [vmem:[%s32] sm:$0x1] %vm31, %v30
    %vm34 = vcmask 1048096
    %s35 = scalar_lea.vmem %s1, 2
    %36 = vst.msk [vmem:[%s35] sm:$0x7] %vm34, %v30
    %s37 = scalar_lea.vmem [#allocation0], 1
    %s38 = smov 3
    %v39 = vld [vmem:[%s37] ss:$8 sm:%s38]
    %40 = vrot.lane.b32.xlu0 %v39, 68
    %v41 = vpop.permute.xlu0 %40
    %vm42 = vcmask 556032
    %s43 = scalar_lea.vmem %s1, 3
    %44 = vst.msk [vmem:[%s43] sm:$0x3] %vm42, %v41

// kernel: double_conv_forward.5
$region0: #{double_conv_forward.5}
  #allocation0 [shape = 'u32[]', space=smem, size = 0x4, offset = 0x4, fixed_abs, tag = 'smem constant byte address 0x4 - core index']
  #allocation1 [shape = 'u32[144,128]{1,0:T(1,128)}', space=vmem, size = 0x12000, scoped, tag = 'internal scratch']
  %s0 = inlined_call_operand.vmem [shape: bf16[8,768], index: 0, kind: input, shape index: {}]
  %s1 = inlined_call_operand.vmem [shape: f32[8,1], index: 1, kind: input, shape index: {}]
  %s2 = inlined_call_operand.vmem [shape: f32[8,1], index: 2, kind: input, shape index: {}]
  %s3 = inlined_call_operand.vmem [shape: f32[8,4], index: 3, kind: input, shape index: {}]
  %s4 = inlined_call_operand.vmem [shape: f32[8,4], index: 4, kind: input, shape index: {}]
  %s5 = inlined_call_operand.vmem [shape: f32[8,4], index: 5, kind: input, shape index: {}]
  %s6 = inlined_call_operand.vmem [shape: f32[8,1], index: 6, kind: input, shape index: {}]
  %s7 = inlined_call_operand.vmem [shape: f32[8,768], index: 7, kind: output, shape index: {}]
  %s8 = sld [smem:[#allocation0]]
  $region38: #{double_conv_forward.5} parent=0
    _
  %s10 = ssub.s32 1, %s8
  %s11 = scalar_select 0, %s10, %s8
  // Predicated region
  $region2: #{double_conv_forward.5} parent=0 // pred_check
    _
  $region3: #{double_conv_forward.5} parent=0 // pred_check_branch
    %13 = sbr.rel (0) target = $region5
  $region4: #{double_conv_forward.5} parent=0 // pred_region
    _
  $region5: #{double_conv_forward.5} parent=0 // pred_fallthru
    _
  // Predicated region
  $region6: #{double_conv_forward.5} parent=0 // pred_check
    _
  $region7: #{double_conv_forward.5} parent=0 // pred_check_branch
    %15 = sbr.rel (0) target = $region9
  $region8: #{double_conv_forward.5} parent=0 // pred_region
    _
  $region9: #{double_conv_forward.5} parent=0 // pred_fallthru
    _
  // Predicated region
  $region10: #{double_conv_forward.5} parent=0 // pred_check
    _
  $region11: #{double_conv_forward.5} parent=0 // pred_check_branch
    %17 = sbr.rel (0) target = $region13
  $region12: #{double_conv_forward.5} parent=0 // pred_region
    _
  $region13: #{double_conv_forward.5} parent=0 // pred_fallthru
    _
  // Predicated region
  $region14: #{double_conv_forward.5} parent=0 // pred_check
    _
  $region15: #{double_conv_forward.5} parent=0 // pred_check_branch
    %19 = sbr.rel (0) target = $region17
  $region16: #{double_conv_forward.5} parent=0 // pred_region
    _
  $region17: #{double_conv_forward.5} parent=0 // pred_fallthru
    _
  // Predicated region
  $region18: #{double_conv_forward.5} parent=0 // pred_check
    _
  $region19: #{double_conv_forward.5} parent=0 // pred_check_branch
    %21 = sbr.rel (0) target = $region21
  $region20: #{double_conv_forward.5} parent=0 // pred_region
    _
  $region21: #{double_conv_forward.5} parent=0 // pred_fallthru
    _
  // Predicated region
  $region22: #{double_conv_forward.5} parent=0 // pred_check
    _
  $region23: #{double_conv_forward.5} parent=0 // pred_check_branch
    %23 = sbr.rel (0) target = $region25
  $region24: #{double_conv_forward.5} parent=0 // pred_region
    _
  $region25: #{double_conv_forward.5} parent=0 // pred_fallthru
    _
  // Predicated region
  $region26: #{double_conv_forward.5} parent=0 // pred_check
    _
  $region27: #{double_conv_forward.5} parent=0 // pred_check_branch
    %25 = sbr.rel (0) target = $region29
  $region28: #{double_conv_forward.5} parent=0 // pred_region
    _
  $region29: #{double_conv_forward.5} parent=0 // pred_fallthru
    _
  %v26 = vld [vmem:[%s0] sm:$0xff]
  %v27 = vld [vmem:[%s0 + $0x8] sm:$0xff]
  %v28 = vld [vmem:[%s0 + $0x10] sm:$0xff]
  %v29 = vunpack.c.l.bf16 %v26
  %v30 = vunpack.c.h.bf16 %v26
  %v31 = vunpack.c.l.bf16 %v27
  %v32 = vunpack.c.h.bf16 %v27
  %v33 = vunpack.c.l.bf16 %v28
  %v34 = vunpack.c.h.bf16 %v28
  %v35 = vld [vmem:[%s1] sm:$0xff]
  %37 = vset.pattern.permute.xlu0 0
  %38 = vperm.xlu0 %37, %v35
  %v39 = vpop.permute.xlu0 %38
  %v41 = vmul.f32 %v29, %v39
  %v42 = vmul.f32 %v30, %v39
  %v43 = vmul.f32 %v31, %v39
  %v44 = vmul.f32 %v32, %v39
  %v45 = vmul.f32 %v33, %v39
  %v46 = vmul.f32 %v34, %v39
  %v47 = vld [vmem:[%s2] sm:$0xff]
  %49 = vset.pattern.permute.xlu0 0
  %50 = vperm.xlu0 %49, %v47
  %v51 = vpop.permute.xlu0 %50
  %v53 = vadd.f32 %v41, %v51
  %v54 = vadd.f32 %v42, %v51
  %v55 = vadd.f32 %v43, %v51
  %v56 = vadd.f32 %v44, %v51
  %v57 = vadd.f32 %v45, %v51
  %v58 = vadd.f32 %v46, %v51
  %v59 = vmax.f32 %v53, 0.0
  %v60 = vmax.f32 %v54, 0.0
  %v61 = vmax.f32 %v55, 0.0
  %v62 = vmax.f32 %v56, 0.0
  %v63 = vmax.f32 %v57, 0.0
  %v64 = vmax.f32 %v58, 0.0
  %v65 = vld [vmem:[%s3] sm:$0xff]
  %v66 = vld [vmem:[%s4] sm:$0xff]
  %v67 = vld [vmem:[%s5] sm:$0xff]
  %69 = vset.pattern.permute.xlu0 0
  %70 = vperm.xlu0 %69, %v65
  %v71 = vpop.permute.xlu0 %70
  %v73 = vmul.f32 %v71, %v59
  %v74 = vmul.f32 %v71, %v60
  %v75 = vmul.f32 %v71, %v61
  %v76 = vmul.f32 %v71, %v62
  %v77 = vmul.f32 %v71, %v63
  %v78 = vmul.f32 %v71, %v64
  %80 = vset.pattern.permute.xlu0 0
  %81 = vperm.xlu0 %80, %v66
  %v82 = vpop.permute.xlu0 %81
  %v84 = vadd.f32 %v73, %v82
  %v85 = vadd.f32 %v74, %v82
  %v86 = vadd.f32 %v75, %v82
  %v87 = vadd.f32 %v76, %v82
  %v88 = vadd.f32 %v77, %v82
  %v89 = vadd.f32 %v78, %v82
  %v90 = vmax.f32 %v84, 0.0
  %v91 = vmax.f32 %v85, 0.0
  %v92 = vmax.f32 %v86, 0.0
  %v93 = vmax.f32 %v87, 0.0
  %v94 = vmax.f32 %v88, 0.0
  %v95 = vmax.f32 %v89, 0.0
  %97 = vset.pattern.permute.xlu0 0
  %98 = vperm.xlu0 %97, %v67
  %v99 = vpop.permute.xlu0 %98
  %v101 = vmul.f32 %v99, %v90
  %v102 = vmul.f32 %v99, %v91
  %v103 = vmul.f32 %v99, %v92
  %v104 = vmul.f32 %v99, %v93
  %v105 = vmul.f32 %v99, %v94
  %v106 = vmul.f32 %v99, %v95
  %v107 = vadd.f32 %v101, 0.0
  %v108 = vadd.f32 %v102, 0.0
  %v109 = vadd.f32 %v103, 0.0
  %v110 = vadd.f32 %v104, 0.0
  %v111 = vadd.f32 %v105, 0.0
  %v112 = vadd.f32 %v106, 0.0
  %113 = vset.pattern.permute.xlu0 1
  %114 = vperm.xlu0 %113, %v65
  %v115 = vpop.permute.xlu0 %114
  %v117 = vmul.f32 %v115, %v59
  %v118 = vmul.f32 %v115, %v60
  %v119 = vmul.f32 %v115, %v61
  %v120 = vmul.f32 %v115, %v62
  %v121 = vmul.f32 %v115, %v63
  %v122 = vmul.f32 %v115, %v64
  %123 = vset.pattern.permute.xlu0 1
  %124 = vperm.xlu0 %123, %v66
  %v125 = vpop.permute.xlu0 %124
  %v127 = vadd.f32 %v117, %v125
  %v128 = vadd.f32 %v118, %v125
  %v129 = vadd.f32 %v119, %v125
  %v130 = vadd.f32 %v120, %v125
  %v131 = vadd.f32 %v121, %v125
  %v132 = vadd.f32 %v122, %v125
  %v133 = vmax.f32 %v127, 0.0
  %v134 = vmax.f32 %v128, 0.0
  %v135 = vmax.f32 %v129, 0.0
  %v136 = vmax.f32 %v130, 0.0
  %v137 = vmax.f32 %v131, 0.0
  %v138 = vmax.f32 %v132, 0.0
  %139 = vset.pattern.permute.xlu0 1
  %140 = vperm.xlu0 %139, %v67
  %v141 = vpop.permute.xlu0 %140
  %v143 = vmul.f32 %v141, %v133
  %v144 = vmul.f32 %v141, %v134
  %v145 = vmul.f32 %v141, %v135
  %v146 = vmul.f32 %v141, %v136
  %v147 = vmul.f32 %v141, %v137
  %v148 = vmul.f32 %v141, %v138
  %v149 = vadd.f32 %v107, %v143
  %v150 = vadd.f32 %v108, %v144
  %v151 = vadd.f32 %v109, %v145
  %v152 = vadd.f32 %v110, %v146
  %v153 = vadd.f32 %v111, %v147
  %v154 = vadd.f32 %v112, %v148
  %155 = vset.pattern.permute.xlu0 2
  %156 = vperm.xlu0 %155, %v65
  %v157 = vpop.permute.xlu0 %156
  %v159 = vmul.f32 %v157, %v59
  %v160 = vmul.f32 %v157, %v60
  %v161 = vmul.f32 %v157, %v61
  %v162 = vmul.f32 %v157, %v62
  %v163 = vmul.f32 %v157, %v63
  %v164 = vmul.f32 %v157, %v64
  %165 = vset.pattern.permute.xlu0 2
  %166 = vperm.xlu0 %165, %v66
  %v167 = vpop.permute.xlu0 %166
  %v169 = vadd.f32 %v159, %v167
  %v170 = vadd.f32 %v160, %v167
  %v171 = vadd.f32 %v161, %v167
  %v172 = vadd.f32 %v162, %v167
  %v173 = vadd.f32 %v163, %v167
  %v174 = vadd.f32 %v164, %v167
  %v175 = vmax.f32 %v169, 0.0
  %v176 = vmax.f32 %v170, 0.0
  %v177 = vmax.f32 %v171, 0.0
  %v178 = vmax.f32 %v172, 0.0
  %v179 = vmax.f32 %v173, 0.0
  %v180 = vmax.f32 %v174, 0.0
  %181 = vset.pattern.permute.xlu0 2
  %182 = vperm.xlu0 %181, %v67
  %v183 = vpop.permute.xlu0 %182
  %v185 = vmul.f32 %v183, %v175
  %v186 = vmul.f32 %v183, %v176
  %v187 = vmul.f32 %v183, %v177
  %v188 = vmul.f32 %v183, %v178
  %v189 = vmul.f32 %v183, %v179
  %v190 = vmul.f32 %v183, %v180
  %v191 = vadd.f32 %v149, %v185
  %v192 = vadd.f32 %v150, %v186
  %v193 = vadd.f32 %v151, %v187
  %v194 = vadd.f32 %v152, %v188
  %v195 = vadd.f32 %v153, %v189
  %v196 = vadd.f32 %v154, %v190
  %197 = vset.pattern.permute.xlu0 3
  %198 = vperm.xlu0 %197, %v65
  %v199 = vpop.permute.xlu0 %198
  %v201 = vmul.f32 %v199, %v59
  %v202 = vmul.f32 %v199, %v60
  %v203 = vmul.f32 %v199, %v61
  %v204 = vmul.f32 %v199, %v62
  %v205 = vmul.f32 %v199, %v63
  %v206 = vmul.f32 %v199, %v64
  %207 = vset.pattern.permute.xlu0 3
  %208 = vperm.xlu0 %207, %v66
  %v209 = vpop.permute.xlu0 %208
  %v211 = vadd.f32 %v201, %v209
  %v212 = vadd.f32 %v202, %v209
  %v213 = vadd.f32 %v203, %v209
  %v214 = vadd.f32 %v204, %v209
  %v215 = vadd.f32 %v205, %v209
  %v216 = vadd.f32 %v206, %v209
  %v217 = vmax.f32 %v211, 0.0
  %v218 = vmax.f32 %v212, 0.0
  %v219 = vmax.f32 %v213, 0.0
  %v220 = vmax.f32 %v214, 0.0
  %v221 = vmax.f32 %v215, 0.0
  %v222 = vmax.f32 %v216, 0.0
  %223 = vset.pattern.permute.xlu0 3
  %224 = vperm.xlu0 %223, %v67
  %v225 = vpop.permute.xlu0 %224
  %v227 = vmul.f32 %v225, %v217
  %v228 = vmul.f32 %v225, %v218
  %v229 = vmul.f32 %v225, %v219
  %v230 = vmul.f32 %v225, %v220
  %v231 = vmul.f32 %v225, %v221
  %v232 = vmul.f32 %v225, %v222
  %v233 = vadd.f32 %v191, %v227
  %v234 = vadd.f32 %v192, %v228
  %v235 = vadd.f32 %v193, %v229
  %v236 = vadd.f32 %v194, %v230
  %v237 = vadd.f32 %v195, %v231
  %v238 = vadd.f32 %v196, %v232
  %v239 = vadd.f32 %v59, %v233
  %v240 = vadd.f32 %v60, %v234
  %v241 = vadd.f32 %v61, %v235
  %v242 = vadd.f32 %v62, %v236
  %v243 = vadd.f32 %v63, %v237
  %v244 = vadd.f32 %v64, %v238
  %v245 = vld [vmem:[%s6] sm:$0xff]
  %247 = vset.pattern.permute.xlu0 0
  %248 = vperm.xlu0 %247, %v245
  %v249 = vpop.permute.xlu0 %248
  %v251 = vadd.f32 %v239, %v249
  %v252 = vadd.f32 %v240, %v249
  %v253 = vadd.f32 %v241, %v249
  %v254 = vadd.f32 %v242, %v249
  %v255 = vadd.f32 %v243, %v249
  %v256 = vadd.f32 %v244, %v249
  %257 = vst [vmem:[%s7] sm:$0xff] %v251
  %258 = vst [vmem:[%s7 + $0x8] sm:$0xff] %v252
  %259 = vst [vmem:[%s7 + $0x10] sm:$0xff] %v253
  %260 = vst [vmem:[%s7 + $0x18] sm:$0xff] %v254
  %261 = vst [vmem:[%s7 + $0x20] sm:$0xff] %v255
  %262 = vst [vmem:[%s7 + $0x28] sm:$0xff] %v256
  // Predicated region
  $region30: #{double_conv_forward.5} parent=0 // pred_check
    _
  $region31: #{double_conv_forward.5} parent=0 // pred_check_branch
    %264 = sbr.rel (0) target = $region33
  $region32: #{double_conv_forward.5} parent=0 // pred_region
    _
  $region33: #{double_conv_forward.5} parent=0 // pred_fallthru
    _
  // Predicated region
  $region34: #{double_conv_forward.5} parent=0 // pred_check
    _
  $region35: #{double_conv_forward.5} parent=0 // pred_check_branch
    %266 = sbr.rel (0) target = $region37
  $region36: #{double_conv_forward.5} parent=0 // pred_region
    _
  $region37: #{double_conv_forward.5} parent=0 // pred_fallthru
    _

// kernel: double_conv_forward.3
$region0: #{double_conv_forward.3}
  #allocation0 [shape = 'u32[]', space=smem, size = 0x4, offset = 0x4, fixed_abs, tag = 'smem constant byte address 0x4 - core index']
  #allocation1 [shape = 'u32[144,128]{1,0:T(1,128)}', space=vmem, size = 0x12000, scoped, tag = 'internal scratch']
  %s0 = inlined_call_operand.vmem [shape: bf16[4,768], index: 0, kind: input, shape index: {}, may-alias: {0,1,2}]
  %s1 = inlined_call_operand.vmem [shape: bf16[4,768], index: 1, kind: input, shape index: {}, may-alias: {0,1,2}]
  %s2 = inlined_call_operand.vmem [shape: bf16[4,768], index: 2, kind: input, shape index: {}, may-alias: {0,1,2}]
  %s3 = inlined_call_operand.vmem [shape: f32[1,768], index: 3, kind: input, shape index: {}]
  %s4 = inlined_call_operand.vmem [shape: bf16[9,8,4], index: 4, kind: input, shape index: {}]
  %s5 = inlined_call_operand.vmem [shape: bf16[8,768], index: 5, kind: output, shape index: {0}]
  %s6 = inlined_call_operand.vmem [shape: f32[1,8,2], index: 6, kind: output, shape index: {1}]
  %7 = xla_tuple %s5, %s6
  %s8 = sld [smem:[#allocation0]]
  $region38: #{double_conv_forward.3} parent=0
    _
  %s10 = ssub.s32 1, %s8
  %s11 = scalar_select 0, %s10, %s8
  // Predicated region
  $region2: #{double_conv_forward.3} parent=0 // pred_check
    _
  $region3: #{double_conv_forward.3} parent=0 // pred_check_branch
    %13 = sbr.rel (0) target = $region5
  $region4: #{double_conv_forward.3} parent=0 // pred_region
    %s14 = smul.u32 0, 6
    %s15 = ssub.s32 %s14, 1
    %p16 = scmp.gt.s32.totalorder %s15, 0
    %s17 = scalar_select %p16, %s15, 0
    %p18 = scmp.lt.s32.totalorder %s17, 5
    %s19 = scalar_select %p18, %s17, 5
    %s20 = smul.addr %s19, 2
    %s21 = scalar_lea.vmem %s0, %s20
    %s22 = smul.u32 0, 6
    %s23 = ssub.s32 %s22, 1
    %p24 = scmp.gt.s32.totalorder %s23, 0
    %s25 = scalar_select %p24, %s23, 0
  $region5: #{double_conv_forward.3} parent=0 // pred_fallthru
    _
  // Predicated region
  $region6: #{double_conv_forward.3} parent=0 // pred_check
    _
  $region7: #{double_conv_forward.3} parent=0 // pred_check_branch
    %27 = sbr.rel (0) target = $region9
  $region8: #{double_conv_forward.3} parent=0 // pred_region
    _
  $region9: #{double_conv_forward.3} parent=0 // pred_fallthru
    _
  // Predicated region
  $region10: #{double_conv_forward.3} parent=0 // pred_check
    _
  $region11: #{double_conv_forward.3} parent=0 // pred_check_branch
    %29 = sbr.rel (0) target = $region13
  $region12: #{double_conv_forward.3} parent=0 // pred_region
    %s30 = sadd.s32 0, 1
    %s31 = smul.u32 %s30, 6
    %p32 = scmp.lt.s32.totalorder %s31, 5
    %s33 = scalar_select %p32, %s31, 5
    %p34 = scmp.lt.s32.totalorder %s33, 5
    %s35 = scalar_select %p34, %s33, 5
    %s36 = smul.addr %s35, 2
    %s37 = scalar_lea.vmem %s2, %s36
    %s38 = sadd.s32 0, 1
    %s39 = smul.u32 %s38, 6
    %p40 = scmp.lt.s32.totalorder %s39, 5
    %s41 = scalar_select %p40, %s39, 5
  $region13: #{double_conv_forward.3} parent=0 // pred_fallthru
    _
  // Predicated region
  $region14: #{double_conv_forward.3} parent=0 // pred_check
    _
  $region15: #{double_conv_forward.3} parent=0 // pred_check_branch
    %43 = sbr.rel (0) target = $region17
  $region16: #{double_conv_forward.3} parent=0 // pred_region
    _
  $region17: #{double_conv_forward.3} parent=0 // pred_fallthru
    _
  // Predicated region
  $region18: #{double_conv_forward.3} parent=0 // pred_check
    _
  $region19: #{double_conv_forward.3} parent=0 // pred_check_branch
    %45 = sbr.rel (0) target = $region21
  $region20: #{double_conv_forward.3} parent=0 // pred_region
    _
  $region21: #{double_conv_forward.3} parent=0 // pred_fallthru
    _
  %s46 = smul.u32 0, 6
  %s47 = ssub.s32 %s46, 1
  %p48 = scmp.gt.s32.totalorder %s47, 0
  %s49 = scalar_select %p48, %s47, 0
  %p50 = scmp.lt.s32.totalorder %s49, 5
  %s51 = scalar_select %p50, %s49, 5
  %s52 = smul.addr %s51, 2
  %s53 = scalar_lea.vmem %s0, %s52
  %s54 = sadd.s32 0, 1
  %s55 = smul.u32 %s54, 6
  %p56 = scmp.lt.s32.totalorder %s55, 5
  %s57 = scalar_select %p56, %s55, 5
  %p58 = scmp.lt.s32.totalorder %s57, 5
  %s59 = scalar_select %p58, %s57, 5
  %s60 = smul.addr %s59, 2
  %s61 = scalar_lea.vmem %s2, %s60
  %s62 = smul.u32 0, 6
  %s63 = ssub.s32 %s62, 1
  %p64 = scmp.gt.s32.totalorder %s63, 0
  %s65 = scalar_select %p64, %s63, 0
  %p66 = scmp.lt.s32.totalorder %s65, 5
  %s67 = scalar_select %p66, %s65, 5
  %s68 = smul.addr %s67, 2
  %s69 = scalar_lea.vmem %s0, %s68
  %s70 = smul.u32 0, 6
  %s71 = ssub.s32 %s70, 1
  %p72 = scmp.gt.s32.totalorder %s71, 0
  %s73 = scalar_select %p72, %s71, 0
  %s74 = sadd.s32 0, 1
  %s75 = smul.u32 %s74, 6
  %p76 = scmp.lt.s32.totalorder %s75, 5
  %s77 = scalar_select %p76, %s75, 5
  %p78 = scmp.lt.s32.totalorder %s77, 5
  %s79 = scalar_select %p78, %s77, 5
  %s80 = smul.addr %s79, 2
  %s81 = scalar_lea.vmem %s2, %s80
  %s82 = sadd.s32 0, 1
  %s83 = smul.u32 %s82, 6
  %p84 = scmp.lt.s32.totalorder %s83, 5
  %s85 = scalar_select %p84, %s83, 5
  %v87 = vld [vmem:[%s69] sm:$0x3]
  %v88 = vld [vmem:[%s1] sm:$0xff]
  %v89 = vld [vmem:[%s1 + $0x8] sm:$0xf]
  %v90 = vld [vmem:[%s81] sm:$0x3]
  %v93 = vcombine.high %v88, %v88
  %v95 = vunpack.c.l.s4 1983009808
  %v96 = vunpack.c.0.s8 %v95
  %v97 = vlaneseq
  %v98 = vshrl.u32 %v97, 7
  %v99 = vsub.s32 %v96, %v98
  %v100 = vrot.slane %v88, %v99
  %v102 = vunpack.c.l.s4 1983009808
  %v103 = vunpack.c.0.s8 %v102
  %v104 = vlaneseq
  %v105 = vshrl.u32 %v104, 7
  %v106 = vsub.s32 %v103, %v105
  %v107 = vrot.slane %v93, %v106
  %v108 = vcombine.high %v100, %v100
  %v109 = vcombine.high %v107, %v107
  %v111 = vunpack.c.l.s4 1983009808
  %v112 = vunpack.c.0.s8 %v111
  %v113 = vlaneseq
  %v114 = vshrl.u32 %v113, 7
  %v115 = vsub.s32 %v112, %v114
  %v116 = vrot.slane %v89, %v115
  %v117 = vcombine.high %v116, %v116
  %v118 = vld [vmem:[%s4] sm:$0xf]
  %v119 = vld [vmem:[%s4 + $0x4] sm:$0xf]
  %v120 = vld [vmem:[%s4 + $0x8] sm:$0xf]
  %v121 = vld [vmem:[%s4 + $0xc] sm:$0xf]
  %v122 = vld [vmem:[%s4 + $0x10] sm:$0xf]
  %v123 = vld [vmem:[%s4 + $0x14] sm:$0xf]
  %v124 = vld [vmem:[%s4 + $0x18] sm:$0xf]
  %v125 = vld [vmem:[%s4 + $0x1c] sm:$0xf]
  %v126 = vld [vmem:[%s4 + $0x20] sm:$0xf]
  %128 = vrot.lane.b32.xlu0 %v87, 18
  %v129 = vpop.permute.xlu0 %128
  %130 = vrot.lane.b32.xlu0 %v100, 18
  %v131 = vpop.permute.xlu0 %130
  %132 = vrot.lane.b32.xlu0 %v108, 18
  %v133 = vpop.permute.xlu0 %132
  %134 = vrot.lane.b32.xlu0 %v107, 18
  %v135 = vpop.permute.xlu0 %134
  %136 = vrot.lane.b32.xlu0 %v109, 18
  %v137 = vpop.permute.xlu0 %136
  %138 = vrot.lane.b32.xlu0 %v116, 18
  %v139 = vpop.permute.xlu0 %138
  %140 = vrot.lane.b32.xlu0 %v117, 18
  %v141 = vpop.permute.xlu0 %140
  %vm142 = vcmask 146432
  %v143 = vsel %vm142, %v129, %v131
  %v144 = vsel %vm142, %v131, %v133
  %v145 = vsel %vm142, %v133, %v135
  %v146 = vsel %vm142, %v135, %v137
  %v147 = vsel %vm142, %v137, %v139
  %v148 = vsel %vm142, %v139, %v141
  %vm149 = vcmask 31744
  %v151 = vsel %vm149, %v119, 0
  %vm153 = vcmask 1041408
  %v155 = vsel %vm153, %v143, 0
  %v158 = vsel %vm153, %v144, 0
  %v161 = vsel %vm153, %v145, 0
  %v164 = vsel %vm153, %v146, 0
  %v167 = vsel %vm153, %v147, 0
  %v170 = vsel %vm153, %v148, 0
  %172 = vmatprep.subr.bf16.mxu0 %v158
  %173 = vmatpush1.bf16.msra.mxu0 %v155
  %174 = vmatprep.subr.bf16.mxu0 0
  %175 = vmatpush1.bf16.msra.mxu0 0
  %176 = vmatprep.subr.bf16.mxu0 0
  %177 = vmatpush1.bf16.msra.mxu0 0
  %178 = vmatprep.subr.bf16.mxu0 0
  %179 = vmatpush1.bf16.msra.mxu0 0
  %180 = vmatprep.subr.bf16.mxu0 0
  %181 = vmatpush1.bf16.msra.mxu0 0
  %182 = vmatprep.subr.bf16.mxu0 0
  %183 = vmatpush1.bf16.msra.mxu0 0
  %184 = vmatprep.subr.bf16.mxu0 0
  %185 = vmatpush1.bf16.msra.mxu0 0
  %186 = vmatprep.subr.bf16.mxu0 0
  %187 = vmatpush1.bf16.msra.mxu0 0
  %188 = vmatprep.subr.bf16.mxu0 0
  %189 = vmatpush1.bf16.msra.mxu0 0
  %190 = vmatprep.subr.bf16.mxu0 0
  %191 = vmatpush1.bf16.msra.mxu0 0
  %192 = vmatprep.subr.bf16.mxu0 0
  %193 = vmatpush1.bf16.msra.mxu0 0
  %194 = vmatprep.subr.bf16.mxu0 0
  %195 = vmatpush1.bf16.msra.mxu0 0
  %196 = vmatprep.subr.bf16.mxu0 0
  %197 = vmatpush1.bf16.msra.mxu0 0
  %198 = vmatprep.subr.bf16.mxu0 0
  %199 = vmatpush1.bf16.msra.mxu0 0
  %200 = vmatprep.subr.bf16.mxu0 0
  %201 = vmatpush1.bf16.msra.mxu0 0
  %202 = vmatprep.subr.bf16.mxu0 0
  %203 = vmatpush1.bf16.msra.mxu0 0
  %204 = vmatprep.mubr.bf16.mxu0 0
  %205 = vmatmul.mubr.bf16.gmra.mrb[0].mxu0 %v151
  %v206 = vpop.f32.mrb[0].mxu0
  %v207 = vadd.f32 0.0, %v206
  %v208 = vpop.f32.mrb[0].mxu0
  %v209 = vadd.f32 0.0, %v208
  %v210 = vpop.f32.mrb[0].mxu0
  %v211 = vpop.f32.mrb[0].mxu0
  %212 = vdwg.mxu0
  %213 = vmatprep.subr.bf16.mxu0 %v164
  %214 = vmatpush1.bf16.msra.mxu0 %v161
  %215 = vmatprep.subr.bf16.mxu0 0
  %216 = vmatpush1.bf16.msra.mxu0 0
  %217 = vmatprep.subr.bf16.mxu0 0
  %218 = vmatpush1.bf16.msra.mxu0 0
  %219 = vmatprep.subr.bf16.mxu0 0
  %220 = vmatpush1.bf16.msra.mxu0 0
  %221 = vmatprep.subr.bf16.mxu0 0
  %222 = vmatpush1.bf16.msra.mxu0 0
  %223 = vmatprep.subr.bf16.mxu0 0
  %224 = vmatpush1.bf16.msra.mxu0 0
  %225 = vmatprep.subr.bf16.mxu0 0
  %226 = vmatpush1.bf16.msra.mxu0 0
  %227 = vmatprep.subr.bf16.mxu0 0
  %228 = vmatpush1.bf16.msra.mxu0 0
  %229 = vmatprep.subr.bf16.mxu0 0
  %230 = vmatpush1.bf16.msra.mxu0 0
  %231 = vmatprep.subr.bf16.mxu0 0
  %232 = vmatpush1.bf16.msra.mxu0 0
  %233 = vmatprep.subr.bf16.mxu0 0
  %234 = vmatpush1.bf16.msra.mxu0 0
  %235 = vmatprep.subr.bf16.mxu0 0
  %236 = vmatpush1.bf16.msra.mxu0 0
  %237 = vmatprep.subr.bf16.mxu0 0
  %238 = vmatpush1.bf16.msra.mxu0 0
  %239 = vmatprep.subr.bf16.mxu0 0
  %240 = vmatpush1.bf16.msra.mxu0 0
  %241 = vmatprep.subr.bf16.mxu0 0
  %242 = vmatpush1.bf16.msra.mxu0 0
  %243 = vmatprep.subr.bf16.mxu0 0
  %244 = vmatpush1.bf16.msra.mxu0 0
  %245 = vmatprep.mubr.bf16.mxu0 0
  %246 = vmatmul.mubr.bf16.gmra.mrb[0].mxu0 %v151
  %v247 = vpop.f32.mrb[0].mxu0
  %v248 = vadd.f32 0.0, %v247
  %v249 = vpop.f32.mrb[0].mxu0
  %v250 = vadd.f32 0.0, %v249
  %v251 = vpop.f32.mrb[0].mxu0
  %v252 = vpop.f32.mrb[0].mxu0
  %253 = vdwg.mxu0
  %254 = vmatprep.subr.bf16.mxu0 %v170
  %255 = vmatpush1.bf16.msra.mxu0 %v167
  %256 = vmatprep.subr.bf16.mxu0 0
  %257 = vmatpush1.bf16.msra.mxu0 0
  %258 = vmatprep.subr.bf16.mxu0 0
  %259 = vmatpush1.bf16.msra.mxu0 0
  %260 = vmatprep.subr.bf16.mxu0 0
  %261 = vmatpush1.bf16.msra.mxu0 0
  %262 = vmatprep.subr.bf16.mxu0 0
  %263 = vmatpush1.bf16.msra.mxu0 0
  %264 = vmatprep.subr.bf16.mxu0 0
  %265 = vmatpush1.bf16.msra.mxu0 0
  %266 = vmatprep.subr.bf16.mxu0 0
  %267 = vmatpush1.bf16.msra.mxu0 0
  %268 = vmatprep.subr.bf16.mxu0 0
  %269 = vmatpush1.bf16.msra.mxu0 0
  %270 = vmatprep.subr.bf16.mxu0 0
  %271 = vmatpush1.bf16.msra.mxu0 0
  %272 = vmatprep.subr.bf16.mxu0 0
  %273 = vmatpush1.bf16.msra.mxu0 0
  %274 = vmatprep.subr.bf16.mxu0 0
  %275 = vmatpush1.bf16.msra.mxu0 0
  %276 = vmatprep.subr.bf16.mxu0 0
  %277 = vmatpush1.bf16.msra.mxu0 0
  %278 = vmatprep.subr.bf16.mxu0 0
  %279 = vmatpush1.bf16.msra.mxu0 0
  %280 = vmatprep.subr.bf16.mxu0 0
  %281 = vmatpush1.bf16.msra.mxu0 0
  %282 = vmatprep.subr.bf16.mxu0 0
  %283 = vmatpush1.bf16.msra.mxu0 0
  %284 = vmatprep.subr.bf16.mxu0 0
  %285 = vmatpush1.bf16.msra.mxu0 0
  %286 = vmatprep.mubr.bf16.mxu0 0
  %287 = vmatmul.mubr.bf16.gmra.mrb[0].mxu0 %v151
  %v288 = vpop.f32.mrb[0].mxu0
  %v289 = vadd.f32 0.0, %v288
  %v290 = vpop.f32.mrb[0].mxu0
  %v291 = vadd.f32 0.0, %v290
  %v292 = vpop.f32.mrb[0].mxu0
  %v293 = vpop.f32.mrb[0].mxu0
  %294 = vdwg.mxu0
  %295 = vrot.lane.b32.xlu0 %v87, 19
  %v296 = vpop.permute.xlu0 %295
  %297 = vrot.lane.b32.xlu0 %v100, 19
  %v298 = vpop.permute.xlu0 %297
  %299 = vrot.lane.b32.xlu0 %v108, 19
  %v300 = vpop.permute.xlu0 %299
  %301 = vrot.lane.b32.xlu0 %v107, 19
  %v302 = vpop.permute.xlu0 %301
  %303 = vrot.lane.b32.xlu0 %v109, 19
  %v304 = vpop.permute.xlu0 %303
  %305 = vrot.lane.b32.xlu0 %v116, 19
  %v306 = vpop.permute.xlu0 %305
  %307 = vrot.lane.b32.xlu0 %v117, 19
  %v308 = vpop.permute.xlu0 %307
  %vm309 = vcmask 154624
  %v310 = vsel %vm309, %v296, %v298
  %v311 = vsel %vm309, %v298, %v300
  %v312 = vsel %vm309, %v300, %v302
  %v313 = vsel %vm309, %v302, %v304
  %v314 = vsel %vm309, %v304, %v306
  %v315 = vsel %vm309, %v306, %v308
  %v317 = vsel %vm149, %v118, 0
  %v320 = vsel %vm153, %v310, 0
  %v323 = vsel %vm153, %v311, 0
  %v326 = vsel %vm153, %v312, 0
  %v329 = vsel %vm153, %v313, 0
  %v332 = vsel %vm153, %v314, 0
  %v335 = vsel %vm153, %v315, 0
  %337 = vmatprep.subr.bf16.mxu0 %v323
  %338 = vmatpush1.bf16.msra.mxu0 %v320
  %339 = vmatprep.subr.bf16.mxu0 0
  %340 = vmatpush1.bf16.msra.mxu0 0
  %341 = vmatprep.subr.bf16.mxu0 0
  %342 = vmatpush1.bf16.msra.mxu0 0
  %343 = vmatprep.subr.bf16.mxu0 0
  %344 = vmatpush1.bf16.msra.mxu0 0
  %345 = vmatprep.subr.bf16.mxu0 0
  %346 = vmatpush1.bf16.msra.mxu0 0
  %347 = vmatprep.subr.bf16.mxu0 0
  %348 = vmatpush1.bf16.msra.mxu0 0
  %349 = vmatprep.subr.bf16.mxu0 0
  %350 = vmatpush1.bf16.msra.mxu0 0
  %351 = vmatprep.subr.bf16.mxu0 0
  %352 = vmatpush1.bf16.msra.mxu0 0
  %353 = vmatprep.subr.bf16.mxu0 0
  %354 = vmatpush1.bf16.msra.mxu0 0
  %355 = vmatprep.subr.bf16.mxu0 0
  %356 = vmatpush1.bf16.msra.mxu0 0
  %357 = vmatprep.subr.bf16.mxu0 0
  %358 = vmatpush1.bf16.msra.mxu0 0
  %359 = vmatprep.subr.bf16.mxu0 0
  %360 = vmatpush1.bf16.msra.mxu0 0
  %361 = vmatprep.subr.bf16.mxu0 0
  %362 = vmatpush1.bf16.msra.mxu0 0
  %363 = vmatprep.subr.bf16.mxu0 0
  %364 = vmatpush1.bf16.msra.mxu0 0
  %365 = vmatprep.subr.bf16.mxu0 0
  %366 = vmatpush1.bf16.msra.mxu0 0
  %367 = vmatprep.subr.bf16.mxu0 0
  %368 = vmatpush1.bf16.msra.mxu0 0
  %369 = vmatprep.mubr.bf16.mxu0 0
  %370 = vmatmul.mubr.bf16.gmra.mrb[0].mxu0 %v317
  %v371 = vpop.f32.mrb[0].mxu0
  %v372 = vadd.f32 %v207, %v371
  %v373 = vpop.f32.mrb[0].mxu0
  %v374 = vadd.f32 %v209, %v373
  %v375 = vpop.f32.mrb[0].mxu0
  %v376 = vpop.f32.mrb[0].mxu0
  %377 = vdwg.mxu0
  %378 = vmatprep.subr.bf16.mxu0 %v329
  %379 = vmatpush1.bf16.msra.mxu0 %v326
  %380 = vmatprep.subr.bf16.mxu0 0
  %381 = vmatpush1.bf16.msra.mxu0 0
  %382 = vmatprep.subr.bf16.mxu0 0
  %383 = vmatpush1.bf16.msra.mxu0 0
  %384 = vmatprep.subr.bf16.mxu0 0
  %385 = vmatpush1.bf16.msra.mxu0 0
  %386 = vmatprep.subr.bf16.mxu0 0
  %387 = vmatpush1.bf16.msra.mxu0 0
  %388 = vmatprep.subr.bf16.mxu0 0
  %389 = vmatpush1.bf16.msra.mxu0 0
  %390 = vmatprep.subr.bf16.mxu0 0
  %391 = vmatpush1.bf16.msra.mxu0 0
  %392 = vmatprep.subr.bf16.mxu0 0
  %393 = vmatpush1.bf16.msra.mxu0 0
  %394 = vmatprep.subr.bf16.mxu0 0
  %395 = vmatpush1.bf16.msra.mxu0 0
  %396 = vmatprep.subr.bf16.mxu0 0
  %397 = vmatpush1.bf16.msra.mxu0 0
  %398 = vmatprep.subr.bf16.mxu0 0
  %399 = vmatpush1.bf16.msra.mxu0 0
  %400 = vmatprep.subr.bf16.mxu0 0
  %401 = vmatpush1.bf16.msra.mxu0 0
  %402 = vmatprep.subr.bf16.mxu0 0
  %403 = vmatpush1.bf16.msra.mxu0 0
  %404 = vmatprep.subr.bf16.mxu0 0
  %405 = vmatpush1.bf16.msra.mxu0 0
  %406 = vmatprep.subr.bf16.mxu0 0
  %407 = vmatpush1.bf16.msra.mxu0 0
  %408 = vmatprep.subr.bf16.mxu0 0
  %409 = vmatpush1.bf16.msra.mxu0 0
  %410 = vmatprep.mubr.bf16.mxu0 0
  %411 = vmatmul.mubr.bf16.gmra.mrb[0].mxu0 %v317
  %v412 = vpop.f32.mrb[0].mxu0
  %v413 = vadd.f32 %v248, %v412
  %v414 = vpop.f32.mrb[0].mxu0
  %v415 = vadd.f32 %v250, %v414
  %v416 = vpop.f32.mrb[0].mxu0
  %v417 = vpop.f32.mrb[0].mxu0
  %418 = vdwg.mxu0
  %419 = vmatprep.subr.bf16.mxu0 %v335
  %420 = vmatpush1.bf16.msra.mxu0 %v332
  %421 = vmatprep.subr.bf16.mxu0 0
  %422 = vmatpush1.bf16.msra.mxu0 0
  %423 = vmatprep.subr.bf16.mxu0 0
  %424 = vmatpush1.bf16.msra.mxu0 0
  %425 = vmatprep.subr.bf16.mxu0 0
  %426 = vmatpush1.bf16.msra.mxu0 0
  %427 = vmatprep.subr.bf16.mxu0 0
  %428 = vmatpush1.bf16.msra.mxu0 0
  %429 = vmatprep.subr.bf16.mxu0 0
  %430 = vmatpush1.bf16.msra.mxu0 0
  %431 = vmatprep.subr.bf16.mxu0 0
  %432 = vmatpush1.bf16.msra.mxu0 0
  %433 = vmatprep.subr.bf16.mxu0 0
  %434 = vmatpush1.bf16.msra.mxu0 0
  %435 = vmatprep.subr.bf16.mxu0 0
  %436 = vmatpush1.bf16.msra.mxu0 0
  %437 = vmatprep.subr.bf16.mxu0 0
  %438 = vmatpush1.bf16.msra.mxu0 0
  %439 = vmatprep.subr.bf16.mxu0 0
  %440 = vmatpush1.bf16.msra.mxu0 0
  %441 = vmatprep.subr.bf16.mxu0 0
  %442 = vmatpush1.bf16.msra.mxu0 0
  %443 = vmatprep.subr.bf16.mxu0 0
  %444 = vmatpush1.bf16.msra.mxu0 0
  %445 = vmatprep.subr.bf16.mxu0 0
  %446 = vmatpush1.bf16.msra.mxu0 0
  %447 = vmatprep.subr.bf16.mxu0 0
  %448 = vmatpush1.bf16.msra.mxu0 0
  %449 = vmatprep.subr.bf16.mxu0 0
  %450 = vmatpush1.bf16.msra.mxu0 0
  %451 = vmatprep.mubr.bf16.mxu0 0
  %452 = vmatmul.mubr.bf16.gmra.mrb[0].mxu0 %v317
  %v453 = vpop.f32.mrb[0].mxu0
  %v454 = vadd.f32 %v289, %v453
  %v455 = vpop.f32.mrb[0].mxu0
  %v456 = vadd.f32 %v291, %v455
  %v457 = vpop.f32.mrb[0].mxu0
  %v458 = vpop.f32.mrb[0].mxu0
  %459 = vdwg.mxu0
  %460 = vrot.lane.b32.xlu0 %v87, 17
  %v461 = vpop.permute.xlu0 %460
  %462 = vrot.lane.b32.xlu0 %v100, 17
  %v463 = vpop.permute.xlu0 %462
  %464 = vrot.lane.b32.xlu0 %v108, 17
  %v465 = vpop.permute.xlu0 %464
  %466 = vrot.lane.b32.xlu0 %v107, 17
  %v467 = vpop.permute.xlu0 %466
  %468 = vrot.lane.b32.xlu0 %v109, 17
  %v469 = vpop.permute.xlu0 %468
  %470 = vrot.lane.b32.xlu0 %v116, 17
  %v471 = vpop.permute.xlu0 %470
  %472 = vrot.lane.b32.xlu0 %v117, 17
  %v473 = vpop.permute.xlu0 %472
  %vm474 = vcmask 138240
  %v475 = vsel %vm474, %v461, %v463
  %v476 = vsel %vm474, %v463, %v465
  %v477 = vsel %vm474, %v465, %v467
  %v478 = vsel %vm474, %v467, %v469
  %v479 = vsel %vm474, %v469, %v471
  %v480 = vsel %vm474, %v471, %v473
  %v482 = vsel %vm149, %v120, 0
  %v485 = vsel %vm153, %v475, 0
  %v488 = vsel %vm153, %v476, 0
  %v491 = vsel %vm153, %v477, 0
  %v494 = vsel %vm153, %v478, 0
  %v497 = vsel %vm153, %v479, 0
  %v500 = vsel %vm153, %v480, 0
  %502 = vmatprep.subr.bf16.mxu0 %v488
  %503 = vmatpush1.bf16.msra.mxu0 %v485
  %504 = vmatprep.subr.bf16.mxu0 0
  %505 = vmatpush1.bf16.msra.mxu0 0
  %506 = vmatprep.subr.bf16.mxu0 0
  %507 = vmatpush1.bf16.msra.mxu0 0
  %508 = vmatprep.subr.bf16.mxu0 0
  %509 = vmatpush1.bf16.msra.mxu0 0
  %510 = vmatprep.subr.bf16.mxu0 0
  %511 = vmatpush1.bf16.msra.mxu0 0
  %512 = vmatprep.subr.bf16.mxu0 0
  %513 = vmatpush1.bf16.msra.mxu0 0
  %514 = vmatprep.subr.bf16.mxu0 0
  %515 = vmatpush1.bf16.msra.mxu0 0
  %516 = vmatprep.subr.bf16.mxu0 0
  %517 = vmatpush1.bf16.msra.mxu0 0
  %518 = vmatprep.subr.bf16.mxu0 0
  %519 = vmatpush1.bf16.msra.mxu0 0
  %520 = vmatprep.subr.bf16.mxu0 0
  %521 = vmatpush1.bf16.msra.mxu0 0
  %522 = vmatprep.subr.bf16.mxu0 0
  %523 = vmatpush1.bf16.msra.mxu0 0
  %524 = vmatprep.subr.bf16.mxu0 0
  %525 = vmatpush1.bf16.msra.mxu0 0
  %526 = vmatprep.subr.bf16.mxu0 0
  %527 = vmatpush1.bf16.msra.mxu0 0
  %528 = vmatprep.subr.bf16.mxu0 0
  %529 = vmatpush1.bf16.msra.mxu0 0
  %530 = vmatprep.subr.bf16.mxu0 0
  %531 = vmatpush1.bf16.msra.mxu0 0
  %532 = vmatprep.subr.bf16.mxu0 0
  %533 = vmatpush1.bf16.msra.mxu0 0
  %534 = vmatprep.mubr.bf16.mxu0 0
  %535 = vmatmul.mubr.bf16.gmra.mrb[0].mxu0 %v482
  %v536 = vpop.f32.mrb[0].mxu0
  %v537 = vadd.f32 0.0, %v536
  %v538 = vpop.f32.mrb[0].mxu0
  %v539 = vadd.f32 0.0, %v538
  %v540 = vpop.f32.mrb[0].mxu0
  %v541 = vpop.f32.mrb[0].mxu0
  %542 = vdwg.mxu0
  %543 = vmatprep.subr.bf16.mxu0 %v494
  %544 = vmatpush1.bf16.msra.mxu0 %v491
  %545 = vmatprep.subr.bf16.mxu0 0
  %546 = vmatpush1.bf16.msra.mxu0 0
  %547 = vmatprep.subr.bf16.mxu0 0
  %548 = vmatpush1.bf16.msra.mxu0 0
  %549 = vmatprep.subr.bf16.mxu0 0
  %550 = vmatpush1.bf16.msra.mxu0 0
  %551 = vmatprep.subr.bf16.mxu0 0
  %552 = vmatpush1.bf16.msra.mxu0 0
  %553 = vmatprep.subr.bf16.mxu0 0
  %554 = vmatpush1.bf16.msra.mxu0 0
  %555 = vmatprep.subr.bf16.mxu0 0
  %556 = vmatpush1.bf16.msra.mxu0 0
  %557 = vmatprep.subr.bf16.mxu0 0
  %558 = vmatpush1.bf16.msra.mxu0 0
  %559 = vmatprep.subr.bf16.mxu0 0
  %560 = vmatpush1.bf16.msra.mxu0 0
  %561 = vmatprep.subr.bf16.mxu0 0
  %562 = vmatpush1.bf16.msra.mxu0 0
  %563 = vmatprep.subr.bf16.mxu0 0
  %564 = vmatpush1.bf16.msra.mxu0 0
  %565 = vmatprep.subr.bf16.mxu0 0
  %566 = vmatpush1.bf16.msra.mxu0 0
  %567 = vmatprep.subr.bf16.mxu0 0
  %568 = vmatpush1.bf16.msra.mxu0 0
  %569 = vmatprep.subr.bf16.mxu0 0
  %570 = vmatpush1.bf16.msra.mxu0 0
  %571 = vmatprep.subr.bf16.mxu0 0
  %572 = vmatpush1.bf16.msra.mxu0 0
  %573 = vmatprep.subr.bf16.mxu0 0
  %574 = vmatpush1.bf16.msra.mxu0 0
  %575 = vmatprep.mubr.bf16.mxu0 0
  %576 = vmatmul.mubr.bf16.gmra.mrb[0].mxu0 %v482
  %v577 = vpop.f32.mrb[0].mxu0
  %v578 = vadd.f32 0.0, %v577
  %v579 = vpop.f32.mrb[0].mxu0
  %v580 = vadd.f32 0.0, %v579
  %v581 = vpop.f32.mrb[0].mxu0
  %v582 = vpop.f32.mrb[0].mxu0
  %583 = vdwg.mxu0
  %584 = vmatprep.subr.bf16.mxu0 %v500
  %585 = vmatpush1.bf16.msra.mxu0 %v497
  %586 = vmatprep.subr.bf16.mxu0 0
  %587 = vmatpush1.bf16.msra.mxu0 0
  %588 = vmatprep.subr.bf16.mxu0 0
  %589 = vmatpush1.bf16.msra.mxu0 0
  %590 = vmatprep.subr.bf16.mxu0 0
  %591 = vmatpush1.bf16.msra.mxu0 0
  %592 = vmatprep.subr.bf16.mxu0 0
  %593 = vmatpush1.bf16.msra.mxu0 0
  %594 = vmatprep.subr.bf16.mxu0 0
  %595 = vmatpush1.bf16.msra.mxu0 0
  %596 = vmatprep.subr.bf16.mxu0 0
  %597 = vmatpush1.bf16.msra.mxu0 0
  %598 = vmatprep.subr.bf16.mxu0 0
  %599 = vmatpush1.bf16.msra.mxu0 0
  %600 = vmatprep.subr.bf16.mxu0 0
  %601 = vmatpush1.bf16.msra.mxu0 0
  %602 = vmatprep.subr.bf16.mxu0 0
  %603 = vmatpush1.bf16.msra.mxu0 0
  %604 = vmatprep.subr.bf16.mxu0 0
  %605 = vmatpush1.bf16.msra.mxu0 0
  %606 = vmatprep.subr.bf16.mxu0 0
  %607 = vmatpush1.bf16.msra.mxu0 0
  %608 = vmatprep.subr.bf16.mxu0 0
  %609 = vmatpush1.bf16.msra.mxu0 0
  %610 = vmatprep.subr.bf16.mxu0 0
  %611 = vmatpush1.bf16.msra.mxu0 0
  %612 = vmatprep.subr.bf16.mxu0 0
  %613 = vmatpush1.bf16.msra.mxu0 0
  %614 = vmatprep.subr.bf16.mxu0 0
  %615 = vmatpush1.bf16.msra.mxu0 0
  %616 = vmatprep.mubr.bf16.mxu0 0
  %617 = vmatmul.mubr.bf16.gmra.mrb[0].mxu0 %v482
  %v618 = vpop.f32.mrb[0].mxu0
  %v619 = vadd.f32 0.0, %v618
  %v620 = vpop.f32.mrb[0].mxu0
  %v621 = vadd.f32 0.0, %v620
  %v622 = vpop.f32.mrb[0].mxu0
  %v623 = vpop.f32.mrb[0].mxu0
  %624 = vdwg.mxu0
  %v625 = vadd.f32 %v372, %v537
  %v626 = vadd.f32 %v374, %v539
  %v627 = vadd.f32 %v413, %v578
  %v628 = vadd.f32 %v415, %v580
  %v629 = vadd.f32 %v454, %v619
  %v630 = vadd.f32 %v456, %v621
  %631 = vrot.lane.b32.xlu0 %v87, 1
  %v632 = vpop.permute.xlu0 %631
  %633 = vrot.lane.b32.xlu0 %v100, 1
  %v634 = vpop.permute.xlu0 %633
  %635 = vrot.lane.b32.xlu0 %v108, 1
  %v636 = vpop.permute.xlu0 %635
  %637 = vrot.lane.b32.xlu0 %v107, 1
  %v638 = vpop.permute.xlu0 %637
  %639 = vrot.lane.b32.xlu0 %v109, 1
  %v640 = vpop.permute.xlu0 %639
  %641 = vrot.lane.b32.xlu0 %v116, 1
  %v642 = vpop.permute.xlu0 %641
  %643 = vrot.lane.b32.xlu0 %v117, 1
  %v644 = vpop.permute.xlu0 %643
  %vm645 = vcmask 7168
  %v646 = vsel %vm645, %v632, %v634
  %v647 = vsel %vm645, %v634, %v636
  %v648 = vsel %vm645, %v636, %v638
  %v649 = vsel %vm645, %v638, %v640
  %v650 = vsel %vm645, %v640, %v642
  %v651 = vsel %vm645, %v642, %v644
  %v653 = vsel %vm149, %v121, 0
  %v656 = vsel %vm153, %v646, 0
  %v659 = vsel %vm153, %v647, 0
  %v662 = vsel %vm153, %v648, 0
  %v665 = vsel %vm153, %v649, 0
  %v668 = vsel %vm153, %v650, 0
  %v671 = vsel %vm153, %v651, 0
  %673 = vmatprep.subr.bf16.mxu0 %v659
  %674 = vmatpush1.bf16.msra.mxu0 %v656
  %675 = vmatprep.subr.bf16.mxu0 0
  %676 = vmatpush1.bf16.msra.mxu0 0
  %677 = vmatprep.subr.bf16.mxu0 0
  %678 = vmatpush1.bf16.msra.mxu0 0
  %679 = vmatprep.subr.bf16.mxu0 0
  %680 = vmatpush1.bf16.msra.mxu0 0
  %681 = vmatprep.subr.bf16.mxu0 0
  %682 = vmatpush1.bf16.msra.mxu0 0
  %683 = vmatprep.subr.bf16.mxu0 0
  %684 = vmatpush1.bf16.msra.mxu0 0
  %685 = vmatprep.subr.bf16.mxu0 0
  %686 = vmatpush1.bf16.msra.mxu0 0
  %687 = vmatprep.subr.bf16.mxu0 0
  %688 = vmatpush1.bf16.msra.mxu0 0
  %689 = vmatprep.subr.bf16.mxu0 0
  %690 = vmatpush1.bf16.msra.mxu0 0
  %691 = vmatprep.subr.bf16.mxu0 0
  %692 = vmatpush1.bf16.msra.mxu0 0
  %693 = vmatprep.subr.bf16.mxu0 0
  %694 = vmatpush1.bf16.msra.mxu0 0
  %695 = vmatprep.subr.bf16.mxu0 0
  %696 = vmatpush1.bf16.msra.mxu0 0
  %697 = vmatprep.subr.bf16.mxu0 0
  %698 = vmatpush1.bf16.msra.mxu0 0
  %699 = vmatprep.subr.bf16.mxu0 0
  %700 = vmatpush1.bf16.msra.mxu0 0
  %701 = vmatprep.subr.bf16.mxu0 0
  %702 = vmatpush1.bf16.msra.mxu0 0
  %703 = vmatprep.subr.bf16.mxu0 0
  %704 = vmatpush1.bf16.msra.mxu0 0
  %705 = vmatprep.mubr.bf16.mxu0 0
  %706 = vmatmul.mubr.bf16.gmra.mrb[0].mxu0 %v653
  %v707 = vpop.f32.mrb[0].mxu0
  %v708 = vadd.f32 0.0, %v707
  %v709 = vpop.f32.mrb[0].mxu0
  %v710 = vadd.f32 0.0, %v709
  %v711 = vpop.f32.mrb[0].mxu0
  %v712 = vpop.f32.mrb[0].mxu0
  %713 = vdwg.mxu0
  %714 = vmatprep.subr.bf16.mxu0 %v665
  %715 = vmatpush1.bf16.msra.mxu0 %v662
  %716 = vmatprep.subr.bf16.mxu0 0
  %717 = vmatpush1.bf16.msra.mxu0 0
  %718 = vmatprep.subr.bf16.mxu0 0
  %719 = vmatpush1.bf16.msra.mxu0 0
  %720 = vmatprep.subr.bf16.mxu0 0
  %721 = vmatpush1.bf16.msra.mxu0 0
  %722 = vmatprep.subr.bf16.mxu0 0
  %723 = vmatpush1.bf16.msra.mxu0 0
  %724 = vmatprep.subr.bf16.mxu0 0
  %725 = vmatpush1.bf16.msra.mxu0 0
  %726 = vmatprep.subr.bf16.mxu0 0
  %727 = vmatpush1.bf16.msra.mxu0 0
  %728 = vmatprep.subr.bf16.mxu0 0
  %729 = vmatpush1.bf16.msra.mxu0 0
  %730 = vmatprep.subr.bf16.mxu0 0
  %731 = vmatpush1.bf16.msra.mxu0 0
  %732 = vmatprep.subr.bf16.mxu0 0
  %733 = vmatpush1.bf16.msra.mxu0 0
  %734 = vmatprep.subr.bf16.mxu0 0
  %735 = vmatpush1.bf16.msra.mxu0 0
  %736 = vmatprep.subr.bf16.mxu0 0
  %737 = vmatpush1.bf16.msra.mxu0 0
  %738 = vmatprep.subr.bf16.mxu0 0
  %739 = vmatpush1.bf16.msra.mxu0 0
  %740 = vmatprep.subr.bf16.mxu0 0
  %741 = vmatpush1.bf16.msra.mxu0 0
  %742 = vmatprep.subr.bf16.mxu0 0
  %743 = vmatpush1.bf16.msra.mxu0 0
  %744 = vmatprep.subr.bf16.mxu0 0
  %745 = vmatpush1.bf16.msra.mxu0 0
  %746 = vmatprep.mubr.bf16.mxu0 0
  %747 = vmatmul.mubr.bf16.gmra.mrb[0].mxu0 %v653
  %v748 = vpop.f32.mrb[0].mxu0
  %v749 = vadd.f32 0.0, %v748
  %v750 = vpop.f32.mrb[0].mxu0
  %v751 = vadd.f32 0.0, %v750
  %v752 = vpop.f32.mrb[0].mxu0
  %v753 = vpop.f32.mrb[0].mxu0
  %754 = vdwg.mxu0
  %755 = vmatprep.subr.bf16.mxu0 %v671
  %756 = vmatpush1.bf16.msra.mxu0 %v668
  %757 = vmatprep.subr.bf16.mxu0 0
  %758 = vmatpush1.bf16.msra.mxu0 0
  %759 = vmatprep.subr.bf16.mxu0 0
  %760 = vmatpush1.bf16.msra.mxu0 0
  %761 = vmatprep.subr.bf16.mxu0 0
  %762 = vmatpush1.bf16.msra.mxu0 0
  %763 = vmatprep.subr.bf16.mxu0 0
  %764 = vmatpush1.bf16.msra.mxu0 0
  %765 = vmatprep.subr.bf16.mxu0 0
  %766 = vmatpush1.bf16.msra.mxu0 0
  %767 = vmatprep.subr.bf16.mxu0 0
  %768 = vmatpush1.bf16.msra.mxu0 0
  %769 = vmatprep.subr.bf16.mxu0 0
  %770 = vmatpush1.bf16.msra.mxu0 0
  %771 = vmatprep.subr.bf16.mxu0 0
  %772 = vmatpush1.bf16.msra.mxu0 0
  %773 = vmatprep.subr.bf16.mxu0 0
  %774 = vmatpush1.bf16.msra.mxu0 0
  %775 = vmatprep.subr.bf16.mxu0 0
  %776 = vmatpush1.bf16.msra.mxu0 0
  %777 = vmatprep.subr.bf16.mxu0 0
  %778 = vmatpush1.bf16.msra.mxu0 0
  %779 = vmatprep.subr.bf16.mxu0 0
  %780 = vmatpush1.bf16.msra.mxu0 0
  %781 = vmatprep.subr.bf16.mxu0 0
  %782 = vmatpush1.bf16.msra.mxu0 0
  %783 = vmatprep.subr.bf16.mxu0 0
  %784 = vmatpush1.bf16.msra.mxu0 0
  %785 = vmatprep.subr.bf16.mxu0 0
  %786 = vmatpush1.bf16.msra.mxu0 0
  %787 = vmatprep.mubr.bf16.mxu0 0
  %788 = vmatmul.mubr.bf16.gmra.mrb[0].mxu0 %v653
  %v789 = vpop.f32.mrb[0].mxu0
  %v790 = vadd.f32 0.0, %v789
  %v791 = vpop.f32.mrb[0].mxu0
  %v792 = vadd.f32 0.0, %v791
  %v793 = vpop.f32.mrb[0].mxu0
  %v794 = vpop.f32.mrb[0].mxu0
  %795 = vdwg.mxu0
  %v796 = vadd.f32 %v625, %v708
  %v797 = vadd.f32 %v626, %v710
  %v798 = vadd.f32 %v627, %v749
  %v799 = vadd.f32 %v628, %v751
  %v800 = vadd.f32 %v629, %v790
  %v801 = vadd.f32 %v630, %v792
  %v803 = vsel %vm149, %v122, 0
  %v806 = vsel %vm153, %v100, 0
  %v809 = vsel %vm153, %v108, 0
  %v812 = vsel %vm153, %v107, 0
  %v815 = vsel %vm153, %v109, 0
  %v818 = vsel %vm153, %v116, 0
  %v821 = vsel %vm153, %v117, 0
  %823 = vmatprep.subr.bf16.mxu0 %v809
  %824 = vmatpush1.bf16.msra.mxu0 %v806
  %825 = vmatprep.subr.bf16.mxu0 0
  %826 = vmatpush1.bf16.msra.mxu0 0
  %827 = vmatprep.subr.bf16.mxu0 0
  %828 = vmatpush1.bf16.msra.mxu0 0
  %829 = vmatprep.subr.bf16.mxu0 0
  %830 = vmatpush1.bf16.msra.mxu0 0
  %831 = vmatprep.subr.bf16.mxu0 0
  %832 = vmatpush1.bf16.msra.mxu0 0
  %833 = vmatprep.subr.bf16.mxu0 0
  %834 = vmatpush1.bf16.msra.mxu0 0
  %835 = vmatprep.subr.bf16.mxu0 0
  %836 = vmatpush1.bf16.msra.mxu0 0
  %837 = vmatprep.subr.bf16.mxu0 0
  %838 = vmatpush1.bf16.msra.mxu0 0
  %839 = vmatprep.subr.bf16.mxu0 0
  %840 = vmatpush1.bf16.msra.mxu0 0
  %841 = vmatprep.subr.bf16.mxu0 0
  %842 = vmatpush1.bf16.msra.mxu0 0
  %843 = vmatprep.subr.bf16.mxu0 0
  %844 = vmatpush1.bf16.msra.mxu0 0
  %845 = vmatprep.subr.bf16.mxu0 0
  %846 = vmatpush1.bf16.msra.mxu0 0
  %847 = vmatprep.subr.bf16.mxu0 0
  %848 = vmatpush1.bf16.msra.mxu0 0
  %849 = vmatprep.subr.bf16.mxu0 0
  %850 = vmatpush1.bf16.msra.mxu0 0
  %851 = vmatprep.subr.bf16.mxu0 0
  %852 = vmatpush1.bf16.msra.mxu0 0
  %853 = vmatprep.subr.bf16.mxu0 0
  %854 = vmatpush1.bf16.msra.mxu0 0
  %855 = vmatprep.mubr.bf16.mxu0 0
  %856 = vmatmul.mubr.bf16.gmra.mrb[0].mxu0 %v803
  %v857 = vpop.f32.mrb[0].mxu0
  %v858 = vadd.f32 0.0, %v857
  %v859 = vpop.f32.mrb[0].mxu0
  %v860 = vadd.f32 0.0, %v859
  %v861 = vpop.f32.mrb[0].mxu0
  %v862 = vpop.f32.mrb[0].mxu0
  %863 = vdwg.mxu0
  %864 = vmatprep.subr.bf16.mxu0 %v815
  %865 = vmatpush1.bf16.msra.mxu0 %v812
  %866 = vmatprep.subr.bf16.mxu0 0
  %867 = vmatpush1.bf16.msra.mxu0 0
  %868 = vmatprep.subr.bf16.mxu0 0
  %869 = vmatpush1.bf16.msra.mxu0 0
  %870 = vmatprep.subr.bf16.mxu0 0
  %871 = vmatpush1.bf16.msra.mxu0 0
  %872 = vmatprep.subr.bf16.mxu0 0
  %873 = vmatpush1.bf16.msra.mxu0 0
  %874 = vmatprep.subr.bf16.mxu0 0
  %875 = vmatpush1.bf16.msra.mxu0 0
  %876 = vmatprep.subr.bf16.mxu0 0
  %877 = vmatpush1.bf16.msra.mxu0 0
  %878 = vmatprep.subr.bf16.mxu0 0
  %879 = vmatpush1.bf16.msra.mxu0 0
  %880 = vmatprep.subr.bf16.mxu0 0
  %881 = vmatpush1.bf16.msra.mxu0 0
  %882 = vmatprep.subr.bf16.mxu0 0
  %883 = vmatpush1.bf16.msra.mxu0 0
  %884 = vmatprep.subr.bf16.mxu0 0
  %885 = vmatpush1.bf16.msra.mxu0 0
  %886 = vmatprep.subr.bf16.mxu0 0
  %887 = vmatpush1.bf16.msra.mxu0 0
  %888 = vmatprep.subr.bf16.mxu0 0
  %889 = vmatpush1.bf16.msra.mxu0 0
  %890 = vmatprep.subr.bf16.mxu0 0
  %891 = vmatpush1.bf16.msra.mxu0 0
  %892 = vmatprep.subr.bf16.mxu0 0
  %893 = vmatpush1.bf16.msra.mxu0 0
  %894 = vmatprep.subr.bf16.mxu0 0
  %895 = vmatpush1.bf16.msra.mxu0 0
  %896 = vmatprep.mubr.bf16.mxu0 0
  %897 = vmatmul.mubr.bf16.gmra.mrb[0].mxu0 %v803
  %v898 = vpop.f32.mrb[0].mxu0
  %v899 = vadd.f32 0.0, %v898
  %v900 = vpop.f32.mrb[0].mxu0
  %v901 = vadd.f32 0.0, %v900
  %v902 = vpop.f32.mrb[0].mxu0
  %v903 = vpop.f32.mrb[0].mxu0
  %904 = vdwg.mxu0
  %905 = vmatprep.subr.bf16.mxu0 %v821
  %906 = vmatpush1.bf16.msra.mxu0 %v818
  %907 = vmatprep.subr.bf16.mxu0 0
  %908 = vmatpush1.bf16.msra.mxu0 0
  %909 = vmatprep.subr.bf16.mxu0 0
  %910 = vmatpush1.bf16.msra.mxu0 0
  %911 = vmatprep.subr.bf16.mxu0 0
  %912 = vmatpush1.bf16.msra.mxu0 0
  %913 = vmatprep.subr.bf16.mxu0 0
  %914 = vmatpush1.bf16.msra.mxu0 0
  %915 = vmatprep.subr.bf16.mxu0 0
  %916 = vmatpush1.bf16.msra.mxu0 0
  %917 = vmatprep.subr.bf16.mxu0 0
  %918 = vmatpush1.bf16.msra.mxu0 0
  %919 = vmatprep.subr.bf16.mxu0 0
  %920 = vmatpush1.bf16.msra.mxu0 0
  %921 = vmatprep.subr.bf16.mxu0 0
  %922 = vmatpush1.bf16.msra.mxu0 0
  %923 = vmatprep.subr.bf16.mxu0 0
  %924 = vmatpush1.bf16.msra.mxu0 0
  %925 = vmatprep.subr.bf16.mxu0 0
  %926 = vmatpush1.bf16.msra.mxu0 0
  %927 = vmatprep.subr.bf16.mxu0 0
  %928 = vmatpush1.bf16.msra.mxu0 0
  %929 = vmatprep.subr.bf16.mxu0 0
  %930 = vmatpush1.bf16.msra.mxu0 0
  %931 = vmatprep.subr.bf16.mxu0 0
  %932 = vmatpush1.bf16.msra.mxu0 0
  %933 = vmatprep.subr.bf16.mxu0 0
  %934 = vmatpush1.bf16.msra.mxu0 0
  %935 = vmatprep.subr.bf16.mxu0 0
  %936 = vmatpush1.bf16.msra.mxu0 0
  %937 = vmatprep.mubr.bf16.mxu0 0
  %938 = vmatmul.mubr.bf16.gmra.mrb[0].mxu0 %v803
  %v939 = vpop.f32.mrb[0].mxu0
  %v940 = vadd.f32 0.0, %v939
  %v941 = vpop.f32.mrb[0].mxu0
  %v942 = vadd.f32 0.0, %v941
  %v943 = vpop.f32.mrb[0].mxu0
  %v944 = vpop.f32.mrb[0].mxu0
  %945 = vdwg.mxu0
  %v946 = vadd.f32 %v796, %v858
  %v947 = vadd.f32 %v797, %v860
  %v948 = vadd.f32 %v798, %v899
  %v949 = vadd.f32 %v799, %v901
  %v950 = vadd.f32 %v800, %v940
  %v951 = vadd.f32 %v801, %v942
  %953 = vrot.lane.b32.xlu0 %v100, 127
  %v954 = vpop.permute.xlu0 %953
  %955 = vrot.lane.b32.xlu0 %v108, 127
  %v956 = vpop.permute.xlu0 %955
  %957 = vrot.lane.b32.xlu0 %v107, 127
  %v958 = vpop.permute.xlu0 %957
  %959 = vrot.lane.b32.xlu0 %v109, 127
  %v960 = vpop.permute.xlu0 %959
  %961 = vrot.lane.b32.xlu0 %v116, 127
  %v962 = vpop.permute.xlu0 %961
  %963 = vrot.lane.b32.xlu0 %v117, 127
  %v964 = vpop.permute.xlu0 %963
  %965 = vrot.lane.b32.xlu0 %v90, 127
  %v966 = vpop.permute.xlu0 %965
  %vm967 = vcmask 1039360
  %v968 = vsel %vm967, %v954, %v956
  %v969 = vsel %vm967, %v956, %v958
  %v970 = vsel %vm967, %v958, %v960
  %v971 = vsel %vm967, %v960, %v962
  %v972 = vsel %vm967, %v962, %v964
  %v973 = vsel %vm967, %v964, %v966
  %v975 = vsel %vm149, %v123, 0
  %v978 = vsel %vm153, %v968, 0
  %v981 = vsel %vm153, %v969, 0
  %v984 = vsel %vm153, %v970, 0
  %v987 = vsel %vm153, %v971, 0
  %v990 = vsel %vm153, %v972, 0
  %v993 = vsel %vm153, %v973, 0
  %995 = vmatprep.subr.bf16.mxu0 %v981
  %996 = vmatpush1.bf16.msra.mxu0 %v978
  %997 = vmatprep.subr.bf16.mxu0 0
  %998 = vmatpush1.bf16.msra.mxu0 0
  %999 = vmatprep.subr.bf16.mxu0 0
  %1000 = vmatpush1.bf16.msra.mxu0 0
  %1001 = vmatprep.subr.bf16.mxu0 0
  %1002 = vmatpush1.bf16.msra.mxu0 0
  %1003 = vmatprep.subr.bf16.mxu0 0
  %1004 = vmatpush1.bf16.msra.mxu0 0
  %1005 = vmatprep.subr.bf16.mxu0 0
  %1006 = vmatpush1.bf16.msra.mxu0 0
  %1007 = vmatprep.subr.bf16.mxu0 0
  %1008 = vmatpush1.bf16.msra.mxu0 0
  %1009 = vmatprep.subr.bf16.mxu0 0
  %1010 = vmatpush1.bf16.msra.mxu0 0
  %1011 = vmatprep.subr.bf16.mxu0 0
  %1012 = vmatpush1.bf16.msra.mxu0 0
  %1013 = vmatprep.subr.bf16.mxu0 0
  %1014 = vmatpush1.bf16.msra.mxu0 0
  %1015 = vmatprep.subr.bf16.mxu0 0
  %1016 = vmatpush1.bf16.msra.mxu0 0
  %1017 = vmatprep.subr.bf16.mxu0 0
  %1018 = vmatpush1.bf16.msra.mxu0 0
  %1019 = vmatprep.subr.bf16.mxu0 0
  %1020 = vmatpush1.bf16.msra.mxu0 0
  %1021 = vmatprep.subr.bf16.mxu0 0
  %1022 = vmatpush1.bf16.msra.mxu0 0
  %1023 = vmatprep.subr.bf16.mxu0 0
  %1024 = vmatpush1.bf16.msra.mxu0 0
  %1025 = vmatprep.subr.bf16.mxu0 0
  %1026 = vmatpush1.bf16.msra.mxu0 0
  %1027 = vmatprep.mubr.bf16.mxu0 0
  %1028 = vmatmul.mubr.bf16.gmra.mrb[0].mxu0 %v975
  %v1029 = vpop.f32.mrb[0].mxu0
  %v1030 = vadd.f32 0.0, %v1029
  %v1031 = vpop.f32.mrb[0].mxu0
  %v1032 = vadd.f32 0.0, %v1031
  %v1033 = vpop.f32.mrb[0].mxu0
  %v1034 = vpop.f32.mrb[0].mxu0
  %1035 = vdwg.mxu0
  %1036 = vmatprep.subr.bf16.mxu0 %v987
  %1037 = vmatpush1.bf16.msra.mxu0 %v984
  %1038 = vmatprep.subr.bf16.mxu0 0
  %1039 = vmatpush1.bf16.msra.mxu0 0
  %1040 = vmatprep.subr.bf16.mxu0 0
  %1041 = vmatpush1.bf16.msra.mxu0 0
  %1042 = vmatprep.subr.bf16.mxu0 0
  %1043 = vmatpush1.bf16.msra.mxu0 0
  %1044 = vmatprep.subr.bf16.mxu0 0
  %1045 = vmatpush1.bf16.msra.mxu0 0
  %1046 = vmatprep.subr.bf16.mxu0 0
  %1047 = vmatpush1.bf16.msra.mxu0 0
  %1048 = vmatprep.subr.bf16.mxu0 0
  %1049 = vmatpush1.bf16.msra.mxu0 0
  %1050 = vmatprep.subr.bf16.mxu0 0
  %1051 = vmatpush1.bf16.msra.mxu0 0
  %1052 = vmatprep.subr.bf16.mxu0 0
  %1053 = vmatpush1.bf16.msra.mxu0 0
  %1054 = vmatprep.subr.bf16.mxu0 0
  %1055 = vmatpush1.bf16.msra.mxu0 0
  %1056 = vmatprep.subr.bf16.mxu0 0
  %1057 = vmatpush1.bf16.msra.mxu0 0
  %1058 = vmatprep.subr.bf16.mxu0 0
  %1059 = vmatpush1.bf16.msra.mxu0 0
  %1060 = vmatprep.subr.bf16.mxu0 0
  %1061 = vmatpush1.bf16.msra.mxu0 0
  %1062 = vmatprep.subr.bf16.mxu0 0
  %1063 = vmatpush1.bf16.msra.mxu0 0
  %1064 = vmatprep.subr.bf16.mxu0 0
  %1065 = vmatpush1.bf16.msra.mxu0 0
  %1066 = vmatprep.subr.bf16.mxu0 0
  %1067 = vmatpush1.bf16.msra.mxu0 0
  %1068 = vmatprep.mubr.bf16.mxu0 0
  %1069 = vmatmul.mubr.bf16.gmra.mrb[0].mxu0 %v975
  %v1070 = vpop.f32.mrb[0].mxu0
  %v1071 = vadd.f32 0.0, %v1070
  %v1072 = vpop.f32.mrb[0].mxu0
  %v1073 = vadd.f32 0.0, %v1072
  %v1074 = vpop.f32.mrb[0].mxu0
  %v1075 = vpop.f32.mrb[0].mxu0
  %1076 = vdwg.mxu0
  %1077 = vmatprep.subr.bf16.mxu0 %v993
  %1078 = vmatpush1.bf16.msra.mxu0 %v990
  %1079 = vmatprep.subr.bf16.mxu0 0
  %1080 = vmatpush1.bf16.msra.mxu0 0
  %1081 = vmatprep.subr.bf16.mxu0 0
  %1082 = vmatpush1.bf16.msra.mxu0 0
  %1083 = vmatprep.subr.bf16.mxu0 0
  %1084 = vmatpush1.bf16.msra.mxu0 0
  %1085 = vmatprep.subr.bf16.mxu0 0
  %1086 = vmatpush1.bf16.msra.mxu0 0
  %1087 = vmatprep.subr.bf16.mxu0 0
  %1088 = vmatpush1.bf16.msra.mxu0 0
  %1089 = vmatprep.subr.bf16.mxu0 0
  %1090 = vmatpush1.bf16.msra.mxu0 0
  %1091 = vmatprep.subr.bf16.mxu0 0
  %1092 = vmatpush1.bf16.msra.mxu0 0
  %1093 = vmatprep.subr.bf16.mxu0 0
  %1094 = vmatpush1.bf16.msra.mxu0 0
  %1095 = vmatprep.subr.bf16.mxu0 0
  %1096 = vmatpush1.bf16.msra.mxu0 0
  %1097 = vmatprep.subr.bf16.mxu0 0
  %1098 = vmatpush1.bf16.msra.mxu0 0
  %1099 = vmatprep.subr.bf16.mxu0 0
  %1100 = vmatpush1.bf16.msra.mxu0 0
  %1101 = vmatprep.subr.bf16.mxu0 0
  %1102 = vmatpush1.bf16.msra.mxu0 0
  %1103 = vmatprep.subr.bf16.mxu0 0
  %1104 = vmatpush1.bf16.msra.mxu0 0
  %1105 = vmatprep.subr.bf16.mxu0 0
  %1106 = vmatpush1.bf16.msra.mxu0 0
  %1107 = vmatprep.subr.bf16.mxu0 0
  %1108 = vmatpush1.bf16.msra.mxu0 0
  %1109 = vmatprep.mubr.bf16.mxu0 0
  %1110 = vmatmul.mubr.bf16.gmra.mrb[0].mxu0 %v975
  %v1111 = vpop.f32.mrb[0].mxu0
  %v1112 = vadd.f32 0.0, %v1111
  %v1113 = vpop.f32.mrb[0].mxu0
  %v1114 = vadd.f32 0.0, %v1113
  %v1115 = vpop.f32.mrb[0].mxu0
  %v1116 = vpop.f32.mrb[0].mxu0
  %1117 = vdwg.mxu0
  %v1118 = vadd.f32 %v946, %v1030
  %v1119 = vadd.f32 %v947, %v1032
  %v1120 = vadd.f32 %v948, %v1071
  %v1121 = vadd.f32 %v949, %v1073
  %v1122 = vadd.f32 %v950, %v1112
  %v1123 = vadd.f32 %v951, %v1114
  %1124 = vrot.lane.b32.xlu0 %v100, 111
  %v1125 = vpop.permute.xlu0 %1124
  %1126 = vrot.lane.b32.xlu0 %v108, 111
  %v1127 = vpop.permute.xlu0 %1126
  %1128 = vrot.lane.b32.xlu0 %v107, 111
  %v1129 = vpop.permute.xlu0 %1128
  %1130 = vrot.lane.b32.xlu0 %v109, 111
  %v1131 = vpop.permute.xlu0 %1130
  %1132 = vrot.lane.b32.xlu0 %v116, 111
  %v1133 = vpop.permute.xlu0 %1132
  %1134 = vrot.lane.b32.xlu0 %v117, 111
  %v1135 = vpop.permute.xlu0 %1134
  %1136 = vrot.lane.b32.xlu0 %v90, 111
  %v1137 = vpop.permute.xlu0 %1136
  %vm1138 = vcmask 908288
  %v1139 = vsel %vm1138, %v1125, %v1127
  %v1140 = vsel %vm1138, %v1127, %v1129
  %v1141 = vsel %vm1138, %v1129, %v1131
  %v1142 = vsel %vm1138, %v1131, %v1133
  %v1143 = vsel %vm1138, %v1133, %v1135
  %v1144 = vsel %vm1138, %v1135, %v1137
  %v1146 = vsel %vm149, %v124, 0
  %v1149 = vsel %vm153, %v1139, 0
  %v1152 = vsel %vm153, %v1140, 0
  %v1155 = vsel %vm153, %v1141, 0
  %v1158 = vsel %vm153, %v1142, 0
  %v1161 = vsel %vm153, %v1143, 0
  %v1164 = vsel %vm153, %v1144, 0
  %1166 = vmatprep.subr.bf16.mxu0 %v1152
  %1167 = vmatpush1.bf16.msra.mxu0 %v1149
  %1168 = vmatprep.subr.bf16.mxu0 0
  %1169 = vmatpush1.bf16.msra.mxu0 0
  %1170 = vmatprep.subr.bf16.mxu0 0
  %1171 = vmatpush1.bf16.msra.mxu0 0
  %1172 = vmatprep.subr.bf16.mxu0 0
  %1173 = vmatpush1.bf16.msra.mxu0 0
  %1174 = vmatprep.subr.bf16.mxu0 0
  %1175 = vmatpush1.bf16.msra.mxu0 0
  %1176 = vmatprep.subr.bf16.mxu0 0
  %1177 = vmatpush1.bf16.msra.mxu0 0
  %1178 = vmatprep.subr.bf16.mxu0 0
  %1179 = vmatpush1.bf16.msra.mxu0 0
  %1180 = vmatprep.subr.bf16.mxu0 0
  %1181 = vmatpush1.bf16.msra.mxu0 0
  %1182 = vmatprep.subr.bf16.mxu0 0
  %1183 = vmatpush1.bf16.msra.mxu0 0
  %1184 = vmatprep.subr.bf16.mxu0 0
  %1185 = vmatpush1.bf16.msra.mxu0 0
  %1186 = vmatprep.subr.bf16.mxu0 0
  %1187 = vmatpush1.bf16.msra.mxu0 0
  %1188 = vmatprep.subr.bf16.mxu0 0
  %1189 = vmatpush1.bf16.msra.mxu0 0
  %1190 = vmatprep.subr.bf16.mxu0 0
  %1191 = vmatpush1.bf16.msra.mxu0 0
  %1192 = vmatprep.subr.bf16.mxu0 0
  %1193 = vmatpush1.bf16.msra.mxu0 0
  %1194 = vmatprep.subr.bf16.mxu0 0
  %1195 = vmatpush1.bf16.msra.mxu0 0
  %1196 = vmatprep.subr.bf16.mxu0 0
  %1197 = vmatpush1.bf16.msra.mxu0 0
  %1198 = vmatprep.mubr.bf16.mxu0 0
  %1199 = vmatmul.mubr.bf16.gmra.mrb[0].mxu0 %v1146
  %v1200 = vpop.f32.mrb[0].mxu0
  %v1201 = vadd.f32 0.0, %v1200
  %v1202 = vpop.f32.mrb[0].mxu0
  %v1203 = vadd.f32 0.0, %v1202
  %v1204 = vpop.f32.mrb[0].mxu0
  %v1205 = vpop.f32.mrb[0].mxu0
  %1206 = vdwg.mxu0
  %1207 = vmatprep.subr.bf16.mxu0 %v1158
  %1208 = vmatpush1.bf16.msra.mxu0 %v1155
  %1209 = vmatprep.subr.bf16.mxu0 0
  %1210 = vmatpush1.bf16.msra.mxu0 0
  %1211 = vmatprep.subr.bf16.mxu0 0
  %1212 = vmatpush1.bf16.msra.mxu0 0
  %1213 = vmatprep.subr.bf16.mxu0 0
  %1214 = vmatpush1.bf16.msra.mxu0 0
  %1215 = vmatprep.subr.bf16.mxu0 0
  %1216 = vmatpush1.bf16.msra.mxu0 0
  %1217 = vmatprep.subr.bf16.mxu0 0
  %1218 = vmatpush1.bf16.msra.mxu0 0
  %1219 = vmatprep.subr.bf16.mxu0 0
  %1220 = vmatpush1.bf16.msra.mxu0 0
  %1221 = vmatprep.subr.bf16.mxu0 0
  %1222 = vmatpush1.bf16.msra.mxu0 0
  %1223 = vmatprep.subr.bf16.mxu0 0
  %1224 = vmatpush1.bf16.msra.mxu0 0
  %1225 = vmatprep.subr.bf16.mxu0 0
  %1226 = vmatpush1.bf16.msra.mxu0 0
  %1227 = vmatprep.subr.bf16.mxu0 0
  %1228 = vmatpush1.bf16.msra.mxu0 0
  %1229 = vmatprep.subr.bf16.mxu0 0
  %1230 = vmatpush1.bf16.msra.mxu0 0
  %1231 = vmatprep.subr.bf16.mxu0 0
  %1232 = vmatpush1.bf16.msra.mxu0 0
  %1233 = vmatprep.subr.bf16.mxu0 0
  %1234 = vmatpush1.bf16.msra.mxu0 0
  %1235 = vmatprep.subr.bf16.mxu0 0
  %1236 = vmatpush1.bf16.msra.mxu0 0
  %1237 = vmatprep.subr.bf16.mxu0 0
  %1238 = vmatpush1.bf16.msra.mxu0 0
  %1239 = vmatprep.mubr.bf16.mxu0 0
  %1240 = vmatmul.mubr.bf16.gmra.mrb[0].mxu0 %v1146
  %v1241 = vpop.f32.mrb[0].mxu0
  %v1242 = vadd.f32 0.0, %v1241
  %v1243 = vpop.f32.mrb[0].mxu0
  %v1244 = vadd.f32 0.0, %v1243
  %v1245 = vpop.f32.mrb[0].mxu0
  %v1246 = vpop.f32.mrb[0].mxu0
  %1247 = vdwg.mxu0
  %1248 = vmatprep.subr.bf16.mxu0 %v1164
  %1249 = vmatpush1.bf16.msra.mxu0 %v1161
  %1250 = vmatprep.subr.bf16.mxu0 0
  %1251 = vmatpush1.bf16.msra.mxu0 0
  %1252 = vmatprep.subr.bf16.mxu0 0
  %1253 = vmatpush1.bf16.msra.mxu0 0
  %1254 = vmatprep.subr.bf16.mxu0 0
  %1255 = vmatpush1.bf16.msra.mxu0 0
  %1256 = vmatprep.subr.bf16.mxu0 0
  %1257 = vmatpush1.bf16.msra.mxu0 0
  %1258 = vmatprep.subr.bf16.mxu0 0
  %1259 = vmatpush1.bf16.msra.mxu0 0
  %1260 = vmatprep.subr.bf16.mxu0 0
  %1261 = vmatpush1.bf16.msra.mxu0 0
  %1262 = vmatprep.subr.bf16.mxu0 0
  %1263 = vmatpush1.bf16.msra.mxu0 0
  %1264 = vmatprep.subr.bf16.mxu0 0
  %1265 = vmatpush1.bf16.msra.mxu0 0
  %1266 = vmatprep.subr.bf16.mxu0 0
  %1267 = vmatpush1.bf16.msra.mxu0 0
  %1268 = vmatprep.subr.bf16.mxu0 0
  %1269 = vmatpush1.bf16.msra.mxu0 0
  %1270 = vmatprep.subr.bf16.mxu0 0
  %1271 = vmatpush1.bf16.msra.mxu0 0
  %1272 = vmatprep.subr.bf16.mxu0 0
  %1273 = vmatpush1.bf16.msra.mxu0 0
  %1274 = vmatprep.subr.bf16.mxu0 0
  %1275 = vmatpush1.bf16.msra.mxu0 0
  %1276 = vmatprep.subr.bf16.mxu0 0
  %1277 = vmatpush1.bf16.msra.mxu0 0
  %1278 = vmatprep.subr.bf16.mxu0 0
  %1279 = vmatpush1.bf16.msra.mxu0 0
  %1280 = vmatprep.mubr.bf16.mxu0 0
  %1281 = vmatmul.mubr.bf16.gmra.mrb[0].mxu0 %v1146
  %v1282 = vpop.f32.mrb[0].mxu0
  %v1283 = vadd.f32 0.0, %v1282
  %v1284 = vpop.f32.mrb[0].mxu0
  %v1285 = vadd.f32 0.0, %v1284
  %v1286 = vpop.f32.mrb[0].mxu0
  %v1287 = vpop.f32.mrb[0].mxu0
  %1288 = vdwg.mxu0
  %v1289 = vadd.f32 %v1118, %v1201
  %v1290 = vadd.f32 %v1119, %v1203
  %v1291 = vadd.f32 %v1120, %v1242
  %v1292 = vadd.f32 %v1121, %v1244
  %v1293 = vadd.f32 %v1122, %v1283
  %v1294 = vadd.f32 %v1123, %v1285
  %1295 = vrot.lane.b32.xlu0 %v100, 110
  %v1296 = vpop.permute.xlu0 %1295
  %1297 = vrot.lane.b32.xlu0 %v108, 110
  %v1298 = vpop.permute.xlu0 %1297
  %1299 = vrot.lane.b32.xlu0 %v107, 110
  %v1300 = vpop.permute.xlu0 %1299
  %1301 = vrot.lane.b32.xlu0 %v109, 110
  %v1302 = vpop.permute.xlu0 %1301
  %1303 = vrot.lane.b32.xlu0 %v116, 110
  %v1304 = vpop.permute.xlu0 %1303
  %1305 = vrot.lane.b32.xlu0 %v117, 110
  %v1306 = vpop.permute.xlu0 %1305
  %1307 = vrot.lane.b32.xlu0 %v90, 110
  %v1308 = vpop.permute.xlu0 %1307
  %vm1309 = vcmask 900096
  %v1310 = vsel %vm1309, %v1296, %v1298
  %v1311 = vsel %vm1309, %v1298, %v1300
  %v1312 = vsel %vm1309, %v1300, %v1302
  %v1313 = vsel %vm1309, %v1302, %v1304
  %v1314 = vsel %vm1309, %v1304, %v1306
  %v1315 = vsel %vm1309, %v1306, %v1308
  %v1317 = vsel %vm149, %v125, 0
  %v1320 = vsel %vm153, %v1310, 0
  %v1323 = vsel %vm153, %v1311, 0
  %v1326 = vsel %vm153, %v1312, 0
  %v1329 = vsel %vm153, %v1313, 0
  %v1332 = vsel %vm153, %v1314, 0
  %v1335 = vsel %vm153, %v1315, 0
  %1337 = vmatprep.subr.bf16.mxu0 %v1323
  %1338 = vmatpush1.bf16.msra.mxu0 %v1320
  %1339 = vmatprep.subr.bf16.mxu0 0
  %1340 = vmatpush1.bf16.msra.mxu0 0
  %1341 = vmatprep.subr.bf16.mxu0 0
  %1342 = vmatpush1.bf16.msra.mxu0 0
  %1343 = vmatprep.subr.bf16.mxu0 0
  %1344 = vmatpush1.bf16.msra.mxu0 0
  %1345 = vmatprep.subr.bf16.mxu0 0
  %1346 = vmatpush1.bf16.msra.mxu0 0
  %1347 = vmatprep.subr.bf16.mxu0 0
  %1348 = vmatpush1.bf16.msra.mxu0 0
  %1349 = vmatprep.subr.bf16.mxu0 0
  %1350 = vmatpush1.bf16.msra.mxu0 0
  %1351 = vmatprep.subr.bf16.mxu0 0
  %1352 = vmatpush1.bf16.msra.mxu0 0
  %1353 = vmatprep.subr.bf16.mxu0 0
  %1354 = vmatpush1.bf16.msra.mxu0 0
  %1355 = vmatprep.subr.bf16.mxu0 0
  %1356 = vmatpush1.bf16.msra.mxu0 0
  %1357 = vmatprep.subr.bf16.mxu0 0
  %1358 = vmatpush1.bf16.msra.mxu0 0
  %1359 = vmatprep.subr.bf16.mxu0 0
  %1360 = vmatpush1.bf16.msra.mxu0 0
  %1361 = vmatprep.subr.bf16.mxu0 0
  %1362 = vmatpush1.bf16.msra.mxu0 0
  %1363 = vmatprep.subr.bf16.mxu0 0
  %1364 = vmatpush1.bf16.msra.mxu0 0
  %1365 = vmatprep.subr.bf16.mxu0 0
  %1366 = vmatpush1.bf16.msra.mxu0 0
  %1367 = vmatprep.subr.bf16.mxu0 0
  %1368 = vmatpush1.bf16.msra.mxu0 0
  %1369 = vmatprep.mubr.bf16.mxu0 0
  %1370 = vmatmul.mubr.bf16.gmra.mrb[0].mxu0 %v1317
  %v1371 = vpop.f32.mrb[0].mxu0
  %v1372 = vadd.f32 0.0, %v1371
  %v1373 = vpop.f32.mrb[0].mxu0
  %v1374 = vadd.f32 0.0, %v1373
  %v1375 = vpop.f32.mrb[0].mxu0
  %v1376 = vpop.f32.mrb[0].mxu0
  %1377 = vdwg.mxu0
  %1378 = vmatprep.subr.bf16.mxu0 %v1329
  %1379 = vmatpush1.bf16.msra.mxu0 %v1326
  %1380 = vmatprep.subr.bf16.mxu0 0
  %1381 = vmatpush1.bf16.msra.mxu0 0
  %1382 = vmatprep.subr.bf16.mxu0 0
  %1383 = vmatpush1.bf16.msra.mxu0 0
  %1384 = vmatprep.subr.bf16.mxu0 0
  %1385 = vmatpush1.bf16.msra.mxu0 0
  %1386 = vmatprep.subr.bf16.mxu0 0
  %1387 = vmatpush1.bf16.msra.mxu0 0
  %1388 = vmatprep.subr.bf16.mxu0 0
  %1389 = vmatpush1.bf16.msra.mxu0 0
  %1390 = vmatprep.subr.bf16.mxu0 0
  %1391 = vmatpush1.bf16.msra.mxu0 0
  %1392 = vmatprep.subr.bf16.mxu0 0
  %1393 = vmatpush1.bf16.msra.mxu0 0
  %1394 = vmatprep.subr.bf16.mxu0 0
  %1395 = vmatpush1.bf16.msra.mxu0 0
  %1396 = vmatprep.subr.bf16.mxu0 0
  %1397 = vmatpush1.bf16.msra.mxu0 0
  %1398 = vmatprep.subr.bf16.mxu0 0
  %1399 = vmatpush1.bf16.msra.mxu0 0
  %1400 = vmatprep.subr.bf16.mxu0 0
  %1401 = vmatpush1.bf16.msra.mxu0 0
  %1402 = vmatprep.subr.bf16.mxu0 0
  %1403 = vmatpush1.bf16.msra.mxu0 0
  %1404 = vmatprep.subr.bf16.mxu0 0
  %1405 = vmatpush1.bf16.msra.mxu0 0
  %1406 = vmatprep.subr.bf16.mxu0 0
  %1407 = vmatpush1.bf16.msra.mxu0 0
  %1408 = vmatprep.subr.bf16.mxu0 0
  %1409 = vmatpush1.bf16.msra.mxu0 0
  %1410 = vmatprep.mubr.bf16.mxu0 0
  %1411 = vmatmul.mubr.bf16.gmra.mrb[0].mxu0 %v1317
  %v1412 = vpop.f32.mrb[0].mxu0
  %v1413 = vadd.f32 0.0, %v1412
  %v1414 = vpop.f32.mrb[0].mxu0
  %v1415 = vadd.f32 0.0, %v1414
  %v1416 = vpop.f32.mrb[0].mxu0
  %v1417 = vpop.f32.mrb[0].mxu0
  %1418 = vdwg.mxu0
  %1419 = vmatprep.subr.bf16.mxu0 %v1335
  %1420 = vmatpush1.bf16.msra.mxu0 %v1332
  %1421 = vmatprep.subr.bf16.mxu0 0
  %1422 = vmatpush1.bf16.msra.mxu0 0
  %1423 = vmatprep.subr.bf16.mxu0 0
  %1424 = vmatpush1.bf16.msra.mxu0 0
  %1425 = vmatprep.subr.bf16.mxu0 0
  %1426 = vmatpush1.bf16.msra.mxu0 0
  %1427 = vmatprep.subr.bf16.mxu0 0
  %1428 = vmatpush1.bf16.msra.mxu0 0
  %1429 = vmatprep.subr.bf16.mxu0 0
  %1430 = vmatpush1.bf16.msra.mxu0 0
  %1431 = vmatprep.subr.bf16.mxu0 0
  %1432 = vmatpush1.bf16.msra.mxu0 0
  %1433 = vmatprep.subr.bf16.mxu0 0
  %1434 = vmatpush1.bf16.msra.mxu0 0
  %1435 = vmatprep.subr.bf16.mxu0 0
  %1436 = vmatpush1.bf16.msra.mxu0 0
  %1437 = vmatprep.subr.bf16.mxu0 0
  %1438 = vmatpush1.bf16.msra.mxu0 0
  %1439 = vmatprep.subr.bf16.mxu0 0
  %1440 = vmatpush1.bf16.msra.mxu0 0
  %1441 = vmatprep.subr.bf16.mxu0 0
  %1442 = vmatpush1.bf16.msra.mxu0 0
  %1443 = vmatprep.subr.bf16.mxu0 0
  %1444 = vmatpush1.bf16.msra.mxu0 0
  %1445 = vmatprep.subr.bf16.mxu0 0
  %1446 = vmatpush1.bf16.msra.mxu0 0
  %1447 = vmatprep.subr.bf16.mxu0 0
  %1448 = vmatpush1.bf16.msra.mxu0 0
  %1449 = vmatprep.subr.bf16.mxu0 0
  %1450 = vmatpush1.bf16.msra.mxu0 0
  %1451 = vmatprep.mubr.bf16.mxu0 0
  %1452 = vmatmul.mubr.bf16.gmra.mrb[0].mxu0 %v1317
  %v1453 = vpop.f32.mrb[0].mxu0
  %v1454 = vadd.f32 0.0, %v1453
  %v1455 = vpop.f32.mrb[0].mxu0
  %v1456 = vadd.f32 0.0, %v1455
  %v1457 = vpop.f32.mrb[0].mxu0
  %v1458 = vpop.f32.mrb[0].mxu0
  %1459 = vdwg.mxu0
  %v1460 = vadd.f32 %v1289, %v1372
  %v1461 = vadd.f32 %v1290, %v1374
  %v1462 = vadd.f32 %v1291, %v1413
  %v1463 = vadd.f32 %v1292, %v1415
  %v1464 = vadd.f32 %v1293, %v1454
  %v1465 = vadd.f32 %v1294, %v1456
  %1466 = vrot.lane.b32.xlu0 %v100, 109
  %v1467 = vpop.permute.xlu0 %1466
  %1468 = vrot.lane.b32.xlu0 %v108, 109
  %v1469 = vpop.permute.xlu0 %1468
  %1470 = vrot.lane.b32.xlu0 %v107, 109
  %v1471 = vpop.permute.xlu0 %1470
  %1472 = vrot.lane.b32.xlu0 %v109, 109
  %v1473 = vpop.permute.xlu0 %1472
  %1474 = vrot.lane.b32.xlu0 %v116, 109
  %v1475 = vpop.permute.xlu0 %1474
  %1476 = vrot.lane.b32.xlu0 %v117, 109
  %v1477 = vpop.permute.xlu0 %1476
  %1478 = vrot.lane.b32.xlu0 %v90, 109
  %v1479 = vpop.permute.xlu0 %1478
  %vm1480 = vcmask 891904
  %v1481 = vsel %vm1480, %v1467, %v1469
  %v1482 = vsel %vm1480, %v1469, %v1471
  %v1483 = vsel %vm1480, %v1471, %v1473
  %v1484 = vsel %vm1480, %v1473, %v1475
  %v1485 = vsel %vm1480, %v1475, %v1477
  %v1486 = vsel %vm1480, %v1477, %v1479
  %v1488 = vsel %vm149, %v126, 0
  %v1491 = vsel %vm153, %v1481, 0
  %v1494 = vsel %vm153, %v1482, 0
  %v1497 = vsel %vm153, %v1483, 0
  %v1500 = vsel %vm153, %v1484, 0
  %v1503 = vsel %vm153, %v1485, 0
  %v1506 = vsel %vm153, %v1486, 0
  %1508 = vmatprep.subr.bf16.mxu0 %v1494
  %1509 = vmatpush1.bf16.msra.mxu0 %v1491
  %1510 = vmatprep.subr.bf16.mxu0 0
  %1511 = vmatpush1.bf16.msra.mxu0 0
  %1512 = vmatprep.subr.bf16.mxu0 0
  %1513 = vmatpush1.bf16.msra.mxu0 0
  %1514 = vmatprep.subr.bf16.mxu0 0
  %1515 = vmatpush1.bf16.msra.mxu0 0
  %1516 = vmatprep.subr.bf16.mxu0 0
  %1517 = vmatpush1.bf16.msra.mxu0 0
  %1518 = vmatprep.subr.bf16.mxu0 0
  %1519 = vmatpush1.bf16.msra.mxu0 0
  %1520 = vmatprep.subr.bf16.mxu0 0
  %1521 = vmatpush1.bf16.msra.mxu0 0
  %1522 = vmatprep.subr.bf16.mxu0 0
  %1523 = vmatpush1.bf16.msra.mxu0 0
  %1524 = vmatprep.subr.bf16.mxu0 0
  %1525 = vmatpush1.bf16.msra.mxu0 0
  %1526 = vmatprep.subr.bf16.mxu0 0
  %1527 = vmatpush1.bf16.msra.mxu0 0
  %1528 = vmatprep.subr.bf16.mxu0 0
  %1529 = vmatpush1.bf16.msra.mxu0 0
  %1530 = vmatprep.subr.bf16.mxu0 0
  %1531 = vmatpush1.bf16.msra.mxu0 0
  %1532 = vmatprep.subr.bf16.mxu0 0
  %1533 = vmatpush1.bf16.msra.mxu0 0
  %1534 = vmatprep.subr.bf16.mxu0 0
  %1535 = vmatpush1.bf16.msra.mxu0 0
  %1536 = vmatprep.subr.bf16.mxu0 0
  %1537 = vmatpush1.bf16.msra.mxu0 0
  %1538 = vmatprep.subr.bf16.mxu0 0
  %1539 = vmatpush1.bf16.msra.mxu0 0
  %1540 = vmatprep.mubr.bf16.mxu0 0
  %1541 = vmatmul.mubr.bf16.gmra.mrb[0].mxu0 %v1488
  %v1542 = vpop.f32.mrb[0].mxu0
  %v1543 = vadd.f32 0.0, %v1542
  %v1544 = vpop.f32.mrb[0].mxu0
  %v1545 = vadd.f32 0.0, %v1544
  %v1546 = vpop.f32.mrb[0].mxu0
  %v1547 = vpop.f32.mrb[0].mxu0
  %1548 = vdwg.mxu0
  %1549 = vmatprep.subr.bf16.mxu0 %v1500
  %1550 = vmatpush1.bf16.msra.mxu0 %v1497
  %1551 = vmatprep.subr.bf16.mxu0 0
  %1552 = vmatpush1.bf16.msra.mxu0 0
  %1553 = vmatprep.subr.bf16.mxu0 0
  %1554 = vmatpush1.bf16.msra.mxu0 0
  %1555 = vmatprep.subr.bf16.mxu0 0
  %1556 = vmatpush1.bf16.msra.mxu0 0
  %1557 = vmatprep.subr.bf16.mxu0 0
  %1558 = vmatpush1.bf16.msra.mxu0 0
  %1559 = vmatprep.subr.bf16.mxu0 0
  %1560 = vmatpush1.bf16.msra.mxu0 0
  %1561 = vmatprep.subr.bf16.mxu0 0
  %1562 = vmatpush1.bf16.msra.mxu0 0
  %1563 = vmatprep.subr.bf16.mxu0 0
  %1564 = vmatpush1.bf16.msra.mxu0 0
  %1565 = vmatprep.subr.bf16.mxu0 0
  %1566 = vmatpush1.bf16.msra.mxu0 0
  %1567 = vmatprep.subr.bf16.mxu0 0
  %1568 = vmatpush1.bf16.msra.mxu0 0
  %1569 = vmatprep.subr.bf16.mxu0 0
  %1570 = vmatpush1.bf16.msra.mxu0 0
  %1571 = vmatprep.subr.bf16.mxu0 0
  %1572 = vmatpush1.bf16.msra.mxu0 0
  %1573 = vmatprep.subr.bf16.mxu0 0
  %1574 = vmatpush1.bf16.msra.mxu0 0
  %1575 = vmatprep.subr.bf16.mxu0 0
  %1576 = vmatpush1.bf16.msra.mxu0 0
  %1577 = vmatprep.subr.bf16.mxu0 0
  %1578 = vmatpush1.bf16.msra.mxu0 0
  %1579 = vmatprep.subr.bf16.mxu0 0
  %1580 = vmatpush1.bf16.msra.mxu0 0
  %1581 = vmatprep.mubr.bf16.mxu0 0
  %1582 = vmatmul.mubr.bf16.gmra.mrb[0].mxu0 %v1488
  %v1583 = vpop.f32.mrb[0].mxu0
  %v1584 = vadd.f32 0.0, %v1583
  %v1585 = vpop.f32.mrb[0].mxu0
  %v1586 = vadd.f32 0.0, %v1585
  %v1587 = vpop.f32.mrb[0].mxu0
  %v1588 = vpop.f32.mrb[0].mxu0
  %1589 = vdwg.mxu0
  %1590 = vmatprep.subr.bf16.mxu0 %v1506
  %1591 = vmatpush1.bf16.msra.mxu0 %v1503
  %1592 = vmatprep.subr.bf16.mxu0 0
  %1593 = vmatpush1.bf16.msra.mxu0 0
  %1594 = vmatprep.subr.bf16.mxu0 0
  %1595 = vmatpush1.bf16.msra.mxu0 0
  %1596 = vmatprep.subr.bf16.mxu0 0
  %1597 = vmatpush1.bf16.msra.mxu0 0
  %1598 = vmatprep.subr.bf16.mxu0 0
  %1599 = vmatpush1.bf16.msra.mxu0 0
  %1600 = vmatprep.subr.bf16.mxu0 0
  %1601 = vmatpush1.bf16.msra.mxu0 0
  %1602 = vmatprep.subr.bf16.mxu0 0
  %1603 = vmatpush1.bf16.msra.mxu0 0
  %1604 = vmatprep.subr.bf16.mxu0 0
  %1605 = vmatpush1.bf16.msra.mxu0 0
  %1606 = vmatprep.subr.bf16.mxu0 0
  %1607 = vmatpush1.bf16.msra.mxu0 0
  %1608 = vmatprep.subr.bf16.mxu0 0
  %1609 = vmatpush1.bf16.msra.mxu0 0
  %1610 = vmatprep.subr.bf16.mxu0 0
  %1611 = vmatpush1.bf16.msra.mxu0 0
  %1612 = vmatprep.subr.bf16.mxu0 0
  %1613 = vmatpush1.bf16.msra.mxu0 0
  %1614 = vmatprep.subr.bf16.mxu0 0
  %1615 = vmatpush1.bf16.msra.mxu0 0
  %1616 = vmatprep.subr.bf16.mxu0 0
  %1617 = vmatpush1.bf16.msra.mxu0 0
  %1618 = vmatprep.subr.bf16.mxu0 0
  %1619 = vmatpush1.bf16.msra.mxu0 0
  %1620 = vmatprep.subr.bf16.mxu0 0
  %1621 = vmatpush1.bf16.msra.mxu0 0
  %1622 = vmatprep.mubr.bf16.mxu0 0
  %1623 = vmatmul.mubr.bf16.gmra.mrb[0].mxu0 %v1488
  %v1624 = vpop.f32.mrb[0].mxu0
  %v1625 = vadd.f32 0.0, %v1624
  %v1626 = vpop.f32.mrb[0].mxu0
  %v1627 = vadd.f32 0.0, %v1626
  %v1628 = vpop.f32.mrb[0].mxu0
  %v1629 = vpop.f32.mrb[0].mxu0
  %1630 = vdwg.mxu0
  %v1631 = vadd.f32 %v1460, %v1543
  %v1632 = vadd.f32 %v1461, %v1545
  %v1633 = vadd.f32 %v1462, %v1584
  %v1634 = vadd.f32 %v1463, %v1586
  %v1635 = vadd.f32 %v1464, %v1625
  %v1636 = vadd.f32 %v1465, %v1627
  %v1637 = vpack.c.bf16 %v1631, %v1631
  %v1638 = vpack.c.bf16 %v1632, %v1632
  %v1639 = vpack.c.bf16 %v1633, %v1633
  %v1640 = vpack.c.bf16 %v1634, %v1634
  %v1641 = vpack.c.bf16 %v1635, %v1635
  %v1642 = vpack.c.bf16 %v1636, %v1636
  %v1649 = vunpack.c.l.b16 %v1637
  %v1650 = vunpack.c.l.b16 %v1638
  %v1651 = vunpack.c.l.b16 %v1639
  %v1652 = vunpack.c.l.b16 %v1640
  %v1653 = vunpack.c.l.b16 %v1641
  %v1654 = vunpack.c.l.b16 %v1642
  %v1655 = vpack.c.b16 %v1650, %v1649
  %v1656 = vpack.c.b16 %v1652, %v1651
  %v1657 = vpack.c.b16 %v1654, %v1653
  %1661 = vst [vmem:[%s5] sm:$0xff] %v1655
  %1662 = vst [vmem:[%s5 + $0x8] sm:$0xff] %v1656
  %1663 = vst [vmem:[%s5 + $0x10] sm:$0xff] %v1657
  %v1664 = vld [vmem:[%s3] sm:$0x3f]
  %v1666 = vlaneseq
  %v1667 = vshrl.u32 %v1666, 7
  %v1668 = vsub.s32 0, %v1667
  %v1669 = vrot.slane %v1664, %v1668
  %v1670 = vlaneseq
  %v1671 = vshrl.u32 %v1670, 7
  %v1672 = vsub.s32 1, %v1671
  %v1673 = vrot.slane %v1664, %v1672
  %v1674 = vlaneseq
  %v1675 = vshrl.u32 %v1674, 7
  %v1676 = vsub.s32 2, %v1675
  %v1677 = vrot.slane %v1664, %v1676
  %v1678 = vlaneseq
  %v1679 = vshrl.u32 %v1678, 7
  %v1680 = vsub.s32 3, %v1679
  %v1681 = vrot.slane %v1664, %v1680
  %v1682 = vlaneseq
  %v1683 = vshrl.u32 %v1682, 7
  %v1684 = vsub.s32 4, %v1683
  %v1685 = vrot.slane %v1664, %v1684
  %v1686 = vlaneseq
  %v1687 = vshrl.u32 %v1686, 7
  %v1688 = vsub.s32 5, %v1687
  %v1689 = vrot.slane %v1664, %v1688
  %v1696 = vmul.f32 %v1631, %v1669
  %v1697 = vmul.f32 %v1632, %v1673
  %v1698 = vmul.f32 %v1633, %v1677
  %v1699 = vmul.f32 %v1634, %v1681
  %v1700 = vmul.f32 %v1635, %v1685
  %v1701 = vmul.f32 %v1636, %v1689
  %v1702 = vadd.f32 %v1696, %v1697
  %v1703 = vadd.f32 %v1702, %v1698
  %v1704 = vadd.f32 %v1703, %v1699
  %v1705 = vadd.f32 %v1704, %v1700
  %v1706 = vadd.f32 %v1705, %v1701
  %1707 = vadd.xlane.f32.xlu0 %v1706
  %v1708 = vpop.xlane.xlu0 %1707
  %v1709 = vmul.f32 %v1696, %v1696
  %v1710 = vmul.f32 %v1697, %v1697
  %v1711 = vmul.f32 %v1698, %v1698
  %v1712 = vmul.f32 %v1699, %v1699
  %v1713 = vmul.f32 %v1700, %v1700
  %v1714 = vmul.f32 %v1701, %v1701
  %v1715 = vadd.f32 %v1709, %v1710
  %v1716 = vadd.f32 %v1715, %v1711
  %v1717 = vadd.f32 %v1716, %v1712
  %v1718 = vadd.f32 %v1717, %v1713
  %v1719 = vadd.f32 %v1718, %v1714
  %1720 = vadd.xlane.f32.xlu0 %v1719
  %v1721 = vpop.xlane.xlu0 %1720
  %vm1722 = vcmask 7168
  %v1723 = vsel %vm1722, %v1708, %v1721
  %vm1724 = vcmask 15360
  %1725 = vst.msk [vmem:[%s6] sm:$0xff] %vm1724, %v1723
  // Predicated region
  $region22: #{double_conv_forward.3} parent=0 // pred_check
    _
  $region23: #{double_conv_forward.3} parent=0 // pred_check_branch
    %1727 = sbr.rel (0) target = $region25
  $region24: #{double_conv_forward.3} parent=0 // pred_region
    _
  $region25: #{double_conv_forward.3} parent=0 // pred_fallthru
    _
  // Predicated region
  $region26: #{double_conv_forward.3} parent=0 // pred_check
    _
  $region27: #{double_conv_forward.3} parent=0 // pred_check_branch
    %1729 = sbr.rel (0) target = $region29
  $region28: #{double_conv_forward.3} parent=0 // pred_region
    _
  $region29: #{double_conv_forward.3} parent=0 // pred_fallthru
    _
  // Predicated region
  $region30: #{double_conv_forward.3} parent=0 // pred_check
    _
  $region31: #{double_conv_forward.3} parent=0 // pred_check_branch
    %1731 = sbr.rel (0) target = $region33
  $region32: #{double_conv_forward.3} parent=0 // pred_region
    _
  $region33: #{double_conv_forward.3} parent=0 // pred_fallthru
    _
  // Predicated region
  $region34: #{double_conv_forward.3} parent=0 // pred_check
    _
  $region35: #{double_conv_forward.3} parent=0 // pred_check_branch
    %1733 = sbr.rel (0) target = $region37
  $region36: #{double_conv_forward.3} parent=0 // pred_region
    _
  $region37: #{double_conv_forward.3} parent=0 // pred_fallthru
    _

// kernel: double_conv_forward.4
$region0: #{double_conv_forward.4}
  #allocation0 [shape = 'u32[]', space=smem, size = 0x4, offset = 0x4, fixed_abs, tag = 'smem constant byte address 0x4 - core index']
  #allocation1 [shape = 'u32[144,128]{1,0:T(1,128)}', space=vmem, size = 0x12000, scoped, tag = 'internal scratch']
  %s0 = inlined_call_operand.vmem [shape: bf16[8,768], index: 0, kind: input, shape index: {}, may-alias: {0,1,2}]
  %s1 = inlined_call_operand.vmem [shape: bf16[8,768], index: 1, kind: input, shape index: {}, may-alias: {0,1,2}]
  %s2 = inlined_call_operand.vmem [shape: bf16[8,768], index: 2, kind: input, shape index: {}, may-alias: {0,1,2}]
  %s3 = inlined_call_operand.vmem [shape: f32[1,768], index: 3, kind: input, shape index: {}, may-alias: {3,4,5}]
  %s4 = inlined_call_operand.vmem [shape: f32[1,768], index: 4, kind: input, shape index: {}, may-alias: {3,4,5}]
  %s5 = inlined_call_operand.vmem [shape: f32[1,768], index: 5, kind: input, shape index: {}, may-alias: {3,4,5}]
  %s6 = inlined_call_operand.vmem [shape: f32[8,1], index: 6, kind: input, shape index: {}]
  %s7 = inlined_call_operand.vmem [shape: f32[8,1], index: 7, kind: input, shape index: {}]
  %s8 = inlined_call_operand.vmem [shape: bf16[9,8,8], index: 8, kind: input, shape index: {}]
  %s9 = inlined_call_operand.vmem [shape: bf16[8,768], index: 9, kind: output, shape index: {0}]
  %s10 = inlined_call_operand.vmem [shape: f32[1,8,2], index: 10, kind: output, shape index: {1}]
  %11 = xla_tuple %s9, %s10
  %s12 = sld [smem:[#allocation0]]
  $region54: #{double_conv_forward.4} parent=0
    _
  %s14 = ssub.s32 1, %s12
  %s15 = scalar_select 0, %s14, %s12
  // Predicated region
  $region2: #{double_conv_forward.4} parent=0 // pred_check
    _
  $region3: #{double_conv_forward.4} parent=0 // pred_check_branch
    %17 = sbr.rel (0) target = $region5
  $region4: #{double_conv_forward.4} parent=0 // pred_region
    %s18 = smul.u32 0, 6
    %s19 = ssub.s32 %s18, 1
    %p20 = scmp.gt.s32.totalorder %s19, 0
    %s21 = scalar_select %p20, %s19, 0
    %p22 = scmp.lt.s32.totalorder %s21, 5
    %s23 = scalar_select %p22, %s21, 5
    %s24 = smul.addr %s23, 4
    %s25 = scalar_lea.vmem %s0, %s24
    %s26 = smul.u32 0, 6
    %s27 = ssub.s32 %s26, 1
    %p28 = scmp.gt.s32.totalorder %s27, 0
    %s29 = scalar_select %p28, %s27, 0
  $region5: #{double_conv_forward.4} parent=0 // pred_fallthru
    _
  // Predicated region
  $region6: #{double_conv_forward.4} parent=0 // pred_check
    _
  $region7: #{double_conv_forward.4} parent=0 // pred_check_branch
    %31 = sbr.rel (0) target = $region9
  $region8: #{double_conv_forward.4} parent=0 // pred_region
    _
  $region9: #{double_conv_forward.4} parent=0 // pred_fallthru
    _
  // Predicated region
  $region10: #{double_conv_forward.4} parent=0 // pred_check
    _
  $region11: #{double_conv_forward.4} parent=0 // pred_check_branch
    %33 = sbr.rel (0) target = $region13
  $region12: #{double_conv_forward.4} parent=0 // pred_region
    %s34 = sadd.s32 0, 1
    %s35 = smul.u32 %s34, 6
    %p36 = scmp.lt.s32.totalorder %s35, 5
    %s37 = scalar_select %p36, %s35, 5
    %p38 = scmp.lt.s32.totalorder %s37, 5
    %s39 = scalar_select %p38, %s37, 5
    %s40 = smul.addr %s39, 4
    %s41 = scalar_lea.vmem %s2, %s40
    %s42 = sadd.s32 0, 1
    %s43 = smul.u32 %s42, 6
    %p44 = scmp.lt.s32.totalorder %s43, 5
    %s45 = scalar_select %p44, %s43, 5
  $region13: #{double_conv_forward.4} parent=0 // pred_fallthru
    _
  // Predicated region
  $region14: #{double_conv_forward.4} parent=0 // pred_check
    _
  $region15: #{double_conv_forward.4} parent=0 // pred_check_branch
    %47 = sbr.rel (0) target = $region17
  $region16: #{double_conv_forward.4} parent=0 // pred_region
    %s48 = smul.u32 0, 6
    %s49 = ssub.s32 %s48, 1
    %p50 = scmp.gt.s32.totalorder %s49, 0
    %s51 = scalar_select %p50, %s49, 0
    %p52 = scmp.lt.s32.totalorder %s51, 5
    %s53 = scalar_select %p52, %s51, 5
    %s54 = scalar_lea.vmem %s3, %s53
    %s55 = smul.u32 0, 6
    %s56 = ssub.s32 %s55, 1
    %p57 = scmp.gt.s32.totalorder %s56, 0
    %s58 = scalar_select %p57, %s56, 0
  $region17: #{double_conv_forward.4} parent=0 // pred_fallthru
    _
  // Predicated region
  $region18: #{double_conv_forward.4} parent=0 // pred_check
    _
  $region19: #{double_conv_forward.4} parent=0 // pred_check_branch
    %60 = sbr.rel (0) target = $region21
  $region20: #{double_conv_forward.4} parent=0 // pred_region
    _
  $region21: #{double_conv_forward.4} parent=0 // pred_fallthru
    _
  // Predicated region
  $region22: #{double_conv_forward.4} parent=0 // pred_check
    _
  $region23: #{double_conv_forward.4} parent=0 // pred_check_branch
    %62 = sbr.rel (0) target = $region25
  $region24: #{double_conv_forward.4} parent=0 // pred_region
    %s63 = sadd.s32 0, 1
    %s64 = smul.u32 %s63, 6
    %p65 = scmp.lt.s32.totalorder %s64, 5
    %s66 = scalar_select %p65, %s64, 5
    %p67 = scmp.lt.s32.totalorder %s66, 5
    %s68 = scalar_select %p67, %s66, 5
    %s69 = scalar_lea.vmem %s5, %s68
    %s70 = sadd.s32 0, 1
    %s71 = smul.u32 %s70, 6
    %p72 = scmp.lt.s32.totalorder %s71, 5
    %s73 = scalar_select %p72, %s71, 5
  $region25: #{double_conv_forward.4} parent=0 // pred_fallthru
    _
  // Predicated region
  $region26: #{double_conv_forward.4} parent=0 // pred_check
    _
  $region27: #{double_conv_forward.4} parent=0 // pred_check_branch
    %75 = sbr.rel (0) target = $region29
  $region28: #{double_conv_forward.4} parent=0 // pred_region
    _
  $region29: #{double_conv_forward.4} parent=0 // pred_fallthru
    _
  // Predicated region
  $region30: #{double_conv_forward.4} parent=0 // pred_check
    _
  $region31: #{double_conv_forward.4} parent=0 // pred_check_branch
    %77 = sbr.rel (0) target = $region33
  $region32: #{double_conv_forward.4} parent=0 // pred_region
    _
  $region33: #{double_conv_forward.4} parent=0 // pred_fallthru
    _
  // Predicated region
  $region34: #{double_conv_forward.4} parent=0 // pred_check
    _
  $region35: #{double_conv_forward.4} parent=0 // pred_check_branch
    %79 = sbr.rel (0) target = $region37
  $region36: #{double_conv_forward.4} parent=0 // pred_region
    _
  $region37: #{double_conv_forward.4} parent=0 // pred_fallthru
    _
  %s80 = smul.u32 0, 6
  %s81 = ssub.s32 %s80, 1
  %p82 = scmp.gt.s32.totalorder %s81, 0
  %s83 = scalar_select %p82, %s81, 0
  %p84 = scmp.lt.s32.totalorder %s83, 5
  %s85 = scalar_select %p84, %s83, 5
  %s86 = smul.addr %s85, 4
  %s87 = scalar_lea.vmem %s0, %s86
  %s88 = sadd.s32 0, 1
  %s89 = smul.u32 %s88, 6
  %p90 = scmp.lt.s32.totalorder %s89, 5
  %s91 = scalar_select %p90, %s89, 5
  %p92 = scmp.lt.s32.totalorder %s91, 5
  %s93 = scalar_select %p92, %s91, 5
  %s94 = smul.addr %s93, 4
  %s95 = scalar_lea.vmem %s2, %s94
  %s96 = smul.u32 0, 6
  %s97 = ssub.s32 %s96, 1
  %p98 = scmp.gt.s32.totalorder %s97, 0
  %s99 = scalar_select %p98, %s97, 0
  %p100 = scmp.lt.s32.totalorder %s99, 5
  %s101 = scalar_select %p100, %s99, 5
  %s102 = scalar_lea.vmem %s3, %s101
  %s103 = sadd.s32 0, 1
  %s104 = smul.u32 %s103, 6
  %p105 = scmp.lt.s32.totalorder %s104, 5
  %s106 = scalar_select %p105, %s104, 5
  %p107 = scmp.lt.s32.totalorder %s106, 5
  %s108 = scalar_select %p107, %s106, 5
  %s109 = scalar_lea.vmem %s5, %s108
  %s110 = smul.u32 0, 6
  %s111 = ssub.s32 %s110, 1
  %p112 = scmp.gt.s32.totalorder %s111, 0
  %s113 = scalar_select %p112, %s111, 0
  %p114 = scmp.lt.s32.totalorder %s113, 5
  %s115 = scalar_select %p114, %s113, 5
  %s116 = smul.addr %s115, 4
  %s117 = scalar_lea.vmem %s0, %s116
  %s118 = smul.u32 0, 6
  %s119 = ssub.s32 %s118, 1
  %p120 = scmp.gt.s32.totalorder %s119, 0
  %s121 = scalar_select %p120, %s119, 0
  %s122 = sadd.s32 0, 1
  %s123 = smul.u32 %s122, 6
  %p124 = scmp.lt.s32.totalorder %s123, 5
  %s125 = scalar_select %p124, %s123, 5
  %p126 = scmp.lt.s32.totalorder %s125, 5
  %s127 = scalar_select %p126, %s125, 5
  %s128 = smul.addr %s127, 4
  %s129 = scalar_lea.vmem %s2, %s128
  %s130 = sadd.s32 0, 1
  %s131 = smul.u32 %s130, 6
  %p132 = scmp.lt.s32.totalorder %s131, 5
  %s133 = scalar_select %p132, %s131, 5
  %s134 = smul.u32 0, 6
  %s135 = ssub.s32 %s134, 1
  %p136 = scmp.gt.s32.totalorder %s135, 0
  %s137 = scalar_select %p136, %s135, 0
  %p138 = scmp.lt.s32.totalorder %s137, 5
  %s139 = scalar_select %p138, %s137, 5
  %s140 = scalar_lea.vmem %s3, %s139
  %s141 = smul.u32 0, 6
  %s142 = ssub.s32 %s141, 1
  %p143 = scmp.gt.s32.totalorder %s142, 0
  %s144 = scalar_select %p143, %s142, 0
  %s145 = sadd.s32 0, 1
  %s146 = smul.u32 %s145, 6
  %p147 = scmp.lt.s32.totalorder %s146, 5
  %s148 = scalar_select %p147, %s146, 5
  %p149 = scmp.lt.s32.totalorder %s148, 5
  %s150 = scalar_select %p149, %s148, 5
  %s151 = scalar_lea.vmem %s5, %s150
  %s152 = sadd.s32 0, 1
  %s153 = smul.u32 %s152, 6
  %p154 = scmp.lt.s32.totalorder %s153, 5
  %s155 = scalar_select %p154, %s153, 5
  %v157 = vld [vmem:[%s117] sm:$0xf]
  %v158 = vld [vmem:[%s1] sm:$0xff]
  %v159 = vld [vmem:[%s1 + $0x8] sm:$0xff]
  %v160 = vld [vmem:[%s1 + $0x10] sm:$0xff]
  %v161 = vld [vmem:[%s129] sm:$0xf]
  %v165 = vunpack.c.l.b16 %v158
  %v166 = vunpack.c.h.b16 %v158
  %v167 = vunpack.c.l.b16 %v159
  %v168 = vunpack.c.h.b16 %v159
  %v169 = vunpack.c.l.b16 %v160
  %v170 = vunpack.c.h.b16 %v160
  %v171 = vpack.c.b16 %v165, %v165
  %v172 = vpack.c.b16 %v166, %v166
  %v173 = vpack.c.b16 %v167, %v167
  %v174 = vpack.c.b16 %v168, %v168
  %v175 = vpack.c.b16 %v169, %v169
  %v176 = vpack.c.b16 %v170, %v170
  %v183 = vunpack.c.l.bf16 %v157
  %v184 = vunpack.c.l.bf16 %v171
  %v185 = vunpack.c.l.bf16 %v172
  %v186 = vunpack.c.l.bf16 %v173
  %v187 = vunpack.c.l.bf16 %v174
  %v188 = vunpack.c.l.bf16 %v175
  %v189 = vunpack.c.l.bf16 %v176
  %v190 = vunpack.c.l.bf16 %v161
  %v191 = vld [vmem:[%s140] sm:$0x1]
  %v192 = vld [vmem:[%s4] sm:$0x3f]
  %v193 = vld [vmem:[%s151] sm:$0x1]
  %v195 = vlaneseq
  %v196 = vshrl.u32 %v195, 7
  %v197 = vsub.s32 0, %v196
  %v198 = vrot.slane %v192, %v197
  %v199 = vlaneseq
  %v200 = vshrl.u32 %v199, 7
  %v201 = vsub.s32 1, %v200
  %v202 = vrot.slane %v192, %v201
  %v203 = vlaneseq
  %v204 = vshrl.u32 %v203, 7
  %v205 = vsub.s32 2, %v204
  %v206 = vrot.slane %v192, %v205
  %v207 = vlaneseq
  %v208 = vshrl.u32 %v207, 7
  %v209 = vsub.s32 3, %v208
  %v210 = vrot.slane %v192, %v209
  %v211 = vlaneseq
  %v212 = vshrl.u32 %v211, 7
  %v213 = vsub.s32 4, %v212
  %v214 = vrot.slane %v192, %v213
  %v215 = vlaneseq
  %v216 = vshrl.u32 %v215, 7
  %v217 = vsub.s32 5, %v216
  %v218 = vrot.slane %v192, %v217
  %v225 = vld [vmem:[%s6] sm:$0xff]
  %227 = vset.pattern.permute.xlu0 0
  %228 = vperm.xlu0 %227, %v225
  %v229 = vpop.permute.xlu0 %228
  %v231 = vmul.f32 %v183, %v229
  %v232 = vmul.f32 %v184, %v229
  %v233 = vmul.f32 %v185, %v229
  %v234 = vmul.f32 %v186, %v229
  %v235 = vmul.f32 %v187, %v229
  %v236 = vmul.f32 %v188, %v229
  %v237 = vmul.f32 %v189, %v229
  %v238 = vmul.f32 %v190, %v229
  %v239 = vld [vmem:[%s7] sm:$0xff]
  %241 = vset.pattern.permute.xlu0 0
  %242 = vperm.xlu0 %241, %v239
  %v243 = vpop.permute.xlu0 %242
  %v245 = vadd.f32 %v231, %v243
  %v246 = vadd.f32 %v232, %v243
  %v247 = vadd.f32 %v233, %v243
  %v248 = vadd.f32 %v234, %v243
  %v249 = vadd.f32 %v235, %v243
  %v250 = vadd.f32 %v236, %v243
  %v251 = vadd.f32 %v237, %v243
  %v252 = vadd.f32 %v238, %v243
  %v253 = vmax.f32 %v245, 0.0
  %v254 = vmax.f32 %v246, 0.0
  %v255 = vmax.f32 %v247, 0.0
  %v256 = vmax.f32 %v248, 0.0
  %v257 = vmax.f32 %v249, 0.0
  %v258 = vmax.f32 %v250, 0.0
  %v259 = vmax.f32 %v251, 0.0
  %v260 = vmax.f32 %v252, 0.0
  %v261 = vlaneseq
  %v262 = vshrl.u32 %v261, 7
  %v263 = vsub.s32 0, %v262
  %v264 = vrot.slane %v191, %v263
  %v265 = vlaneseq
  %v266 = vshrl.u32 %v265, 7
  %v267 = vsub.s32 0, %v266
  %v268 = vrot.slane %v198, %v267
  %v269 = vlaneseq
  %v270 = vshrl.u32 %v269, 7
  %v271 = vsub.s32 0, %v270
  %v272 = vrot.slane %v202, %v271
  %v273 = vlaneseq
  %v274 = vshrl.u32 %v273, 7
  %v275 = vsub.s32 0, %v274
  %v276 = vrot.slane %v206, %v275
  %v277 = vlaneseq
  %v278 = vshrl.u32 %v277, 7
  %v279 = vsub.s32 0, %v278
  %v280 = vrot.slane %v210, %v279
  %v281 = vlaneseq
  %v282 = vshrl.u32 %v281, 7
  %v283 = vsub.s32 0, %v282
  %v284 = vrot.slane %v214, %v283
  %v285 = vlaneseq
  %v286 = vshrl.u32 %v285, 7
  %v287 = vsub.s32 0, %v286
  %v288 = vrot.slane %v218, %v287
  %v289 = vlaneseq
  %v290 = vshrl.u32 %v289, 7
  %v291 = vsub.s32 0, %v290
  %v292 = vrot.slane %v193, %v291
  %v293 = vmul.f32 %v253, %v264
  %v294 = vmul.f32 %v254, %v268
  %v295 = vmul.f32 %v255, %v272
  %v296 = vmul.f32 %v256, %v276
  %v297 = vmul.f32 %v257, %v280
  %v298 = vmul.f32 %v258, %v284
  %v299 = vmul.f32 %v259, %v288
  %v300 = vmul.f32 %v260, %v292
  %v301 = vpack.c.bf16 %v293, %v293
  %v302 = vpack.c.bf16 %v294, %v294
  %v303 = vpack.c.bf16 %v295, %v295
  %v304 = vpack.c.bf16 %v296, %v296
  %v305 = vpack.c.bf16 %v297, %v297
  %v306 = vpack.c.bf16 %v298, %v298
  %v307 = vpack.c.bf16 %v299, %v299
  %v308 = vpack.c.bf16 %v300, %v300
  %v309 = vld [vmem:[%s8] sm:$0xf]
  %v310 = vld [vmem:[%s8 + $0x4] sm:$0xf]
  %v311 = vld [vmem:[%s8 + $0x8] sm:$0xf]
  %v312 = vld [vmem:[%s8 + $0xc] sm:$0xf]
  %v313 = vld [vmem:[%s8 + $0x10] sm:$0xf]
  %v314 = vld [vmem:[%s8 + $0x14] sm:$0xf]
  %v315 = vld [vmem:[%s8 + $0x18] sm:$0xf]
  %v316 = vld [vmem:[%s8 + $0x1c] sm:$0xf]
  %v317 = vld [vmem:[%s8 + $0x20] sm:$0xf]
  %325 = vrot.lane.b32.xlu0 %v301, 18
  %v326 = vpop.permute.xlu0 %325
  %327 = vrot.lane.b32.xlu0 %v302, 18
  %v328 = vpop.permute.xlu0 %327
  %329 = vrot.lane.b32.xlu0 %v303, 18
  %v330 = vpop.permute.xlu0 %329
  %331 = vrot.lane.b32.xlu0 %v304, 18
  %v332 = vpop.permute.xlu0 %331
  %333 = vrot.lane.b32.xlu0 %v305, 18
  %v334 = vpop.permute.xlu0 %333
  %335 = vrot.lane.b32.xlu0 %v306, 18
  %v336 = vpop.permute.xlu0 %335
  %337 = vrot.lane.b32.xlu0 %v307, 18
  %v338 = vpop.permute.xlu0 %337
  %vm339 = vcmask 146432
  %v340 = vsel %vm339, %v326, %v328
  %v341 = vsel %vm339, %v328, %v330
  %v342 = vsel %vm339, %v330, %v332
  %v343 = vsel %vm339, %v332, %v334
  %v344 = vsel %vm339, %v334, %v336
  %v345 = vsel %vm339, %v336, %v338
  %vm346 = vcmask 64512
  %v348 = vsel %vm346, %v310, 0
  %vm350 = vcmask 1043456
  %v352 = vsel %vm350, %v340, 0
  %v355 = vsel %vm350, %v341, 0
  %v358 = vsel %vm350, %v342, 0
  %v361 = vsel %vm350, %v343, 0
  %v364 = vsel %vm350, %v344, 0
  %v367 = vsel %vm350, %v345, 0
  %369 = vmatprep.subr.bf16.mxu0 %v355
  %370 = vmatpush1.bf16.msra.mxu0 %v352
  %371 = vmatprep.subr.bf16.mxu0 0
  %372 = vmatpush1.bf16.msra.mxu0 0
  %373 = vmatprep.subr.bf16.mxu0 0
  %374 = vmatpush1.bf16.msra.mxu0 0
  %375 = vmatprep.subr.bf16.mxu0 0
  %376 = vmatpush1.bf16.msra.mxu0 0
  %377 = vmatprep.subr.bf16.mxu0 0
  %378 = vmatpush1.bf16.msra.mxu0 0
  %379 = vmatprep.subr.bf16.mxu0 0
  %380 = vmatpush1.bf16.msra.mxu0 0
  %381 = vmatprep.subr.bf16.mxu0 0
  %382 = vmatpush1.bf16.msra.mxu0 0
  %383 = vmatprep.subr.bf16.mxu0 0
  %384 = vmatpush1.bf16.msra.mxu0 0
  %385 = vmatprep.subr.bf16.mxu0 0
  %386 = vmatpush1.bf16.msra.mxu0 0
  %387 = vmatprep.subr.bf16.mxu0 0
  %388 = vmatpush1.bf16.msra.mxu0 0
  %389 = vmatprep.subr.bf16.mxu0 0
  %390 = vmatpush1.bf16.msra.mxu0 0
  %391 = vmatprep.subr.bf16.mxu0 0
  %392 = vmatpush1.bf16.msra.mxu0 0
  %393 = vmatprep.subr.bf16.mxu0 0
  %394 = vmatpush1.bf16.msra.mxu0 0
  %395 = vmatprep.subr.bf16.mxu0 0
  %396 = vmatpush1.bf16.msra.mxu0 0
  %397 = vmatprep.subr.bf16.mxu0 0
  %398 = vmatpush1.bf16.msra.mxu0 0
  %399 = vmatprep.subr.bf16.mxu0 0
  %400 = vmatpush1.bf16.msra.mxu0 0
  %401 = vmatprep.mubr.bf16.mxu0 0
  %402 = vmatmul.mubr.bf16.gmra.mrb[0].mxu0 %v348
  %v403 = vpop.f32.mrb[0].mxu0
  %v404 = vadd.f32 0.0, %v403
  %v405 = vpop.f32.mrb[0].mxu0
  %v406 = vadd.f32 0.0, %v405
  %v407 = vpop.f32.mrb[0].mxu0
  %v408 = vpop.f32.mrb[0].mxu0
  %409 = vdwg.mxu0
  %410 = vmatprep.subr.bf16.mxu0 %v361
  %411 = vmatpush1.bf16.msra.mxu0 %v358
  %412 = vmatprep.subr.bf16.mxu0 0
  %413 = vmatpush1.bf16.msra.mxu0 0
  %414 = vmatprep.subr.bf16.mxu0 0
  %415 = vmatpush1.bf16.msra.mxu0 0
  %416 = vmatprep.subr.bf16.mxu0 0
  %417 = vmatpush1.bf16.msra.mxu0 0
  %418 = vmatprep.subr.bf16.mxu0 0
  %419 = vmatpush1.bf16.msra.mxu0 0
  %420 = vmatprep.subr.bf16.mxu0 0
  %421 = vmatpush1.bf16.msra.mxu0 0
  %422 = vmatprep.subr.bf16.mxu0 0
  %423 = vmatpush1.bf16.msra.mxu0 0
  %424 = vmatprep.subr.bf16.mxu0 0
  %425 = vmatpush1.bf16.msra.mxu0 0
  %426 = vmatprep.subr.bf16.mxu0 0
  %427 = vmatpush1.bf16.msra.mxu0 0
  %428 = vmatprep.subr.bf16.mxu0 0
  %429 = vmatpush1.bf16.msra.mxu0 0
  %430 = vmatprep.subr.bf16.mxu0 0
  %431 = vmatpush1.bf16.msra.mxu0 0
  %432 = vmatprep.subr.bf16.mxu0 0
  %433 = vmatpush1.bf16.msra.mxu0 0
  %434 = vmatprep.subr.bf16.mxu0 0
  %435 = vmatpush1.bf16.msra.mxu0 0
  %436 = vmatprep.subr.bf16.mxu0 0
  %437 = vmatpush1.bf16.msra.mxu0 0
  %438 = vmatprep.subr.bf16.mxu0 0
  %439 = vmatpush1.bf16.msra.mxu0 0
  %440 = vmatprep.subr.bf16.mxu0 0
  %441 = vmatpush1.bf16.msra.mxu0 0
  %442 = vmatprep.mubr.bf16.mxu0 0
  %443 = vmatmul.mubr.bf16.gmra.mrb[0].mxu0 %v348
  %v444 = vpop.f32.mrb[0].mxu0
  %v445 = vadd.f32 0.0, %v444
  %v446 = vpop.f32.mrb[0].mxu0
  %v447 = vadd.f32 0.0, %v446
  %v448 = vpop.f32.mrb[0].mxu0
  %v449 = vpop.f32.mrb[0].mxu0
  %450 = vdwg.mxu0
  %451 = vmatprep.subr.bf16.mxu0 %v367
  %452 = vmatpush1.bf16.msra.mxu0 %v364
  %453 = vmatprep.subr.bf16.mxu0 0
  %454 = vmatpush1.bf16.msra.mxu0 0
  %455 = vmatprep.subr.bf16.mxu0 0
  %456 = vmatpush1.bf16.msra.mxu0 0
  %457 = vmatprep.subr.bf16.mxu0 0
  %458 = vmatpush1.bf16.msra.mxu0 0
  %459 = vmatprep.subr.bf16.mxu0 0
  %460 = vmatpush1.bf16.msra.mxu0 0
  %461 = vmatprep.subr.bf16.mxu0 0
  %462 = vmatpush1.bf16.msra.mxu0 0
  %463 = vmatprep.subr.bf16.mxu0 0
  %464 = vmatpush1.bf16.msra.mxu0 0
  %465 = vmatprep.subr.bf16.mxu0 0
  %466 = vmatpush1.bf16.msra.mxu0 0
  %467 = vmatprep.subr.bf16.mxu0 0
  %468 = vmatpush1.bf16.msra.mxu0 0
  %469 = vmatprep.subr.bf16.mxu0 0
  %470 = vmatpush1.bf16.msra.mxu0 0
  %471 = vmatprep.subr.bf16.mxu0 0
  %472 = vmatpush1.bf16.msra.mxu0 0
  %473 = vmatprep.subr.bf16.mxu0 0
  %474 = vmatpush1.bf16.msra.mxu0 0
  %475 = vmatprep.subr.bf16.mxu0 0
  %476 = vmatpush1.bf16.msra.mxu0 0
  %477 = vmatprep.subr.bf16.mxu0 0
  %478 = vmatpush1.bf16.msra.mxu0 0
  %479 = vmatprep.subr.bf16.mxu0 0
  %480 = vmatpush1.bf16.msra.mxu0 0
  %481 = vmatprep.subr.bf16.mxu0 0
  %482 = vmatpush1.bf16.msra.mxu0 0
  %483 = vmatprep.mubr.bf16.mxu0 0
  %484 = vmatmul.mubr.bf16.gmra.mrb[0].mxu0 %v348
  %v485 = vpop.f32.mrb[0].mxu0
  %v486 = vadd.f32 0.0, %v485
  %v487 = vpop.f32.mrb[0].mxu0
  %v488 = vadd.f32 0.0, %v487
  %v489 = vpop.f32.mrb[0].mxu0
  %v490 = vpop.f32.mrb[0].mxu0
  %491 = vdwg.mxu0
  %492 = vrot.lane.b32.xlu0 %v301, 19
  %v493 = vpop.permute.xlu0 %492
  %494 = vrot.lane.b32.xlu0 %v302, 19
  %v495 = vpop.permute.xlu0 %494
  %496 = vrot.lane.b32.xlu0 %v303, 19
  %v497 = vpop.permute.xlu0 %496
  %498 = vrot.lane.b32.xlu0 %v304, 19
  %v499 = vpop.permute.xlu0 %498
  %500 = vrot.lane.b32.xlu0 %v305, 19
  %v501 = vpop.permute.xlu0 %500
  %502 = vrot.lane.b32.xlu0 %v306, 19
  %v503 = vpop.permute.xlu0 %502
  %504 = vrot.lane.b32.xlu0 %v307, 19
  %v505 = vpop.permute.xlu0 %504
  %vm506 = vcmask 154624
  %v507 = vsel %vm506, %v493, %v495
  %v508 = vsel %vm506, %v495, %v497
  %v509 = vsel %vm506, %v497, %v499
  %v510 = vsel %vm506, %v499, %v501
  %v511 = vsel %vm506, %v501, %v503
  %v512 = vsel %vm506, %v503, %v505
  %v514 = vsel %vm346, %v309, 0
  %v517 = vsel %vm350, %v507, 0
  %v520 = vsel %vm350, %v508, 0
  %v523 = vsel %vm350, %v509, 0
  %v526 = vsel %vm350, %v510, 0
  %v529 = vsel %vm350, %v511, 0
  %v532 = vsel %vm350, %v512, 0
  %534 = vmatprep.subr.bf16.mxu0 %v520
  %535 = vmatpush1.bf16.msra.mxu0 %v517
  %536 = vmatprep.subr.bf16.mxu0 0
  %537 = vmatpush1.bf16.msra.mxu0 0
  %538 = vmatprep.subr.bf16.mxu0 0
  %539 = vmatpush1.bf16.msra.mxu0 0
  %540 = vmatprep.subr.bf16.mxu0 0
  %541 = vmatpush1.bf16.msra.mxu0 0
  %542 = vmatprep.subr.bf16.mxu0 0
  %543 = vmatpush1.bf16.msra.mxu0 0
  %544 = vmatprep.subr.bf16.mxu0 0
  %545 = vmatpush1.bf16.msra.mxu0 0
  %546 = vmatprep.subr.bf16.mxu0 0
  %547 = vmatpush1.bf16.msra.mxu0 0
  %548 = vmatprep.subr.bf16.mxu0 0
  %549 = vmatpush1.bf16.msra.mxu0 0
  %550 = vmatprep.subr.bf16.mxu0 0
  %551 = vmatpush1.bf16.msra.mxu0 0
  %552 = vmatprep.subr.bf16.mxu0 0
  %553 = vmatpush1.bf16.msra.mxu0 0
  %554 = vmatprep.subr.bf16.mxu0 0
  %555 = vmatpush1.bf16.msra.mxu0 0
  %556 = vmatprep.subr.bf16.mxu0 0
  %557 = vmatpush1.bf16.msra.mxu0 0
  %558 = vmatprep.subr.bf16.mxu0 0
  %559 = vmatpush1.bf16.msra.mxu0 0
  %560 = vmatprep.subr.bf16.mxu0 0
  %561 = vmatpush1.bf16.msra.mxu0 0
  %562 = vmatprep.subr.bf16.mxu0 0
  %563 = vmatpush1.bf16.msra.mxu0 0
  %564 = vmatprep.subr.bf16.mxu0 0
  %565 = vmatpush1.bf16.msra.mxu0 0
  %566 = vmatprep.mubr.bf16.mxu0 0
  %567 = vmatmul.mubr.bf16.gmra.mrb[0].mxu0 %v514
  %v568 = vpop.f32.mrb[0].mxu0
  %v569 = vadd.f32 %v404, %v568
  %v570 = vpop.f32.mrb[0].mxu0
  %v571 = vadd.f32 %v406, %v570
  %v572 = vpop.f32.mrb[0].mxu0
  %v573 = vpop.f32.mrb[0].mxu0
  %574 = vdwg.mxu0
  %575 = vmatprep.subr.bf16.mxu0 %v526
  %576 = vmatpush1.bf16.msra.mxu0 %v523
  %577 = vmatprep.subr.bf16.mxu0 0
  %578 = vmatpush1.bf16.msra.mxu0 0
  %579 = vmatprep.subr.bf16.mxu0 0
  %580 = vmatpush1.bf16.msra.mxu0 0
  %581 = vmatprep.subr.bf16.mxu0 0
  %582 = vmatpush1.bf16.msra.mxu0 0
  %583 = vmatprep.subr.bf16.mxu0 0
  %584 = vmatpush1.bf16.msra.mxu0 0
  %585 = vmatprep.subr.bf16.mxu0 0
  %586 = vmatpush1.bf16.msra.mxu0 0
  %587 = vmatprep.subr.bf16.mxu0 0
  %588 = vmatpush1.bf16.msra.mxu0 0
  %589 = vmatprep.subr.bf16.mxu0 0
  %590 = vmatpush1.bf16.msra.mxu0 0
  %591 = vmatprep.subr.bf16.mxu0 0
  %592 = vmatpush1.bf16.msra.mxu0 0
  %593 = vmatprep.subr.bf16.mxu0 0
  %594 = vmatpush1.bf16.msra.mxu0 0
  %595 = vmatprep.subr.bf16.mxu0 0
  %596 = vmatpush1.bf16.msra.mxu0 0
  %597 = vmatprep.subr.bf16.mxu0 0
  %598 = vmatpush1.bf16.msra.mxu0 0
  %599 = vmatprep.subr.bf16.mxu0 0
  %600 = vmatpush1.bf16.msra.mxu0 0
  %601 = vmatprep.subr.bf16.mxu0 0
  %602 = vmatpush1.bf16.msra.mxu0 0
  %603 = vmatprep.subr.bf16.mxu0 0
  %604 = vmatpush1.bf16.msra.mxu0 0
  %605 = vmatprep.subr.bf16.mxu0 0
  %606 = vmatpush1.bf16.msra.mxu0 0
  %607 = vmatprep.mubr.bf16.mxu0 0
  %608 = vmatmul.mubr.bf16.gmra.mrb[0].mxu0 %v514
  %v609 = vpop.f32.mrb[0].mxu0
  %v610 = vadd.f32 %v445, %v609
  %v611 = vpop.f32.mrb[0].mxu0
  %v612 = vadd.f32 %v447, %v611
  %v613 = vpop.f32.mrb[0].mxu0
  %v614 = vpop.f32.mrb[0].mxu0
  %615 = vdwg.mxu0
  %616 = vmatprep.subr.bf16.mxu0 %v532
  %617 = vmatpush1.bf16.msra.mxu0 %v529
  %618 = vmatprep.subr.bf16.mxu0 0
  %619 = vmatpush1.bf16.msra.mxu0 0
  %620 = vmatprep.subr.bf16.mxu0 0
  %621 = vmatpush1.bf16.msra.mxu0 0
  %622 = vmatprep.subr.bf16.mxu0 0
  %623 = vmatpush1.bf16.msra.mxu0 0
  %624 = vmatprep.subr.bf16.mxu0 0
  %625 = vmatpush1.bf16.msra.mxu0 0
  %626 = vmatprep.subr.bf16.mxu0 0
  %627 = vmatpush1.bf16.msra.mxu0 0
  %628 = vmatprep.subr.bf16.mxu0 0
  %629 = vmatpush1.bf16.msra.mxu0 0
  %630 = vmatprep.subr.bf16.mxu0 0
  %631 = vmatpush1.bf16.msra.mxu0 0
  %632 = vmatprep.subr.bf16.mxu0 0
  %633 = vmatpush1.bf16.msra.mxu0 0
  %634 = vmatprep.subr.bf16.mxu0 0
  %635 = vmatpush1.bf16.msra.mxu0 0
  %636 = vmatprep.subr.bf16.mxu0 0
  %637 = vmatpush1.bf16.msra.mxu0 0
  %638 = vmatprep.subr.bf16.mxu0 0
  %639 = vmatpush1.bf16.msra.mxu0 0
  %640 = vmatprep.subr.bf16.mxu0 0
  %641 = vmatpush1.bf16.msra.mxu0 0
  %642 = vmatprep.subr.bf16.mxu0 0
  %643 = vmatpush1.bf16.msra.mxu0 0
  %644 = vmatprep.subr.bf16.mxu0 0
  %645 = vmatpush1.bf16.msra.mxu0 0
  %646 = vmatprep.subr.bf16.mxu0 0
  %647 = vmatpush1.bf16.msra.mxu0 0
  %648 = vmatprep.mubr.bf16.mxu0 0
  %649 = vmatmul.mubr.bf16.gmra.mrb[0].mxu0 %v514
  %v650 = vpop.f32.mrb[0].mxu0
  %v651 = vadd.f32 %v486, %v650
  %v652 = vpop.f32.mrb[0].mxu0
  %v653 = vadd.f32 %v488, %v652
  %v654 = vpop.f32.mrb[0].mxu0
  %v655 = vpop.f32.mrb[0].mxu0
  %656 = vdwg.mxu0
  %657 = vrot.lane.b32.xlu0 %v301, 17
  %v658 = vpop.permute.xlu0 %657
  %659 = vrot.lane.b32.xlu0 %v302, 17
  %v660 = vpop.permute.xlu0 %659
  %661 = vrot.lane.b32.xlu0 %v303, 17
  %v662 = vpop.permute.xlu0 %661
  %663 = vrot.lane.b32.xlu0 %v304, 17
  %v664 = vpop.permute.xlu0 %663
  %665 = vrot.lane.b32.xlu0 %v305, 17
  %v666 = vpop.permute.xlu0 %665
  %667 = vrot.lane.b32.xlu0 %v306, 17
  %v668 = vpop.permute.xlu0 %667
  %669 = vrot.lane.b32.xlu0 %v307, 17
  %v670 = vpop.permute.xlu0 %669
  %vm671 = vcmask 138240
  %v672 = vsel %vm671, %v658, %v660
  %v673 = vsel %vm671, %v660, %v662
  %v674 = vsel %vm671, %v662, %v664
  %v675 = vsel %vm671, %v664, %v666
  %v676 = vsel %vm671, %v666, %v668
  %v677 = vsel %vm671, %v668, %v670
  %v679 = vsel %vm346, %v311, 0
  %v682 = vsel %vm350, %v672, 0
  %v685 = vsel %vm350, %v673, 0
  %v688 = vsel %vm350, %v674, 0
  %v691 = vsel %vm350, %v675, 0
  %v694 = vsel %vm350, %v676, 0
  %v697 = vsel %vm350, %v677, 0
  %699 = vmatprep.subr.bf16.mxu0 %v685
  %700 = vmatpush1.bf16.msra.mxu0 %v682
  %701 = vmatprep.subr.bf16.mxu0 0
  %702 = vmatpush1.bf16.msra.mxu0 0
  %703 = vmatprep.subr.bf16.mxu0 0
  %704 = vmatpush1.bf16.msra.mxu0 0
  %705 = vmatprep.subr.bf16.mxu0 0
  %706 = vmatpush1.bf16.msra.mxu0 0
  %707 = vmatprep.subr.bf16.mxu0 0
  %708 = vmatpush1.bf16.msra.mxu0 0
  %709 = vmatprep.subr.bf16.mxu0 0
  %710 = vmatpush1.bf16.msra.mxu0 0
  %711 = vmatprep.subr.bf16.mxu0 0
  %712 = vmatpush1.bf16.msra.mxu0 0
  %713 = vmatprep.subr.bf16.mxu0 0
  %714 = vmatpush1.bf16.msra.mxu0 0
  %715 = vmatprep.subr.bf16.mxu0 0
  %716 = vmatpush1.bf16.msra.mxu0 0
  %717 = vmatprep.subr.bf16.mxu0 0
  %718 = vmatpush1.bf16.msra.mxu0 0
  %719 = vmatprep.subr.bf16.mxu0 0
  %720 = vmatpush1.bf16.msra.mxu0 0
  %721 = vmatprep.subr.bf16.mxu0 0
  %722 = vmatpush1.bf16.msra.mxu0 0
  %723 = vmatprep.subr.bf16.mxu0 0
  %724 = vmatpush1.bf16.msra.mxu0 0
  %725 = vmatprep.subr.bf16.mxu0 0
  %726 = vmatpush1.bf16.msra.mxu0 0
  %727 = vmatprep.subr.bf16.mxu0 0
  %728 = vmatpush1.bf16.msra.mxu0 0
  %729 = vmatprep.subr.bf16.mxu0 0
  %730 = vmatpush1.bf16.msra.mxu0 0
  %731 = vmatprep.mubr.bf16.mxu0 0
  %732 = vmatmul.mubr.bf16.gmra.mrb[0].mxu0 %v679
  %v733 = vpop.f32.mrb[0].mxu0
  %v734 = vadd.f32 0.0, %v733
  %v735 = vpop.f32.mrb[0].mxu0
  %v736 = vadd.f32 0.0, %v735
  %v737 = vpop.f32.mrb[0].mxu0
  %v738 = vpop.f32.mrb[0].mxu0
  %739 = vdwg.mxu0
  %740 = vmatprep.subr.bf16.mxu0 %v691
  %741 = vmatpush1.bf16.msra.mxu0 %v688
  %742 = vmatprep.subr.bf16.mxu0 0
  %743 = vmatpush1.bf16.msra.mxu0 0
  %744 = vmatprep.subr.bf16.mxu0 0
  %745 = vmatpush1.bf16.msra.mxu0 0
  %746 = vmatprep.subr.bf16.mxu0 0
  %747 = vmatpush1.bf16.msra.mxu0 0
  %748 = vmatprep.subr.bf16.mxu0 0
  %749 = vmatpush1.bf16.msra.mxu0 0
  %750 = vmatprep.subr.bf16.mxu0 0
  %751 = vmatpush1.bf16.msra.mxu0 0
  %752 = vmatprep.subr.bf16.mxu0 0
  %753 = vmatpush1.bf16.msra.mxu0 0
  %754 = vmatprep.subr.bf16.mxu0 0
  %755 = vmatpush1.bf16.msra.mxu0 0
  %756 = vmatprep.subr.bf16.mxu0 0
  %757 = vmatpush1.bf16.msra.mxu0 0
  %758 = vmatprep.subr.bf16.mxu0 0
  %759 = vmatpush1.bf16.msra.mxu0 0
  %760 = vmatprep.subr.bf16.mxu0 0
  %761 = vmatpush1.bf16.msra.mxu0 0
  %762 = vmatprep.subr.bf16.mxu0 0
  %763 = vmatpush1.bf16.msra.mxu0 0
  %764 = vmatprep.subr.bf16.mxu0 0
  %765 = vmatpush1.bf16.msra.mxu0 0
  %766 = vmatprep.subr.bf16.mxu0 0
  %767 = vmatpush1.bf16.msra.mxu0 0
  %768 = vmatprep.subr.bf16.mxu0 0
  %769 = vmatpush1.bf16.msra.mxu0 0
  %770 = vmatprep.subr.bf16.mxu0 0
  %771 = vmatpush1.bf16.msra.mxu0 0
  %772 = vmatprep.mubr.bf16.mxu0 0
  %773 = vmatmul.mubr.bf16.gmra.mrb[0].mxu0 %v679
  %v774 = vpop.f32.mrb[0].mxu0
  %v775 = vadd.f32 0.0, %v774
  %v776 = vpop.f32.mrb[0].mxu0
  %v777 = vadd.f32 0.0, %v776
  %v778 = vpop.f32.mrb[0].mxu0
  %v779 = vpop.f32.mrb[0].mxu0
  %780 = vdwg.mxu0
  %781 = vmatprep.subr.bf16.mxu0 %v697
  %782 = vmatpush1.bf16.msra.mxu0 %v694
  %783 = vmatprep.subr.bf16.mxu0 0
  %784 = vmatpush1.bf16.msra.mxu0 0
  %785 = vmatprep.subr.bf16.mxu0 0
  %786 = vmatpush1.bf16.msra.mxu0 0
  %787 = vmatprep.subr.bf16.mxu0 0
  %788 = vmatpush1.bf16.msra.mxu0 0
  %789 = vmatprep.subr.bf16.mxu0 0
  %790 = vmatpush1.bf16.msra.mxu0 0
  %791 = vmatprep.subr.bf16.mxu0 0
  %792 = vmatpush1.bf16.msra.mxu0 0
  %793 = vmatprep.subr.bf16.mxu0 0
  %794 = vmatpush1.bf16.msra.mxu0 0
  %795 = vmatprep.subr.bf16.mxu0 0
  %796 = vmatpush1.bf16.msra.mxu0 0
  %797 = vmatprep.subr.bf16.mxu0 0
  %798 = vmatpush1.bf16.msra.mxu0 0
  %799 = vmatprep.subr.bf16.mxu0 0
  %800 = vmatpush1.bf16.msra.mxu0 0
  %801 = vmatprep.subr.bf16.mxu0 0
  %802 = vmatpush1.bf16.msra.mxu0 0
  %803 = vmatprep.subr.bf16.mxu0 0
  %804 = vmatpush1.bf16.msra.mxu0 0
  %805 = vmatprep.subr.bf16.mxu0 0
  %806 = vmatpush1.bf16.msra.mxu0 0
  %807 = vmatprep.subr.bf16.mxu0 0
  %808 = vmatpush1.bf16.msra.mxu0 0
  %809 = vmatprep.subr.bf16.mxu0 0
  %810 = vmatpush1.bf16.msra.mxu0 0
  %811 = vmatprep.subr.bf16.mxu0 0
  %812 = vmatpush1.bf16.msra.mxu0 0
  %813 = vmatprep.mubr.bf16.mxu0 0
  %814 = vmatmul.mubr.bf16.gmra.mrb[0].mxu0 %v679
  %v815 = vpop.f32.mrb[0].mxu0
  %v816 = vadd.f32 0.0, %v815
  %v817 = vpop.f32.mrb[0].mxu0
  %v818 = vadd.f32 0.0, %v817
  %v819 = vpop.f32.mrb[0].mxu0
  %v820 = vpop.f32.mrb[0].mxu0
  %821 = vdwg.mxu0
  %v822 = vadd.f32 %v569, %v734
  %v823 = vadd.f32 %v571, %v736
  %v824 = vadd.f32 %v610, %v775
  %v825 = vadd.f32 %v612, %v777
  %v826 = vadd.f32 %v651, %v816
  %v827 = vadd.f32 %v653, %v818
  %828 = vrot.lane.b32.xlu0 %v301, 1
  %v829 = vpop.permute.xlu0 %828
  %830 = vrot.lane.b32.xlu0 %v302, 1
  %v831 = vpop.permute.xlu0 %830
  %832 = vrot.lane.b32.xlu0 %v303, 1
  %v833 = vpop.permute.xlu0 %832
  %834 = vrot.lane.b32.xlu0 %v304, 1
  %v835 = vpop.permute.xlu0 %834
  %836 = vrot.lane.b32.xlu0 %v305, 1
  %v837 = vpop.permute.xlu0 %836
  %838 = vrot.lane.b32.xlu0 %v306, 1
  %v839 = vpop.permute.xlu0 %838
  %840 = vrot.lane.b32.xlu0 %v307, 1
  %v841 = vpop.permute.xlu0 %840
  %vm842 = vcmask 7168
  %v843 = vsel %vm842, %v829, %v831
  %v844 = vsel %vm842, %v831, %v833
  %v845 = vsel %vm842, %v833, %v835
  %v846 = vsel %vm842, %v835, %v837
  %v847 = vsel %vm842, %v837, %v839
  %v848 = vsel %vm842, %v839, %v841
  %v850 = vsel %vm346, %v312, 0
  %v853 = vsel %vm350, %v843, 0
  %v856 = vsel %vm350, %v844, 0
  %v859 = vsel %vm350, %v845, 0
  %v862 = vsel %vm350, %v846, 0
  %v865 = vsel %vm350, %v847, 0
  %v868 = vsel %vm350, %v848, 0
  %870 = vmatprep.subr.bf16.mxu0 %v856
  %871 = vmatpush1.bf16.msra.mxu0 %v853
  %872 = vmatprep.subr.bf16.mxu0 0
  %873 = vmatpush1.bf16.msra.mxu0 0
  %874 = vmatprep.subr.bf16.mxu0 0
  %875 = vmatpush1.bf16.msra.mxu0 0
  %876 = vmatprep.subr.bf16.mxu0 0
  %877 = vmatpush1.bf16.msra.mxu0 0
  %878 = vmatprep.subr.bf16.mxu0 0
  %879 = vmatpush1.bf16.msra.mxu0 0
  %880 = vmatprep.subr.bf16.mxu0 0
  %881 = vmatpush1.bf16.msra.mxu0 0
  %882 = vmatprep.subr.bf16.mxu0 0
  %883 = vmatpush1.bf16.msra.mxu0 0
  %884 = vmatprep.subr.bf16.mxu0 0
  %885 = vmatpush1.bf16.msra.mxu0 0
  %886 = vmatprep.subr.bf16.mxu0 0
  %887 = vmatpush1.bf16.msra.mxu0 0
  %888 = vmatprep.subr.bf16.mxu0 0
  %889 = vmatpush1.bf16.msra.mxu0 0
  %890 = vmatprep.subr.bf16.mxu0 0
  %891 = vmatpush1.bf16.msra.mxu0 0
  %892 = vmatprep.subr.bf16.mxu0 0
  %893 = vmatpush1.bf16.msra.mxu0 0
  %894 = vmatprep.subr.bf16.mxu0 0
  %895 = vmatpush1.bf16.msra.mxu0 0
  %896 = vmatprep.subr.bf16.mxu0 0
  %897 = vmatpush1.bf16.msra.mxu0 0
  %898 = vmatprep.subr.bf16.mxu0 0
  %899 = vmatpush1.bf16.msra.mxu0 0
  %900 = vmatprep.subr.bf16.mxu0 0
  %901 = vmatpush1.bf16.msra.mxu0 0
  %902 = vmatprep.mubr.bf16.mxu0 0
  %903 = vmatmul.mubr.bf16.gmra.mrb[0].mxu0 %v850
  %v904 = vpop.f32.mrb[0].mxu0
  %v905 = vadd.f32 0.0, %v904
  %v906 = vpop.f32.mrb[0].mxu0
  %v907 = vadd.f32 0.0, %v906
  %v908 = vpop.f32.mrb[0].mxu0
  %v909 = vpop.f32.mrb[0].mxu0
  %910 = vdwg.mxu0
  %911 = vmatprep.subr.bf16.mxu0 %v862
  %912 = vmatpush1.bf16.msra.mxu0 %v859
  %913 = vmatprep.subr.bf16.mxu0 0
  %914 = vmatpush1.bf16.msra.mxu0 0
  %915 = vmatprep.subr.bf16.mxu0 0
  %916 = vmatpush1.bf16.msra.mxu0 0
  %917 = vmatprep.subr.bf16.mxu0 0
  %918 = vmatpush1.bf16.msra.mxu0 0
  %919 = vmatprep.subr.bf16.mxu0 0
  %920 = vmatpush1.bf16.msra.mxu0 0
  %921 = vmatprep.subr.bf16.mxu0 0
  %922 = vmatpush1.bf16.msra.mxu0 0
  %923 = vmatprep.subr.bf16.mxu0 0
  %924 = vmatpush1.bf16.msra.mxu0 0
  %925 = vmatprep.subr.bf16.mxu0 0
  %926 = vmatpush1.bf16.msra.mxu0 0
  %927 = vmatprep.subr.bf16.mxu0 0
  %928 = vmatpush1.bf16.msra.mxu0 0
  %929 = vmatprep.subr.bf16.mxu0 0
  %930 = vmatpush1.bf16.msra.mxu0 0
  %931 = vmatprep.subr.bf16.mxu0 0
  %932 = vmatpush1.bf16.msra.mxu0 0
  %933 = vmatprep.subr.bf16.mxu0 0
  %934 = vmatpush1.bf16.msra.mxu0 0
  %935 = vmatprep.subr.bf16.mxu0 0
  %936 = vmatpush1.bf16.msra.mxu0 0
  %937 = vmatprep.subr.bf16.mxu0 0
  %938 = vmatpush1.bf16.msra.mxu0 0
  %939 = vmatprep.subr.bf16.mxu0 0
  %940 = vmatpush1.bf16.msra.mxu0 0
  %941 = vmatprep.subr.bf16.mxu0 0
  %942 = vmatpush1.bf16.msra.mxu0 0
  %943 = vmatprep.mubr.bf16.mxu0 0
  %944 = vmatmul.mubr.bf16.gmra.mrb[0].mxu0 %v850
  %v945 = vpop.f32.mrb[0].mxu0
  %v946 = vadd.f32 0.0, %v945
  %v947 = vpop.f32.mrb[0].mxu0
  %v948 = vadd.f32 0.0, %v947
  %v949 = vpop.f32.mrb[0].mxu0
  %v950 = vpop.f32.mrb[0].mxu0
  %951 = vdwg.mxu0
  %952 = vmatprep.subr.bf16.mxu0 %v868
  %953 = vmatpush1.bf16.msra.mxu0 %v865
  %954 = vmatprep.subr.bf16.mxu0 0
  %955 = vmatpush1.bf16.msra.mxu0 0
  %956 = vmatprep.subr.bf16.mxu0 0
  %957 = vmatpush1.bf16.msra.mxu0 0
  %958 = vmatprep.subr.bf16.mxu0 0
  %959 = vmatpush1.bf16.msra.mxu0 0
  %960 = vmatprep.subr.bf16.mxu0 0
  %961 = vmatpush1.bf16.msra.mxu0 0
  %962 = vmatprep.subr.bf16.mxu0 0
  %963 = vmatpush1.bf16.msra.mxu0 0
  %964 = vmatprep.subr.bf16.mxu0 0
  %965 = vmatpush1.bf16.msra.mxu0 0
  %966 = vmatprep.subr.bf16.mxu0 0
  %967 = vmatpush1.bf16.msra.mxu0 0
  %968 = vmatprep.subr.bf16.mxu0 0
  %969 = vmatpush1.bf16.msra.mxu0 0
  %970 = vmatprep.subr.bf16.mxu0 0
  %971 = vmatpush1.bf16.msra.mxu0 0
  %972 = vmatprep.subr.bf16.mxu0 0
  %973 = vmatpush1.bf16.msra.mxu0 0
  %974 = vmatprep.subr.bf16.mxu0 0
  %975 = vmatpush1.bf16.msra.mxu0 0
  %976 = vmatprep.subr.bf16.mxu0 0
  %977 = vmatpush1.bf16.msra.mxu0 0
  %978 = vmatprep.subr.bf16.mxu0 0
  %979 = vmatpush1.bf16.msra.mxu0 0
  %980 = vmatprep.subr.bf16.mxu0 0
  %981 = vmatpush1.bf16.msra.mxu0 0
  %982 = vmatprep.subr.bf16.mxu0 0
  %983 = vmatpush1.bf16.msra.mxu0 0
  %984 = vmatprep.mubr.bf16.mxu0 0
  %985 = vmatmul.mubr.bf16.gmra.mrb[0].mxu0 %v850
  %v986 = vpop.f32.mrb[0].mxu0
  %v987 = vadd.f32 0.0, %v986
  %v988 = vpop.f32.mrb[0].mxu0
  %v989 = vadd.f32 0.0, %v988
  %v990 = vpop.f32.mrb[0].mxu0
  %v991 = vpop.f32.mrb[0].mxu0
  %992 = vdwg.mxu0
  %v993 = vadd.f32 %v822, %v905
  %v994 = vadd.f32 %v823, %v907
  %v995 = vadd.f32 %v824, %v946
  %v996 = vadd.f32 %v825, %v948
  %v997 = vadd.f32 %v826, %v987
  %v998 = vadd.f32 %v827, %v989
  %v1000 = vsel %vm346, %v313, 0
  %v1003 = vsel %vm350, %v302, 0
  %v1006 = vsel %vm350, %v303, 0
  %v1009 = vsel %vm350, %v304, 0
  %v1012 = vsel %vm350, %v305, 0
  %v1015 = vsel %vm350, %v306, 0
  %v1018 = vsel %vm350, %v307, 0
  %1020 = vmatprep.subr.bf16.mxu0 %v1006
  %1021 = vmatpush1.bf16.msra.mxu0 %v1003
  %1022 = vmatprep.subr.bf16.mxu0 0
  %1023 = vmatpush1.bf16.msra.mxu0 0
  %1024 = vmatprep.subr.bf16.mxu0 0
  %1025 = vmatpush1.bf16.msra.mxu0 0
  %1026 = vmatprep.subr.bf16.mxu0 0
  %1027 = vmatpush1.bf16.msra.mxu0 0
  %1028 = vmatprep.subr.bf16.mxu0 0
  %1029 = vmatpush1.bf16.msra.mxu0 0
  %1030 = vmatprep.subr.bf16.mxu0 0
  %1031 = vmatpush1.bf16.msra.mxu0 0
  %1032 = vmatprep.subr.bf16.mxu0 0
  %1033 = vmatpush1.bf16.msra.mxu0 0
  %1034 = vmatprep.subr.bf16.mxu0 0
  %1035 = vmatpush1.bf16.msra.mxu0 0
  %1036 = vmatprep.subr.bf16.mxu0 0
  %1037 = vmatpush1.bf16.msra.mxu0 0
  %1038 = vmatprep.subr.bf16.mxu0 0
  %1039 = vmatpush1.bf16.msra.mxu0 0
  %1040 = vmatprep.subr.bf16.mxu0 0
  %1041 = vmatpush1.bf16.msra.mxu0 0
  %1042 = vmatprep.subr.bf16.mxu0 0
  %1043 = vmatpush1.bf16.msra.mxu0 0
  %1044 = vmatprep.subr.bf16.mxu0 0
  %1045 = vmatpush1.bf16.msra.mxu0 0
  %1046 = vmatprep.subr.bf16.mxu0 0
  %1047 = vmatpush1.bf16.msra.mxu0 0
  %1048 = vmatprep.subr.bf16.mxu0 0
  %1049 = vmatpush1.bf16.msra.mxu0 0
  %1050 = vmatprep.subr.bf16.mxu0 0
  %1051 = vmatpush1.bf16.msra.mxu0 0
  %1052 = vmatprep.mubr.bf16.mxu0 0
  %1053 = vmatmul.mubr.bf16.gmra.mrb[0].mxu0 %v1000
  %v1054 = vpop.f32.mrb[0].mxu0
  %v1055 = vadd.f32 0.0, %v1054
  %v1056 = vpop.f32.mrb[0].mxu0
  %v1057 = vadd.f32 0.0, %v1056
  %v1058 = vpop.f32.mrb[0].mxu0
  %v1059 = vpop.f32.mrb[0].mxu0
  %1060 = vdwg.mxu0
  %1061 = vmatprep.subr.bf16.mxu0 %v1012
  %1062 = vmatpush1.bf16.msra.mxu0 %v1009
  %1063 = vmatprep.subr.bf16.mxu0 0
  %1064 = vmatpush1.bf16.msra.mxu0 0
  %1065 = vmatprep.subr.bf16.mxu0 0
  %1066 = vmatpush1.bf16.msra.mxu0 0
  %1067 = vmatprep.subr.bf16.mxu0 0
  %1068 = vmatpush1.bf16.msra.mxu0 0
  %1069 = vmatprep.subr.bf16.mxu0 0
  %1070 = vmatpush1.bf16.msra.mxu0 0
  %1071 = vmatprep.subr.bf16.mxu0 0
  %1072 = vmatpush1.bf16.msra.mxu0 0
  %1073 = vmatprep.subr.bf16.mxu0 0
  %1074 = vmatpush1.bf16.msra.mxu0 0
  %1075 = vmatprep.subr.bf16.mxu0 0
  %1076 = vmatpush1.bf16.msra.mxu0 0
  %1077 = vmatprep.subr.bf16.mxu0 0
  %1078 = vmatpush1.bf16.msra.mxu0 0
  %1079 = vmatprep.subr.bf16.mxu0 0
  %1080 = vmatpush1.bf16.msra.mxu0 0
  %1081 = vmatprep.subr.bf16.mxu0 0
  %1082 = vmatpush1.bf16.msra.mxu0 0
  %1083 = vmatprep.subr.bf16.mxu0 0
  %1084 = vmatpush1.bf16.msra.mxu0 0
  %1085 = vmatprep.subr.bf16.mxu0 0
  %1086 = vmatpush1.bf16.msra.mxu0 0
  %1087 = vmatprep.subr.bf16.mxu0 0
  %1088 = vmatpush1.bf16.msra.mxu0 0
  %1089 = vmatprep.subr.bf16.mxu0 0
  %1090 = vmatpush1.bf16.msra.mxu0 0
  %1091 = vmatprep.subr.bf16.mxu0 0
  %1092 = vmatpush1.bf16.msra.mxu0 0
  %1093 = vmatprep.mubr.bf16.mxu0 0
  %1094 = vmatmul.mubr.bf16.gmra.mrb[0].mxu0 %v1000
  %v1095 = vpop.f32.mrb[0].mxu0
  %v1096 = vadd.f32 0.0, %v1095
  %v1097 = vpop.f32.mrb[0].mxu0
  %v1098 = vadd.f32 0.0, %v1097
  %v1099 = vpop.f32.mrb[0].mxu0
  %v1100 = vpop.f32.mrb[0].mxu0
  %1101 = vdwg.mxu0
  %1102 = vmatprep.subr.bf16.mxu0 %v1018
  %1103 = vmatpush1.bf16.msra.mxu0 %v1015
  %1104 = vmatprep.subr.bf16.mxu0 0
  %1105 = vmatpush1.bf16.msra.mxu0 0
  %1106 = vmatprep.subr.bf16.mxu0 0
  %1107 = vmatpush1.bf16.msra.mxu0 0
  %1108 = vmatprep.subr.bf16.mxu0 0
  %1109 = vmatpush1.bf16.msra.mxu0 0
  %1110 = vmatprep.subr.bf16.mxu0 0
  %1111 = vmatpush1.bf16.msra.mxu0 0
  %1112 = vmatprep.subr.bf16.mxu0 0
  %1113 = vmatpush1.bf16.msra.mxu0 0
  %1114 = vmatprep.subr.bf16.mxu0 0
  %1115 = vmatpush1.bf16.msra.mxu0 0
  %1116 = vmatprep.subr.bf16.mxu0 0
  %1117 = vmatpush1.bf16.msra.mxu0 0
  %1118 = vmatprep.subr.bf16.mxu0 0
  %1119 = vmatpush1.bf16.msra.mxu0 0
  %1120 = vmatprep.subr.bf16.mxu0 0
  %1121 = vmatpush1.bf16.msra.mxu0 0
  %1122 = vmatprep.subr.bf16.mxu0 0
  %1123 = vmatpush1.bf16.msra.mxu0 0
  %1124 = vmatprep.subr.bf16.mxu0 0
  %1125 = vmatpush1.bf16.msra.mxu0 0
  %1126 = vmatprep.subr.bf16.mxu0 0
  %1127 = vmatpush1.bf16.msra.mxu0 0
  %1128 = vmatprep.subr.bf16.mxu0 0
  %1129 = vmatpush1.bf16.msra.mxu0 0
  %1130 = vmatprep.subr.bf16.mxu0 0
  %1131 = vmatpush1.bf16.msra.mxu0 0
  %1132 = vmatprep.subr.bf16.mxu0 0
  %1133 = vmatpush1.bf16.msra.mxu0 0
  %1134 = vmatprep.mubr.bf16.mxu0 0
  %1135 = vmatmul.mubr.bf16.gmra.mrb[0].mxu0 %v1000
  %v1136 = vpop.f32.mrb[0].mxu0
  %v1137 = vadd.f32 0.0, %v1136
  %v1138 = vpop.f32.mrb[0].mxu0
  %v1139 = vadd.f32 0.0, %v1138
  %v1140 = vpop.f32.mrb[0].mxu0
  %v1141 = vpop.f32.mrb[0].mxu0
  %1142 = vdwg.mxu0
  %v1143 = vadd.f32 %v993, %v1055
  %v1144 = vadd.f32 %v994, %v1057
  %v1145 = vadd.f32 %v995, %v1096
  %v1146 = vadd.f32 %v996, %v1098
  %v1147 = vadd.f32 %v997, %v1137
  %v1148 = vadd.f32 %v998, %v1139
  %1150 = vrot.lane.b32.xlu0 %v302, 127
  %v1151 = vpop.permute.xlu0 %1150
  %1152 = vrot.lane.b32.xlu0 %v303, 127
  %v1153 = vpop.permute.xlu0 %1152
  %1154 = vrot.lane.b32.xlu0 %v304, 127
  %v1155 = vpop.permute.xlu0 %1154
  %1156 = vrot.lane.b32.xlu0 %v305, 127
  %v1157 = vpop.permute.xlu0 %1156
  %1158 = vrot.lane.b32.xlu0 %v306, 127
  %v1159 = vpop.permute.xlu0 %1158
  %1160 = vrot.lane.b32.xlu0 %v307, 127
  %v1161 = vpop.permute.xlu0 %1160
  %1162 = vrot.lane.b32.xlu0 %v308, 127
  %v1163 = vpop.permute.xlu0 %1162
  %vm1164 = vcmask 1039360
  %v1165 = vsel %vm1164, %v1151, %v1153
  %v1166 = vsel %vm1164, %v1153, %v1155
  %v1167 = vsel %vm1164, %v1155, %v1157
  %v1168 = vsel %vm1164, %v1157, %v1159
  %v1169 = vsel %vm1164, %v1159, %v1161
  %v1170 = vsel %vm1164, %v1161, %v1163
  %v1172 = vsel %vm346, %v314, 0
  %v1175 = vsel %vm350, %v1165, 0
  %v1178 = vsel %vm350, %v1166, 0
  %v1181 = vsel %vm350, %v1167, 0
  %v1184 = vsel %vm350, %v1168, 0
  %v1187 = vsel %vm350, %v1169, 0
  %v1190 = vsel %vm350, %v1170, 0
  %1192 = vmatprep.subr.bf16.mxu0 %v1178
  %1193 = vmatpush1.bf16.msra.mxu0 %v1175
  %1194 = vmatprep.subr.bf16.mxu0 0
  %1195 = vmatpush1.bf16.msra.mxu0 0
  %1196 = vmatprep.subr.bf16.mxu0 0
  %1197 = vmatpush1.bf16.msra.mxu0 0
  %1198 = vmatprep.subr.bf16.mxu0 0
  %1199 = vmatpush1.bf16.msra.mxu0 0
  %1200 = vmatprep.subr.bf16.mxu0 0
  %1201 = vmatpush1.bf16.msra.mxu0 0
  %1202 = vmatprep.subr.bf16.mxu0 0
  %1203 = vmatpush1.bf16.msra.mxu0 0
  %1204 = vmatprep.subr.bf16.mxu0 0
  %1205 = vmatpush1.bf16.msra.mxu0 0
  %1206 = vmatprep.subr.bf16.mxu0 0
  %1207 = vmatpush1.bf16.msra.mxu0 0
  %1208 = vmatprep.subr.bf16.mxu0 0
  %1209 = vmatpush1.bf16.msra.mxu0 0
  %1210 = vmatprep.subr.bf16.mxu0 0
  %1211 = vmatpush1.bf16.msra.mxu0 0
  %1212 = vmatprep.subr.bf16.mxu0 0
  %1213 = vmatpush1.bf16.msra.mxu0 0
  %1214 = vmatprep.subr.bf16.mxu0 0
  %1215 = vmatpush1.bf16.msra.mxu0 0
  %1216 = vmatprep.subr.bf16.mxu0 0
  %1217 = vmatpush1.bf16.msra.mxu0 0
  %1218 = vmatprep.subr.bf16.mxu0 0
  %1219 = vmatpush1.bf16.msra.mxu0 0
  %1220 = vmatprep.subr.bf16.mxu0 0
  %1221 = vmatpush1.bf16.msra.mxu0 0
  %1222 = vmatprep.subr.bf16.mxu0 0
  %1223 = vmatpush1.bf16.msra.mxu0 0
  %1224 = vmatprep.mubr.bf16.mxu0 0
  %1225 = vmatmul.mubr.bf16.gmra.mrb[0].mxu0 %v1172
  %v1226 = vpop.f32.mrb[0].mxu0
  %v1227 = vadd.f32 0.0, %v1226
  %v1228 = vpop.f32.mrb[0].mxu0
  %v1229 = vadd.f32 0.0, %v1228
  %v1230 = vpop.f32.mrb[0].mxu0
  %v1231 = vpop.f32.mrb[0].mxu0
  %1232 = vdwg.mxu0
  %1233 = vmatprep.subr.bf16.mxu0 %v1184
  %1234 = vmatpush1.bf16.msra.mxu0 %v1181
  %1235 = vmatprep.subr.bf16.mxu0 0
  %1236 = vmatpush1.bf16.msra.mxu0 0
  %1237 = vmatprep.subr.bf16.mxu0 0
  %1238 = vmatpush1.bf16.msra.mxu0 0
  %1239 = vmatprep.subr.bf16.mxu0 0
  %1240 = vmatpush1.bf16.msra.mxu0 0
  %1241 = vmatprep.subr.bf16.mxu0 0
  %1242 = vmatpush1.bf16.msra.mxu0 0
  %1243 = vmatprep.subr.bf16.mxu0 0
  %1244 = vmatpush1.bf16.msra.mxu0 0
  %1245 = vmatprep.subr.bf16.mxu0 0
  %1246 = vmatpush1.bf16.msra.mxu0 0
  %1247 = vmatprep.subr.bf16.mxu0 0
  %1248 = vmatpush1.bf16.msra.mxu0 0
  %1249 = vmatprep.subr.bf16.mxu0 0
  %1250 = vmatpush1.bf16.msra.mxu0 0
  %1251 = vmatprep.subr.bf16.mxu0 0
  %1252 = vmatpush1.bf16.msra.mxu0 0
  %1253 = vmatprep.subr.bf16.mxu0 0
  %1254 = vmatpush1.bf16.msra.mxu0 0
  %1255 = vmatprep.subr.bf16.mxu0 0
  %1256 = vmatpush1.bf16.msra.mxu0 0
  %1257 = vmatprep.subr.bf16.mxu0 0
  %1258 = vmatpush1.bf16.msra.mxu0 0
  %1259 = vmatprep.subr.bf16.mxu0 0
  %1260 = vmatpush1.bf16.msra.mxu0 0
  %1261 = vmatprep.subr.bf16.mxu0 0
  %1262 = vmatpush1.bf16.msra.mxu0 0
  %1263 = vmatprep.subr.bf16.mxu0 0
  %1264 = vmatpush1.bf16.msra.mxu0 0
  %1265 = vmatprep.mubr.bf16.mxu0 0
  %1266 = vmatmul.mubr.bf16.gmra.mrb[0].mxu0 %v1172
  %v1267 = vpop.f32.mrb[0].mxu0
  %v1268 = vadd.f32 0.0, %v1267
  %v1269 = vpop.f32.mrb[0].mxu0
  %v1270 = vadd.f32 0.0, %v1269
  %v1271 = vpop.f32.mrb[0].mxu0
  %v1272 = vpop.f32.mrb[0].mxu0
  %1273 = vdwg.mxu0
  %1274 = vmatprep.subr.bf16.mxu0 %v1190
  %1275 = vmatpush1.bf16.msra.mxu0 %v1187
  %1276 = vmatprep.subr.bf16.mxu0 0
  %1277 = vmatpush1.bf16.msra.mxu0 0
  %1278 = vmatprep.subr.bf16.mxu0 0
  %1279 = vmatpush1.bf16.msra.mxu0 0
  %1280 = vmatprep.subr.bf16.mxu0 0
  %1281 = vmatpush1.bf16.msra.mxu0 0
  %1282 = vmatprep.subr.bf16.mxu0 0
  %1283 = vmatpush1.bf16.msra.mxu0 0
  %1284 = vmatprep.subr.bf16.mxu0 0
  %1285 = vmatpush1.bf16.msra.mxu0 0
  %1286 = vmatprep.subr.bf16.mxu0 0
  %1287 = vmatpush1.bf16.msra.mxu0 0
  %1288 = vmatprep.subr.bf16.mxu0 0
  %1289 = vmatpush1.bf16.msra.mxu0 0
  %1290 = vmatprep.subr.bf16.mxu0 0
  %1291 = vmatpush1.bf16.msra.mxu0 0
  %1292 = vmatprep.subr.bf16.mxu0 0
  %1293 = vmatpush1.bf16.msra.mxu0 0
  %1294 = vmatprep.subr.bf16.mxu0 0
  %1295 = vmatpush1.bf16.msra.mxu0 0
  %1296 = vmatprep.subr.bf16.mxu0 0
  %1297 = vmatpush1.bf16.msra.mxu0 0
  %1298 = vmatprep.subr.bf16.mxu0 0
  %1299 = vmatpush1.bf16.msra.mxu0 0
  %1300 = vmatprep.subr.bf16.mxu0 0
  %1301 = vmatpush1.bf16.msra.mxu0 0
  %1302 = vmatprep.subr.bf16.mxu0 0
  %1303 = vmatpush1.bf16.msra.mxu0 0
  %1304 = vmatprep.subr.bf16.mxu0 0
  %1305 = vmatpush1.bf16.msra.mxu0 0
  %1306 = vmatprep.mubr.bf16.mxu0 0
  %1307 = vmatmul.mubr.bf16.gmra.mrb[0].mxu0 %v1172
  %v1308 = vpop.f32.mrb[0].mxu0
  %v1309 = vadd.f32 0.0, %v1308
  %v1310 = vpop.f32.mrb[0].mxu0
  %v1311 = vadd.f32 0.0, %v1310
  %v1312 = vpop.f32.mrb[0].mxu0
  %v1313 = vpop.f32.mrb[0].mxu0
  %1314 = vdwg.mxu0
  %v1315 = vadd.f32 %v1143, %v1227
  %v1316 = vadd.f32 %v1144, %v1229
  %v1317 = vadd.f32 %v1145, %v1268
  %v1318 = vadd.f32 %v1146, %v1270
  %v1319 = vadd.f32 %v1147, %v1309
  %v1320 = vadd.f32 %v1148, %v1311
  %1321 = vrot.lane.b32.xlu0 %v302, 111
  %v1322 = vpop.permute.xlu0 %1321
  %1323 = vrot.lane.b32.xlu0 %v303, 111
  %v1324 = vpop.permute.xlu0 %1323
  %1325 = vrot.lane.b32.xlu0 %v304, 111
  %v1326 = vpop.permute.xlu0 %1325
  %1327 = vrot.lane.b32.xlu0 %v305, 111
  %v1328 = vpop.permute.xlu0 %1327
  %1329 = vrot.lane.b32.xlu0 %v306, 111
  %v1330 = vpop.permute.xlu0 %1329
  %1331 = vrot.lane.b32.xlu0 %v307, 111
  %v1332 = vpop.permute.xlu0 %1331
  %1333 = vrot.lane.b32.xlu0 %v308, 111
  %v1334 = vpop.permute.xlu0 %1333
  %vm1335 = vcmask 908288
  %v1336 = vsel %vm1335, %v1322, %v1324
  %v1337 = vsel %vm1335, %v1324, %v1326
  %v1338 = vsel %vm1335, %v1326, %v1328
  %v1339 = vsel %vm1335, %v1328, %v1330
  %v1340 = vsel %vm1335, %v1330, %v1332
  %v1341 = vsel %vm1335, %v1332, %v1334
  %v1343 = vsel %vm346, %v315, 0
  %v1346 = vsel %vm350, %v1336, 0
  %v1349 = vsel %vm350, %v1337, 0
  %v1352 = vsel %vm350, %v1338, 0
  %v1355 = vsel %vm350, %v1339, 0
  %v1358 = vsel %vm350, %v1340, 0
  %v1361 = vsel %vm350, %v1341, 0
  %1363 = vmatprep.subr.bf16.mxu0 %v1349
  %1364 = vmatpush1.bf16.msra.mxu0 %v1346
  %1365 = vmatprep.subr.bf16.mxu0 0
  %1366 = vmatpush1.bf16.msra.mxu0 0
  %1367 = vmatprep.subr.bf16.mxu0 0
  %1368 = vmatpush1.bf16.msra.mxu0 0
  %1369 = vmatprep.subr.bf16.mxu0 0
  %1370 = vmatpush1.bf16.msra.mxu0 0
  %1371 = vmatprep.subr.bf16.mxu0 0
  %1372 = vmatpush1.bf16.msra.mxu0 0
  %1373 = vmatprep.subr.bf16.mxu0 0
  %1374 = vmatpush1.bf16.msra.mxu0 0
  %1375 = vmatprep.subr.bf16.mxu0 0
  %1376 = vmatpush1.bf16.msra.mxu0 0
  %1377 = vmatprep.subr.bf16.mxu0 0
  %1378 = vmatpush1.bf16.msra.mxu0 0
  %1379 = vmatprep.subr.bf16.mxu0 0
  %1380 = vmatpush1.bf16.msra.mxu0 0
  %1381 = vmatprep.subr.bf16.mxu0 0
  %1382 = vmatpush1.bf16.msra.mxu0 0
  %1383 = vmatprep.subr.bf16.mxu0 0
  %1384 = vmatpush1.bf16.msra.mxu0 0
  %1385 = vmatprep.subr.bf16.mxu0 0
  %1386 = vmatpush1.bf16.msra.mxu0 0
  %1387 = vmatprep.subr.bf16.mxu0 0
  %1388 = vmatpush1.bf16.msra.mxu0 0
  %1389 = vmatprep.subr.bf16.mxu0 0
  %1390 = vmatpush1.bf16.msra.mxu0 0
  %1391 = vmatprep.subr.bf16.mxu0 0
  %1392 = vmatpush1.bf16.msra.mxu0 0
  %1393 = vmatprep.subr.bf16.mxu0 0
  %1394 = vmatpush1.bf16.msra.mxu0 0
  %1395 = vmatprep.mubr.bf16.mxu0 0
  %1396 = vmatmul.mubr.bf16.gmra.mrb[0].mxu0 %v1343
  %v1397 = vpop.f32.mrb[0].mxu0
  %v1398 = vadd.f32 0.0, %v1397
  %v1399 = vpop.f32.mrb[0].mxu0
  %v1400 = vadd.f32 0.0, %v1399
  %v1401 = vpop.f32.mrb[0].mxu0
  %v1402 = vpop.f32.mrb[0].mxu0
  %1403 = vdwg.mxu0
  %1404 = vmatprep.subr.bf16.mxu0 %v1355
  %1405 = vmatpush1.bf16.msra.mxu0 %v1352
  %1406 = vmatprep.subr.bf16.mxu0 0
  %1407 = vmatpush1.bf16.msra.mxu0 0
  %1408 = vmatprep.subr.bf16.mxu0 0
  %1409 = vmatpush1.bf16.msra.mxu0 0
  %1410 = vmatprep.subr.bf16.mxu0 0
  %1411 = vmatpush1.bf16.msra.mxu0 0
  %1412 = vmatprep.subr.bf16.mxu0 0
  %1413 = vmatpush1.bf16.msra.mxu0 0
  %1414 = vmatprep.subr.bf16.mxu0 0
  %1415 = vmatpush1.bf16.msra.mxu0 0
  %1416 = vmatprep.subr.bf16.mxu0 0
  %1417 = vmatpush1.bf16.msra.mxu0 0
  %1418 = vmatprep.subr.bf16.mxu0 0
  %1419 = vmatpush1.bf16.msra.mxu0 0
  %1420 = vmatprep.subr.bf16.mxu0 0
  %1421 = vmatpush1.bf16.msra.mxu0 0
  %1422 = vmatprep.subr.bf16.mxu0 0
  %1423 = vmatpush1.bf16.msra.mxu0 0
  %1424 = vmatprep.subr.bf16.mxu0 0
  %1425 = vmatpush1.bf16.msra.mxu0 0
  %1426 = vmatprep.subr.bf16.mxu0 0
  %1427 = vmatpush1.bf16.msra.mxu0 0
  %1428 = vmatprep.subr.bf16.mxu0 0
  %1429 = vmatpush1.bf16.msra.mxu0 0
  %1430 = vmatprep.subr.bf16.mxu0 0
  %1431 = vmatpush1.bf16.msra.mxu0 0
  %1432 = vmatprep.subr.bf16.mxu0 0
  %1433 = vmatpush1.bf16.msra.mxu0 0
  %1434 = vmatprep.subr.bf16.mxu0 0
  %1435 = vmatpush1.bf16.msra.mxu0 0
  %1436 = vmatprep.mubr.bf16.mxu0 0
  %1437 = vmatmul.mubr.bf16.gmra.mrb[0].mxu0 %v1343
  %v1438 = vpop.f32.mrb[0].mxu0
  %v1439 = vadd.f32 0.0, %v1438
  %v1440 = vpop.f32.mrb[0].mxu0
  %v1441 = vadd.f32 0.0, %v1440
  %v1442 = vpop.f32.mrb[0].mxu0
  %v1443 = vpop.f32.mrb[0].mxu0
  %1444 = vdwg.mxu0
  %1445 = vmatprep.subr.bf16.mxu0 %v1361
  %1446 = vmatpush1.bf16.msra.mxu0 %v1358
  %1447 = vmatprep.subr.bf16.mxu0 0
  %1448 = vmatpush1.bf16.msra.mxu0 0
  %1449 = vmatprep.subr.bf16.mxu0 0
  %1450 = vmatpush1.bf16.msra.mxu0 0
  %1451 = vmatprep.subr.bf16.mxu0 0
  %1452 = vmatpush1.bf16.msra.mxu0 0
  %1453 = vmatprep.subr.bf16.mxu0 0
  %1454 = vmatpush1.bf16.msra.mxu0 0
  %1455 = vmatprep.subr.bf16.mxu0 0
  %1456 = vmatpush1.bf16.msra.mxu0 0
  %1457 = vmatprep.subr.bf16.mxu0 0
  %1458 = vmatpush1.bf16.msra.mxu0 0
  %1459 = vmatprep.subr.bf16.mxu0 0
  %1460 = vmatpush1.bf16.msra.mxu0 0
  %1461 = vmatprep.subr.bf16.mxu0 0
  %1462 = vmatpush1.bf16.msra.mxu0 0
  %1463 = vmatprep.subr.bf16.mxu0 0
  %1464 = vmatpush1.bf16.msra.mxu0 0
  %1465 = vmatprep.subr.bf16.mxu0 0
  %1466 = vmatpush1.bf16.msra.mxu0 0
  %1467 = vmatprep.subr.bf16.mxu0 0
  %1468 = vmatpush1.bf16.msra.mxu0 0
  %1469 = vmatprep.subr.bf16.mxu0 0
  %1470 = vmatpush1.bf16.msra.mxu0 0
  %1471 = vmatprep.subr.bf16.mxu0 0
  %1472 = vmatpush1.bf16.msra.mxu0 0
  %1473 = vmatprep.subr.bf16.mxu0 0
  %1474 = vmatpush1.bf16.msra.mxu0 0
  %1475 = vmatprep.subr.bf16.mxu0 0
  %1476 = vmatpush1.bf16.msra.mxu0 0
  %1477 = vmatprep.mubr.bf16.mxu0 0
  %1478 = vmatmul.mubr.bf16.gmra.mrb[0].mxu0 %v1343
  %v1479 = vpop.f32.mrb[0].mxu0
  %v1480 = vadd.f32 0.0, %v1479
  %v1481 = vpop.f32.mrb[0].mxu0
  %v1482 = vadd.f32 0.0, %v1481
  %v1483 = vpop.f32.mrb[0].mxu0
  %v1484 = vpop.f32.mrb[0].mxu0
  %1485 = vdwg.mxu0
  %v1486 = vadd.f32 %v1315, %v1398
  %v1487 = vadd.f32 %v1316, %v1400
  %v1488 = vadd.f32 %v1317, %v1439
  %v1489 = vadd.f32 %v1318, %v1441
  %v1490 = vadd.f32 %v1319, %v1480
  %v1491 = vadd.f32 %v1320, %v1482
  %1492 = vrot.lane.b32.xlu0 %v302, 110
  %v1493 = vpop.permute.xlu0 %1492
  %1494 = vrot.lane.b32.xlu0 %v303, 110
  %v1495 = vpop.permute.xlu0 %1494
  %1496 = vrot.lane.b32.xlu0 %v304, 110
  %v1497 = vpop.permute.xlu0 %1496
  %1498 = vrot.lane.b32.xlu0 %v305, 110
  %v1499 = vpop.permute.xlu0 %1498
  %1500 = vrot.lane.b32.xlu0 %v306, 110
  %v1501 = vpop.permute.xlu0 %1500
  %1502 = vrot.lane.b32.xlu0 %v307, 110
  %v1503 = vpop.permute.xlu0 %1502
  %1504 = vrot.lane.b32.xlu0 %v308, 110
  %v1505 = vpop.permute.xlu0 %1504
  %vm1506 = vcmask 900096
  %v1507 = vsel %vm1506, %v1493, %v1495
  %v1508 = vsel %vm1506, %v1495, %v1497
  %v1509 = vsel %vm1506, %v1497, %v1499
  %v1510 = vsel %vm1506, %v1499, %v1501
  %v1511 = vsel %vm1506, %v1501, %v1503
  %v1512 = vsel %vm1506, %v1503, %v1505
  %v1514 = vsel %vm346, %v316, 0
  %v1517 = vsel %vm350, %v1507, 0
  %v1520 = vsel %vm350, %v1508, 0
  %v1523 = vsel %vm350, %v1509, 0
  %v1526 = vsel %vm350, %v1510, 0
  %v1529 = vsel %vm350, %v1511, 0
  %v1532 = vsel %vm350, %v1512, 0
  %1534 = vmatprep.subr.bf16.mxu0 %v1520
  %1535 = vmatpush1.bf16.msra.mxu0 %v1517
  %1536 = vmatprep.subr.bf16.mxu0 0
  %1537 = vmatpush1.bf16.msra.mxu0 0
  %1538 = vmatprep.subr.bf16.mxu0 0
  %1539 = vmatpush1.bf16.msra.mxu0 0
  %1540 = vmatprep.subr.bf16.mxu0 0
  %1541 = vmatpush1.bf16.msra.mxu0 0
  %1542 = vmatprep.subr.bf16.mxu0 0
  %1543 = vmatpush1.bf16.msra.mxu0 0
  %1544 = vmatprep.subr.bf16.mxu0 0
  %1545 = vmatpush1.bf16.msra.mxu0 0
  %1546 = vmatprep.subr.bf16.mxu0 0
  %1547 = vmatpush1.bf16.msra.mxu0 0
  %1548 = vmatprep.subr.bf16.mxu0 0
  %1549 = vmatpush1.bf16.msra.mxu0 0
  %1550 = vmatprep.subr.bf16.mxu0 0
  %1551 = vmatpush1.bf16.msra.mxu0 0
  %1552 = vmatprep.subr.bf16.mxu0 0
  %1553 = vmatpush1.bf16.msra.mxu0 0
  %1554 = vmatprep.subr.bf16.mxu0 0
  %1555 = vmatpush1.bf16.msra.mxu0 0
  %1556 = vmatprep.subr.bf16.mxu0 0
  %1557 = vmatpush1.bf16.msra.mxu0 0
  %1558 = vmatprep.subr.bf16.mxu0 0
  %1559 = vmatpush1.bf16.msra.mxu0 0
  %1560 = vmatprep.subr.bf16.mxu0 0
  %1561 = vmatpush1.bf16.msra.mxu0 0
  %1562 = vmatprep.subr.bf16.mxu0 0
  %1563 = vmatpush1.bf16.msra.mxu0 0
  %1564 = vmatprep.subr.bf16.mxu0 0
  %1565 = vmatpush1.bf16.msra.mxu0 0
  %1566 = vmatprep.mubr.bf16.mxu0 0
  %1567 = vmatmul.mubr.bf16.gmra.mrb[0].mxu0 %v1514
  %v1568 = vpop.f32.mrb[0].mxu0
  %v1569 = vadd.f32 0.0, %v1568
  %v1570 = vpop.f32.mrb[0].mxu0
  %v1571 = vadd.f32 0.0, %v1570
  %v1572 = vpop.f32.mrb[0].mxu0
  %v1573 = vpop.f32.mrb[0].mxu0
  %1574 = vdwg.mxu0
  %1575 = vmatprep.subr.bf16.mxu0 %v1526
  %1576 = vmatpush1.bf16.msra.mxu0 %v1523
  %1577 = vmatprep.subr.bf16.mxu0 0
  %1578 = vmatpush1.bf16.msra.mxu0 0
  %1579 = vmatprep.subr.bf16.mxu0 0
  %1580 = vmatpush1.bf16.msra.mxu0 0
  %1581 = vmatprep.subr.bf16.mxu0 0
  %1582 = vmatpush1.bf16.msra.mxu0 0
  %1583 = vmatprep.subr.bf16.mxu0 0
  %1584 = vmatpush1.bf16.msra.mxu0 0
  %1585 = vmatprep.subr.bf16.mxu0 0
  %1586 = vmatpush1.bf16.msra.mxu0 0
  %1587 = vmatprep.subr.bf16.mxu0 0
  %1588 = vmatpush1.bf16.msra.mxu0 0
  %1589 = vmatprep.subr.bf16.mxu0 0
  %1590 = vmatpush1.bf16.msra.mxu0 0
  %1591 = vmatprep.subr.bf16.mxu0 0
  %1592 = vmatpush1.bf16.msra.mxu0 0
  %1593 = vmatprep.subr.bf16.mxu0 0
  %1594 = vmatpush1.bf16.msra.mxu0 0
  %1595 = vmatprep.subr.bf16.mxu0 0
  %1596 = vmatpush1.bf16.msra.mxu0 0
  %1597 = vmatprep.subr.bf16.mxu0 0
  %1598 = vmatpush1.bf16.msra.mxu0 0
  %1599 = vmatprep.subr.bf16.mxu0 0
  %1600 = vmatpush1.bf16.msra.mxu0 0
  %1601 = vmatprep.subr.bf16.mxu0 0
  %1602 = vmatpush1.bf16.msra.mxu0 0
  %1603 = vmatprep.subr.bf16.mxu0 0
  %1604 = vmatpush1.bf16.msra.mxu0 0
  %1605 = vmatprep.subr.bf16.mxu0 0
  %1606 = vmatpush1.bf16.msra.mxu0 0
  %1607 = vmatprep.mubr.bf16.mxu0 0
  %1608 = vmatmul.mubr.bf16.gmra.mrb[0].mxu0 %v1514
  %v1609 = vpop.f32.mrb[0].mxu0
  %v1610 = vadd.f32 0.0, %v1609
  %v1611 = vpop.f32.mrb[0].mxu0
  %v1612 = vadd.f32 0.0, %v1611
  %v1613 = vpop.f32.mrb[0].mxu0
  %v1614 = vpop.f32.mrb[0].mxu0
  %1615 = vdwg.mxu0
  %1616 = vmatprep.subr.bf16.mxu0 %v1532
  %1617 = vmatpush1.bf16.msra.mxu0 %v1529
  %1618 = vmatprep.subr.bf16.mxu0 0
  %1619 = vmatpush1.bf16.msra.mxu0 0
  %1620 = vmatprep.subr.bf16.mxu0 0
  %1621 = vmatpush1.bf16.msra.mxu0 0
  %1622 = vmatprep.subr.bf16.mxu0 0
  %1623 = vmatpush1.bf16.msra.mxu0 0
  %1624 = vmatprep.subr.bf16.mxu0 0
  %1625 = vmatpush1.bf16.msra.mxu0 0
  %1626 = vmatprep.subr.bf16.mxu0 0
  %1627 = vmatpush1.bf16.msra.mxu0 0
  %1628 = vmatprep.subr.bf16.mxu0 0
  %1629 = vmatpush1.bf16.msra.mxu0 0
  %1630 = vmatprep.subr.bf16.mxu0 0
  %1631 = vmatpush1.bf16.msra.mxu0 0
  %1632 = vmatprep.subr.bf16.mxu0 0
  %1633 = vmatpush1.bf16.msra.mxu0 0
  %1634 = vmatprep.subr.bf16.mxu0 0
  %1635 = vmatpush1.bf16.msra.mxu0 0
  %1636 = vmatprep.subr.bf16.mxu0 0
  %1637 = vmatpush1.bf16.msra.mxu0 0
  %1638 = vmatprep.subr.bf16.mxu0 0
  %1639 = vmatpush1.bf16.msra.mxu0 0
  %1640 = vmatprep.subr.bf16.mxu0 0
  %1641 = vmatpush1.bf16.msra.mxu0 0
  %1642 = vmatprep.subr.bf16.mxu0 0
  %1643 = vmatpush1.bf16.msra.mxu0 0
  %1644 = vmatprep.subr.bf16.mxu0 0
  %1645 = vmatpush1.bf16.msra.mxu0 0
  %1646 = vmatprep.subr.bf16.mxu0 0
  %1647 = vmatpush1.bf16.msra.mxu0 0
  %1648 = vmatprep.mubr.bf16.mxu0 0
  %1649 = vmatmul.mubr.bf16.gmra.mrb[0].mxu0 %v1514
  %v1650 = vpop.f32.mrb[0].mxu0
  %v1651 = vadd.f32 0.0, %v1650
  %v1652 = vpop.f32.mrb[0].mxu0
  %v1653 = vadd.f32 0.0, %v1652
  %v1654 = vpop.f32.mrb[0].mxu0
  %v1655 = vpop.f32.mrb[0].mxu0
  %1656 = vdwg.mxu0
  %v1657 = vadd.f32 %v1486, %v1569
  %v1658 = vadd.f32 %v1487, %v1571
  %v1659 = vadd.f32 %v1488, %v1610
  %v1660 = vadd.f32 %v1489, %v1612
  %v1661 = vadd.f32 %v1490, %v1651
  %v1662 = vadd.f32 %v1491, %v1653
  %1663 = vrot.lane.b32.xlu0 %v302, 109
  %v1664 = vpop.permute.xlu0 %1663
  %1665 = vrot.lane.b32.xlu0 %v303, 109
  %v1666 = vpop.permute.xlu0 %1665
  %1667 = vrot.lane.b32.xlu0 %v304, 109
  %v1668 = vpop.permute.xlu0 %1667
  %1669 = vrot.lane.b32.xlu0 %v305, 109
  %v1670 = vpop.permute.xlu0 %1669
  %1671 = vrot.lane.b32.xlu0 %v306, 109
  %v1672 = vpop.permute.xlu0 %1671
  %1673 = vrot.lane.b32.xlu0 %v307, 109
  %v1674 = vpop.permute.xlu0 %1673
  %1675 = vrot.lane.b32.xlu0 %v308, 109
  %v1676 = vpop.permute.xlu0 %1675
  %vm1677 = vcmask 891904
  %v1678 = vsel %vm1677, %v1664, %v1666
  %v1679 = vsel %vm1677, %v1666, %v1668
  %v1680 = vsel %vm1677, %v1668, %v1670
  %v1681 = vsel %vm1677, %v1670, %v1672
  %v1682 = vsel %vm1677, %v1672, %v1674
  %v1683 = vsel %vm1677, %v1674, %v1676
  %v1685 = vsel %vm346, %v317, 0
  %v1688 = vsel %vm350, %v1678, 0
  %v1691 = vsel %vm350, %v1679, 0
  %v1694 = vsel %vm350, %v1680, 0
  %v1697 = vsel %vm350, %v1681, 0
  %v1700 = vsel %vm350, %v1682, 0
  %v1703 = vsel %vm350, %v1683, 0
  %1705 = vmatprep.subr.bf16.mxu0 %v1691
  %1706 = vmatpush1.bf16.msra.mxu0 %v1688
  %1707 = vmatprep.subr.bf16.mxu0 0
  %1708 = vmatpush1.bf16.msra.mxu0 0
  %1709 = vmatprep.subr.bf16.mxu0 0
  %1710 = vmatpush1.bf16.msra.mxu0 0
  %1711 = vmatprep.subr.bf16.mxu0 0
  %1712 = vmatpush1.bf16.msra.mxu0 0
  %1713 = vmatprep.subr.bf16.mxu0 0
  %1714 = vmatpush1.bf16.msra.mxu0 0
  %1715 = vmatprep.subr.bf16.mxu0 0
  %1716 = vmatpush1.bf16.msra.mxu0 0
  %1717 = vmatprep.subr.bf16.mxu0 0
  %1718 = vmatpush1.bf16.msra.mxu0 0
  %1719 = vmatprep.subr.bf16.mxu0 0
  %1720 = vmatpush1.bf16.msra.mxu0 0
  %1721 = vmatprep.subr.bf16.mxu0 0
  %1722 = vmatpush1.bf16.msra.mxu0 0
  %1723 = vmatprep.subr.bf16.mxu0 0
  %1724 = vmatpush1.bf16.msra.mxu0 0
  %1725 = vmatprep.subr.bf16.mxu0 0
  %1726 = vmatpush1.bf16.msra.mxu0 0
  %1727 = vmatprep.subr.bf16.mxu0 0
  %1728 = vmatpush1.bf16.msra.mxu0 0
  %1729 = vmatprep.subr.bf16.mxu0 0
  %1730 = vmatpush1.bf16.msra.mxu0 0
  %1731 = vmatprep.subr.bf16.mxu0 0
  %1732 = vmatpush1.bf16.msra.mxu0 0
  %1733 = vmatprep.subr.bf16.mxu0 0
  %1734 = vmatpush1.bf16.msra.mxu0 0
  %1735 = vmatprep.subr.bf16.mxu0 0
  %1736 = vmatpush1.bf16.msra.mxu0 0
  %1737 = vmatprep.mubr.bf16.mxu0 0
  %1738 = vmatmul.mubr.bf16.gmra.mrb[0].mxu0 %v1685
  %v1739 = vpop.f32.mrb[0].mxu0
  %v1740 = vadd.f32 0.0, %v1739
  %v1741 = vpop.f32.mrb[0].mxu0
  %v1742 = vadd.f32 0.0, %v1741
  %v1743 = vpop.f32.mrb[0].mxu0
  %v1744 = vpop.f32.mrb[0].mxu0
  %1745 = vdwg.mxu0
  %1746 = vmatprep.subr.bf16.mxu0 %v1697
  %1747 = vmatpush1.bf16.msra.mxu0 %v1694
  %1748 = vmatprep.subr.bf16.mxu0 0
  %1749 = vmatpush1.bf16.msra.mxu0 0
  %1750 = vmatprep.subr.bf16.mxu0 0
  %1751 = vmatpush1.bf16.msra.mxu0 0
  %1752 = vmatprep.subr.bf16.mxu0 0
  %1753 = vmatpush1.bf16.msra.mxu0 0
  %1754 = vmatprep.subr.bf16.mxu0 0
  %1755 = vmatpush1.bf16.msra.mxu0 0
  %1756 = vmatprep.subr.bf16.mxu0 0
  %1757 = vmatpush1.bf16.msra.mxu0 0
  %1758 = vmatprep.subr.bf16.mxu0 0
  %1759 = vmatpush1.bf16.msra.mxu0 0
  %1760 = vmatprep.subr.bf16.mxu0 0
  %1761 = vmatpush1.bf16.msra.mxu0 0
  %1762 = vmatprep.subr.bf16.mxu0 0
  %1763 = vmatpush1.bf16.msra.mxu0 0
  %1764 = vmatprep.subr.bf16.mxu0 0
  %1765 = vmatpush1.bf16.msra.mxu0 0
  %1766 = vmatprep.subr.bf16.mxu0 0
  %1767 = vmatpush1.bf16.msra.mxu0 0
  %1768 = vmatprep.subr.bf16.mxu0 0
  %1769 = vmatpush1.bf16.msra.mxu0 0
  %1770 = vmatprep.subr.bf16.mxu0 0
  %1771 = vmatpush1.bf16.msra.mxu0 0
  %1772 = vmatprep.subr.bf16.mxu0 0
  %1773 = vmatpush1.bf16.msra.mxu0 0
  %1774 = vmatprep.subr.bf16.mxu0 0
  %1775 = vmatpush1.bf16.msra.mxu0 0
  %1776 = vmatprep.subr.bf16.mxu0 0
  %1777 = vmatpush1.bf16.msra.mxu0 0
  %1778 = vmatprep.mubr.bf16.mxu0 0
  %1779 = vmatmul.mubr.bf16.gmra.mrb[0].mxu0 %v1685
  %v1780 = vpop.f32.mrb[0].mxu0
  %v1781 = vadd.f32 0.0, %v1780
  %v1782 = vpop.f32.mrb[0].mxu0
  %v1783 = vadd.f32 0.0, %v1782
  %v1784 = vpop.f32.mrb[0].mxu0
  %v1785 = vpop.f32.mrb[0].mxu0
  %1786 = vdwg.mxu0
  %1787 = vmatprep.subr.bf16.mxu0 %v1703
  %1788 = vmatpush1.bf16.msra.mxu0 %v1700
  %1789 = vmatprep.subr.bf16.mxu0 0
  %1790 = vmatpush1.bf16.msra.mxu0 0
  %1791 = vmatprep.subr.bf16.mxu0 0
  %1792 = vmatpush1.bf16.msra.mxu0 0
  %1793 = vmatprep.subr.bf16.mxu0 0
  %1794 = vmatpush1.bf16.msra.mxu0 0
  %1795 = vmatprep.subr.bf16.mxu0 0
  %1796 = vmatpush1.bf16.msra.mxu0 0
  %1797 = vmatprep.subr.bf16.mxu0 0
  %1798 = vmatpush1.bf16.msra.mxu0 0
  %1799 = vmatprep.subr.bf16.mxu0 0
  %1800 = vmatpush1.bf16.msra.mxu0 0
  %1801 = vmatprep.subr.bf16.mxu0 0
  %1802 = vmatpush1.bf16.msra.mxu0 0
  %1803 = vmatprep.subr.bf16.mxu0 0
  %1804 = vmatpush1.bf16.msra.mxu0 0
  %1805 = vmatprep.subr.bf16.mxu0 0
  %1806 = vmatpush1.bf16.msra.mxu0 0
  %1807 = vmatprep.subr.bf16.mxu0 0
  %1808 = vmatpush1.bf16.msra.mxu0 0
  %1809 = vmatprep.subr.bf16.mxu0 0
  %1810 = vmatpush1.bf16.msra.mxu0 0
  %1811 = vmatprep.subr.bf16.mxu0 0
  %1812 = vmatpush1.bf16.msra.mxu0 0
  %1813 = vmatprep.subr.bf16.mxu0 0
  %1814 = vmatpush1.bf16.msra.mxu0 0
  %1815 = vmatprep.subr.bf16.mxu0 0
  %1816 = vmatpush1.bf16.msra.mxu0 0
  %1817 = vmatprep.subr.bf16.mxu0 0
  %1818 = vmatpush1.bf16.msra.mxu0 0
  %1819 = vmatprep.mubr.bf16.mxu0 0
  %1820 = vmatmul.mubr.bf16.gmra.mrb[0].mxu0 %v1685
  %v1821 = vpop.f32.mrb[0].mxu0
  %v1822 = vadd.f32 0.0, %v1821
  %v1823 = vpop.f32.mrb[0].mxu0
  %v1824 = vadd.f32 0.0, %v1823
  %v1825 = vpop.f32.mrb[0].mxu0
  %v1826 = vpop.f32.mrb[0].mxu0
  %1827 = vdwg.mxu0
  %v1828 = vadd.f32 %v1657, %v1740
  %v1829 = vadd.f32 %v1658, %v1742
  %v1830 = vadd.f32 %v1659, %v1781
  %v1831 = vadd.f32 %v1660, %v1783
  %v1832 = vadd.f32 %v1661, %v1822
  %v1833 = vadd.f32 %v1662, %v1824
  %v1834 = vpack.c.bf16 %v1828, %v1828
  %v1835 = vpack.c.bf16 %v1829, %v1829
  %v1836 = vpack.c.bf16 %v1830, %v1830
  %v1837 = vpack.c.bf16 %v1831, %v1831
  %v1838 = vpack.c.bf16 %v1832, %v1832
  %v1839 = vpack.c.bf16 %v1833, %v1833
  %v1846 = vunpack.c.l.b16 %v1834
  %v1847 = vunpack.c.l.b16 %v1835
  %v1848 = vunpack.c.l.b16 %v1836
  %v1849 = vunpack.c.l.b16 %v1837
  %v1850 = vunpack.c.l.b16 %v1838
  %v1851 = vunpack.c.l.b16 %v1839
  %v1852 = vpack.c.b16 %v1847, %v1846
  %v1853 = vpack.c.b16 %v1849, %v1848
  %v1854 = vpack.c.b16 %v1851, %v1850
  %1858 = vst [vmem:[%s9] sm:$0xff] %v1852
  %1859 = vst [vmem:[%s9 + $0x8] sm:$0xff] %v1853
  %1860 = vst [vmem:[%s9 + $0x10] sm:$0xff] %v1854
  %v1861 = vld [vmem:[%s4] sm:$0x3f]
  %v1863 = vlaneseq
  %v1864 = vshrl.u32 %v1863, 7
  %v1865 = vsub.s32 0, %v1864
  %v1866 = vrot.slane %v1861, %v1865
  %v1867 = vlaneseq
  %v1868 = vshrl.u32 %v1867, 7
  %v1869 = vsub.s32 1, %v1868
  %v1870 = vrot.slane %v1861, %v1869
  %v1871 = vlaneseq
  %v1872 = vshrl.u32 %v1871, 7
  %v1873 = vsub.s32 2, %v1872
  %v1874 = vrot.slane %v1861, %v1873
  %v1875 = vlaneseq
  %v1876 = vshrl.u32 %v1875, 7
  %v1877 = vsub.s32 3, %v1876
  %v1878 = vrot.slane %v1861, %v1877
  %v1879 = vlaneseq
  %v1880 = vshrl.u32 %v1879, 7
  %v1881 = vsub.s32 4, %v1880
  %v1882 = vrot.slane %v1861, %v1881
  %v1883 = vlaneseq
  %v1884 = vshrl.u32 %v1883, 7
  %v1885 = vsub.s32 5, %v1884
  %v1886 = vrot.slane %v1861, %v1885
  %v1893 = vmul.f32 %v1828, %v1866
  %v1894 = vmul.f32 %v1829, %v1870
  %v1895 = vmul.f32 %v1830, %v1874
  %v1896 = vmul.f32 %v1831, %v1878
  %v1897 = vmul.f32 %v1832, %v1882
  %v1898 = vmul.f32 %v1833, %v1886
  %v1899 = vadd.f32 %v1893, %v1894
  %v1900 = vadd.f32 %v1899, %v1895
  %v1901 = vadd.f32 %v1900, %v1896
  %v1902 = vadd.f32 %v1901, %v1897
  %v1903 = vadd.f32 %v1902, %v1898
  %1904 = vadd.xlane.f32.xlu0 %v1903
  %v1905 = vpop.xlane.xlu0 %1904
  %v1906 = vmul.f32 %v1893, %v1893
  %v1907 = vmul.f32 %v1894, %v1894
  %v1908 = vmul.f32 %v1895, %v1895
  %v1909 = vmul.f32 %v1896, %v1896
  %v1910 = vmul.f32 %v1897, %v1897
  %v1911 = vmul.f32 %v1898, %v1898
  %v1912 = vadd.f32 %v1906, %v1907
  %v1913 = vadd.f32 %v1912, %v1908
  %v1914 = vadd.f32 %v1913, %v1909
  %v1915 = vadd.f32 %v1914, %v1910
  %v1916 = vadd.f32 %v1915, %v1911
  %1917 = vadd.xlane.f32.xlu0 %v1916
  %v1918 = vpop.xlane.xlu0 %1917
  %vm1919 = vcmask 7168
  %v1920 = vsel %vm1919, %v1905, %v1918
  %vm1921 = vcmask 15360
  %1922 = vst.msk [vmem:[%s10] sm:$0xff] %vm1921, %v1920
  // Predicated region
  $region38: #{double_conv_forward.4} parent=0 // pred_check
    _
  $region39: #{double_conv_forward.4} parent=0 // pred_check_branch
    %1924 = sbr.rel (0) target = $region41
  $region40: #{double_conv_forward.4} parent=0 // pred_region
    _
  $region41: #{double_conv_forward.4} parent=0 // pred_fallthru
    _
  // Predicated region
  $region42: #{double_conv_forward.4} parent=0 // pred_check
    _
  $region43: #{double_conv_forward.4} parent=0 // pred_check_branch
    %1926 = sbr.rel (0) target = $region45
  $region44: #{double_conv_forward.4} parent=0 // pred_region
    _
  $region45: #{double_conv_forward.4} parent=0 // pred_fallthru
    _
  // Predicated region
  $region46: #{double_conv_forward.4} parent=0 // pred_check
    _
  $region47: #{double_conv_forward.4} parent=0 // pred_check_branch
    %1928 = sbr.rel (0) target = $region49
  $region48: #{double_conv_forward.4} parent=0 // pred_region
    _
  $region49: #{double_conv_forward.4} parent=0 // pred_fallthru
    _
  // Predicated region
  $region50: #{double_conv_forward.4} parent=0 // pred_check
    _
  $region51: #{double_conv_forward.4} parent=0 // pred_check_branch
    %1930 = sbr.rel (0) target = $region53
  $region52: #{double_conv_forward.4} parent=0 // pred_region
    _
  $region53: #{double_conv_forward.4} parent=0 // pred_fallthru
    _

</llo_original>
